<compile_context>
chip_gen: v7x
topology: tpu7x:2x2x1
jax: 0.10.0
libtpu: 0.0.40
codegen_flags: <defaults>
</compile_context>

<pallas_src>
import functools

import jax
import jax.numpy as jnp
from jax import lax
from jax.experimental import pallas as pl
from jax.experimental.pallas import tpu as pltpu


# ----------------------------- Pallas kernel ------------------------------ #
def critic_lstm_td3_kernel(idx_ref, hcs_ref, cs_ref,
                           wpre_ref, bpre_ref,
                           wih_ref, whh_ref, blstm_ref,
                           waft_hbm, baft_ref,
                           wcur_ref, bcur_ref,
                           wp1m_hbm, wp1c_hbm, bp1_ref,
                           wp2_ref, bp2_ref,
                           q_ref, mem_ref,
                           gx_ref, waft_vmem, wp1m_vmem, wp1c_vmem, dma_sems):
    TB, _ = hcs_ref.shape
    B = cs_ref.shape[0]            # padded batch (multiple of 16 for bf16)
    T = TB // B
    H = waft_vmem.shape[1]

    # --- Overlap late-used weight DMA with the hoisted matmuls + recurrence.
    cp_waft = pltpu.make_async_copy(waft_hbm, waft_vmem, dma_sems.at[0])
    cp_wp1m = pltpu.make_async_copy(wp1m_hbm, wp1m_vmem, dma_sems.at[1])
    cp_wp1c = pltpu.make_async_copy(wp1c_hbm, wp1c_vmem, dma_sems.at[2])
    cp_waft.start()
    cp_wp1m.start()
    cp_wp1c.start()

    idx = idx_ref[...]             # (B, 1) int32, clamped to [0, T-1]

    # --- Hoisted x-path: bf16 MXU matmuls over all timesteps at once ------- #
    pre = jnp.maximum(
        jnp.dot(hcs_ref[...], wpre_ref[...],
                preferred_element_type=jnp.float32) + bpre_ref[...], 0.0)
    # Fold the fused LSTM bias into the one-shot input-gate matmul.
    gx_ref[...] = (jnp.dot(pre.astype(jnp.bfloat16), wih_ref[...],
                           preferred_element_type=jnp.float32)
                   + blstm_ref[...])                          # (T*B, 4H) f32

    h = jnp.zeros((B, H), jnp.float32)
    c = jnp.zeros((B, H), jnp.float32)
    mem_h = jnp.zeros((B, H), jnp.float32)

    def sigmoid1(x):
        # sigmoid(x) == 0.5 * (tanh(x/2) + 1): one EUP push + cheap VPU ops
        # instead of exp + reciprocal.
        return 0.5 * (jnp.tanh(0.5 * x) + 1.0)

    # --- Serial recurrence, fully unrolled (only h @ Whh per step) --------- #
    # TODO(synk): could hold Whh resident in the MXU across steps via
    # pltpu.matmul_push_rhs/matmul_acc_lhs/matmul_pop once the accumulate
    # semantics are verified; kept jnp.dot for robustness.
    for t in range(T):
        gx = gx_ref[pl.ds(t * B, B), :]                       # (B, 4H) static slice
        gates = gx + jnp.dot(h.astype(jnp.bfloat16), whh_ref[...],
                             preferred_element_type=jnp.float32)
        i_g = sigmoid1(gates[:, 0 * H:1 * H])
        f_g = sigmoid1(gates[:, 1 * H:2 * H])
        g_g = jnp.tanh(gates[:, 2 * H:3 * H])
        o_g = sigmoid1(gates[:, 3 * H:4 * H])
        c = f_g * c + i_g * g_g
        h = o_g * jnp.tanh(c)
        # torch.gather(dim=1, index=tmp_h_l-1) as a masked select of the
        # hidden state; the after-LSTM linear is applied once after the loop.
        mem_h = jnp.where(idx == t, h, mem_h)

    # --- After-LSTM: Linear + ReLU applied only to the gathered row -------- #
    cp_waft.wait()
    mem = jnp.maximum(
        jnp.dot(mem_h.astype(jnp.bfloat16), waft_vmem[...],
                preferred_element_type=jnp.float32) + baft_ref[...], 0.0)

    # --- Current feature extraction: Linear + ReLU ------------------------- #
    cur = jnp.maximum(
        jnp.dot(cs_ref[...], wcur_ref[...],
                preferred_element_type=jnp.float32) + bcur_ref[...], 0.0)

    # --- Post-combination: split-weight Linear+ReLU (no lane concat) ------- #
    cp_wp1m.wait()
    cp_wp1c.wait()
    p1 = jnp.maximum(
        jnp.dot(mem.astype(jnp.bfloat16), wp1m_vmem[...],
                preferred_element_type=jnp.float32)
        + jnp.dot(cur.astype(jnp.bfloat16), wp1c_vmem[...],
                  preferred_element_type=jnp.float32)
        + bp1_ref[...], 0.0)

    # H -> 1 projection on the VPU/XLU (avoid an N=1 MXU matmul).
    q = jnp.sum(p1 * wp2_ref[...], axis=-1, keepdims=True) + bp2_ref[...]

    q_ref[...] = q
    mem_ref[...] = mem


# ------------------------------- wrapper ----------------------------------- #
def critic_lstm_td3_forward(c_s, h_c_s, h_l, params):
    """c_s: (B, D) f32; h_c_s: (B, T, D) f32; h_l: (B,) int.
    Returns (q: (B,), extracted_memory: (B, H))."""
    B, T, D = h_c_s.shape
    H = params["waft"].shape[1]

    # Pad batch to the bf16 sublane tile (16) since matmul LHS is bf16.
    Bp = ((B + 15) // 16) * 16

    # tmp_h_l = h_l with zeros replaced by 1; gather index = tmp_h_l - 1,
    # clamped to the valid range (PyTorch gather would error OOB).
    tmp_h_l = jnp.where(h_l == 0, 1, h_l)
    idx = jnp.clip(tmp_h_l - 1, 0, T - 1).astype(jnp.int32).reshape(B, 1)

    hcs_tm = jnp.transpose(h_c_s, (1, 0, 2))                  # (T, B, D)
    pad_b = Bp - B
    if pad_b:
        hcs_tm = jnp.pad(hcs_tm, ((0, 0), (0, pad_b), (0, 0)))
        c_s_p = jnp.pad(c_s, ((0, pad_b), (0, 0)))
        idx_p = jnp.pad(idx, ((0, pad_b), (0, 0)))
    else:
        c_s_p, idx_p = c_s, idx
    hcs_flat = hcs_tm.reshape(T * Bp, D).astype(jnp.bfloat16)  # time-major, flat
    c_s_bf = c_s_p.astype(jnp.bfloat16)

    bf = lambda w: w.astype(jnp.bfloat16)
    wp1_mem = bf(params["wp1"][:H, :])                        # (H, H)
    wp1_cur = bf(params["wp1"][H:, :])                        # (H, H)
    wp2_row = params["wp2"].reshape(1, H)                     # (H,1) -> (1,H) f32

    vmem = functools.partial(pl.BlockSpec, memory_space=pltpu.MemorySpace.VMEM)
    anyspec = functools.partial(pl.BlockSpec, memory_space=pl.ANY)

    ins = [idx_p, hcs_flat, c_s_bf,
           bf(params["wpre"]), params["bpre"],
           bf(params["wih"]), bf(params["whh"]), params["blstm"],
           bf(params["waft"]), params["baft"],
           bf(params["wcur"]), params["bcur"],
           wp1_mem, wp1_cur, params["bp1"],
           wp2_row, params["bp2"]]
    in_specs = [vmem(), vmem(), vmem(),          # idx, hcs, c_s
                vmem(), vmem(),                  # wpre, bpre
                vmem(), vmem(), vmem(),          # wih, whh, blstm
                anyspec(), vmem(),               # waft (HBM), baft
                vmem(), vmem(),                  # wcur, bcur
                anyspec(), anyspec(), vmem(),    # wp1_mem (HBM), wp1_cur (HBM), bp1
                vmem(), vmem()]                  # wp2_row, bp2

    q, mem = pl.pallas_call(
        critic_lstm_td3_kernel,
        out_shape=(jax.ShapeDtypeStruct((Bp, 1), jnp.float32),
                   jax.ShapeDtypeStruct((Bp, H), jnp.float32)),
        in_specs=in_specs,
        out_specs=(vmem(), vmem()),
        scratch_shapes=[pltpu.VMEM((T * Bp, 4 * H), jnp.float32),   # gates_x
                        pltpu.VMEM((H, H), jnp.bfloat16),           # waft
                        pltpu.VMEM((H, H), jnp.bfloat16),           # wp1_mem
                        pltpu.VMEM((H, H), jnp.bfloat16),           # wp1_cur
                        pltpu.SemaphoreType.DMA((3,))],
    )(*ins)
    return q[:B, 0], mem[:B]


# ------------------------- deterministic params ---------------------------- #
def init_params(key, critic_state_size, hidden):
    D, H = critic_state_size, hidden

    def uni(key, shape, fan_in):
        bound = 1.0 / jnp.sqrt(jnp.float32(fan_in))
        return jax.random.uniform(key, shape, jnp.float32, -bound, bound)

    ks = jax.random.split(key, 16)
    p = {
        # pre-LSTM Linear(D, H)
        "wpre": uni(ks[0], (D, H), D), "bpre": uni(ks[1], (1, H), D),
        # LSTM(H, H): gates packed [i,f,g,o]; b_ih + b_hh fused
        "wih": uni(ks[2], (H, 4 * H), H), "whh": uni(ks[3], (H, 4 * H), H),
        "blstm": uni(ks[4], (1, 4 * H), H) + uni(ks[5], (1, 4 * H), H),
        # after-LSTM Linear(H, H)
        "waft": uni(ks[6], (H, H), H), "baft": uni(ks[7], (1, H), H),
        # current-feature Linear(D, H)
        "wcur": uni(ks[8], (D, H), D), "bcur": uni(ks[9], (1, H), D),
        # post-combination Linear(2H, H) then Linear(H, 1)
        "wp1": uni(ks[10], (2 * H, H), 2 * H), "bp1": uni(ks[11], (1, H), 2 * H),
        "wp2": uni(ks[12], (H, 1), H), "bp2": uni(ks[13], (1, 1), H),
    }
    return p


# ------------------------- pure-JAX reference ------------------------------ #
def reference_forward(c_s, h_c_s, h_l, p):
    B, T, D = h_c_s.shape
    H = p["waft"].shape[1]
    tmp = jnp.where(h_l == 0, 1, h_l)
    x = jnp.maximum(h_c_s @ p["wpre"] + p["bpre"], 0.0)       # (B, T, H)

    def cell(carry, x_t):
        h, c = carry
        gates = x_t @ p["wih"] + h @ p["whh"] + p["blstm"]
        i = jax.nn.sigmoid(gates[:, 0 * H:1 * H])
        f = jax.nn.sigmoid(gates[:, 1 * H:2 * H])
        g = jnp.tanh(gates[:, 2 * H:3 * H])
        o = jax.nn.sigmoid(gates[:, 3 * H:4 * H])
        c = f * c + i * g
        h = o * jnp.tanh(c)
        return (h, c), h

    (_, _), hs = lax.scan(cell, (jnp.zeros((B, H)), jnp.zeros((B, H))),
                          jnp.transpose(x, (1, 0, 2)))
    hs = jnp.transpose(hs, (1, 0, 2))                         # (B, T, H)
    aft = jnp.maximum(hs @ p["waft"] + p["baft"], 0.0)
    mem = jnp.take_along_axis(aft, (tmp - 1)[:, None, None].astype(jnp.int32),
                              axis=1)[:, 0, :]                # (B, H)
    cur = jnp.maximum(c_s @ p["wcur"] + p["bcur"], 0.0)
    comb = jnp.concatenate([mem, cur], axis=-1)
    p1 = jnp.maximum(comb @ p["wp1"] + p["bp1"], 0.0)
    q = (p1 @ p["wp2"] + p["bp2"])[:, 0]
    return q, mem


# --------------------------------- main ------------------------------------ #
if __name__ == "__main__":
    B, T, D, H = 4, 8, 20, 128   # batch, history length, critic_state_size, hidden

    key = jax.random.PRNGKey(0)
    k_p, k_cs, k_hcs = jax.random.split(key, 3)
    params = init_params(k_p, D, H)

    c_s = jax.random.normal(k_cs, (B, D), jnp.float32)
    h_c_s = jax.random.normal(k_hcs, (B, T, D), jnp.float32)
    h_l = jnp.array([0, 3, T, 5], dtype=jnp.int32)   # includes a zero-length history

    q, mem = jax.jit(critic_lstm_td3_forward)(c_s, h_c_s, h_l, params)
    jax.block_until_ready((q, mem))

    q_ref, mem_ref = reference_forward(c_s, h_c_s, h_l, params)
    assert q.shape == (B,) and mem.shape == (B, H)
    # Tolerance loosened slightly vs the all-f32 version: MXU matmuls now run
    # with bf16 operands (f32 accumulation).
    assert jnp.allclose(q, q_ref, atol=2e-2, rtol=2e-2)
    assert jnp.allclose(mem, mem_ref, atol=2e-2, rtol=2e-2)

    print("KERNEL_OK")
</pallas_src>

<mosaic_0001>
module attributes {stable_mosaic.version = 11 : i64} {
  func.func @critic_lstm_td3_kernel(%arg0: memref<16x1xi32, #tpu.memory_space<vmem>>, %arg1: memref<128x20xbf16, #tpu.memory_space<vmem>>, %arg2: memref<16x20xbf16, #tpu.memory_space<vmem>>, %arg3: memref<20x128xbf16, #tpu.memory_space<vmem>>, %arg4: memref<1x128xf32, #tpu.memory_space<vmem>>, %arg5: memref<128x512xbf16, #tpu.memory_space<vmem>>, %arg6: memref<128x512xbf16, #tpu.memory_space<vmem>>, %arg7: memref<1x512xf32, #tpu.memory_space<vmem>>, %arg8: memref<128x128xbf16, #tpu.memory_space<any>>, %arg9: memref<1x128xf32, #tpu.memory_space<vmem>>, %arg10: memref<20x128xbf16, #tpu.memory_space<vmem>>, %arg11: memref<1x128xf32, #tpu.memory_space<vmem>>, %arg12: memref<128x128xbf16, #tpu.memory_space<any>>, %arg13: memref<128x128xbf16, #tpu.memory_space<any>>, %arg14: memref<1x128xf32, #tpu.memory_space<vmem>>, %arg15: memref<1x128xf32, #tpu.memory_space<vmem>>, %arg16: memref<1x1xf32, #tpu.memory_space<vmem>>, %arg17: memref<16x1xf32, #tpu.memory_space<vmem>>, %arg18: memref<16x128xf32, #tpu.memory_space<vmem>>, %arg19: memref<128x512xf32, #tpu.memory_space<vmem>>, %arg20: memref<128x128xbf16, #tpu.memory_space<vmem>>, %arg21: memref<128x128xbf16, #tpu.memory_space<vmem>>, %arg22: memref<128x128xbf16, #tpu.memory_space<vmem>>, %arg23: memref<3x!tpu.dma_semaphore, #tpu.memory_space<semaphore_mem>>) attributes {dimension_semantics = [], scalar_prefetch = 0 : i64, scratch_operands = 5 : i64, tpu.core_type = #tpu.core_type<tc>} {
    %c0_i32 = arith.constant 0 : i32
    %0 = tpu.memref_slice %arg23[%c0_i32] : memref<3x!tpu.dma_semaphore, #tpu.memory_space<semaphore_mem>> -> memref<1x!tpu.dma_semaphore, #tpu.memory_space<semaphore_mem>>
    %1 = tpu.memref_squeeze %0 : memref<1x!tpu.dma_semaphore, #tpu.memory_space<semaphore_mem>> -> memref<!tpu.dma_semaphore, #tpu.memory_space<semaphore_mem>>
    tpu.enqueue_dma source(%arg8 : memref<128x128xbf16, #tpu.memory_space<any>>) target(%arg20 : memref<128x128xbf16, #tpu.memory_space<vmem>>) target_semaphore(%1 : memref<!tpu.dma_semaphore, #tpu.memory_space<semaphore_mem>>)
    %c1_i32 = arith.constant 1 : i32
    %2 = tpu.memref_slice %arg23[%c1_i32] : memref<3x!tpu.dma_semaphore, #tpu.memory_space<semaphore_mem>> -> memref<1x!tpu.dma_semaphore, #tpu.memory_space<semaphore_mem>>
    %3 = tpu.memref_squeeze %2 : memref<1x!tpu.dma_semaphore, #tpu.memory_space<semaphore_mem>> -> memref<!tpu.dma_semaphore, #tpu.memory_space<semaphore_mem>>
    tpu.enqueue_dma source(%arg12 : memref<128x128xbf16, #tpu.memory_space<any>>) target(%arg21 : memref<128x128xbf16, #tpu.memory_space<vmem>>) target_semaphore(%3 : memref<!tpu.dma_semaphore, #tpu.memory_space<semaphore_mem>>)
    %c2_i32 = arith.constant 2 : i32
    %4 = tpu.memref_slice %arg23[%c2_i32] : memref<3x!tpu.dma_semaphore, #tpu.memory_space<semaphore_mem>> -> memref<1x!tpu.dma_semaphore, #tpu.memory_space<semaphore_mem>>
    %5 = tpu.memref_squeeze %4 : memref<1x!tpu.dma_semaphore, #tpu.memory_space<semaphore_mem>> -> memref<!tpu.dma_semaphore, #tpu.memory_space<semaphore_mem>>
    tpu.enqueue_dma source(%arg13 : memref<128x128xbf16, #tpu.memory_space<any>>) target(%arg22 : memref<128x128xbf16, #tpu.memory_space<vmem>>) target_semaphore(%5 : memref<!tpu.dma_semaphore, #tpu.memory_space<semaphore_mem>>)
    %c0 = arith.constant 0 : index
    %c0_0 = arith.constant 0 : index
    %6 = vector.load %arg0[%c0, %c0_0] : memref<16x1xi32, #tpu.memory_space<vmem>>, vector<16x1xi32>
    %c0_1 = arith.constant 0 : index
    %c0_2 = arith.constant 0 : index
    %7 = vector.load %arg1[%c0_1, %c0_2] : memref<128x20xbf16, #tpu.memory_space<vmem>>, vector<128x20xbf16>
    %c0_3 = arith.constant 0 : index
    %c0_4 = arith.constant 0 : index
    %8 = vector.load %arg3[%c0_3, %c0_4] : memref<20x128xbf16, #tpu.memory_space<vmem>>, vector<20x128xbf16>
    %cst = arith.constant dense<0.000000e+00> : vector<128x128xf32>
    %9 = tpu.matmul %7, %8, %cst {dimension_numbers = #tpu.dot_dimension_numbers<[1], [0], [0], [1], [0, 0, 1, 1], [], []>} : vector<128x20xbf16>, vector<20x128xbf16>, vector<128x128xf32> -> vector<128x128xf32>
    %c0_5 = arith.constant 0 : index
    %c0_6 = arith.constant 0 : index
    %10 = vector.load %arg4[%c0_5, %c0_6] : memref<1x128xf32, #tpu.memory_space<vmem>>, vector<1x128xf32>
    %11 = vector.broadcast %10 : vector<1x128xf32> to vector<128x128xf32>
    %12 = arith.addf %9, %11 : vector<128x128xf32>
    %cst_7 = arith.constant 0.000000e+00 : f32
    %13 = vector.broadcast %cst_7 : f32 to vector<128x128xf32>
    %14 = arith.maximumf %12, %13 : vector<128x128xf32>
    %15 = arith.truncf %14 : vector<128x128xf32> to vector<128x128xbf16>
    %c0_8 = arith.constant 0 : index
    %c0_9 = arith.constant 0 : index
    %16 = vector.load %arg5[%c0_8, %c0_9] : memref<128x512xbf16, #tpu.memory_space<vmem>>, vector<128x512xbf16>
    %cst_10 = arith.constant dense<0.000000e+00> : vector<128x512xf32>
    %17 = tpu.matmul %15, %16, %cst_10 {dimension_numbers = #tpu.dot_dimension_numbers<[1], [0], [0], [1], [0, 0, 1, 1], [], []>} : vector<128x128xbf16>, vector<128x512xbf16>, vector<128x512xf32> -> vector<128x512xf32>
    %c0_11 = arith.constant 0 : index
    %c0_12 = arith.constant 0 : index
    %18 = vector.load %arg7[%c0_11, %c0_12] : memref<1x512xf32, #tpu.memory_space<vmem>>, vector<1x512xf32>
    %19 = vector.broadcast %18 : vector<1x512xf32> to vector<128x512xf32>
    %20 = arith.addf %17, %19 : vector<128x512xf32>
    %c0_13 = arith.constant 0 : index
    %c0_14 = arith.constant 0 : index
    %21 = vector.load %arg19[%c0_13, %c0_14] : memref<128x512xf32, #tpu.memory_space<vmem>>, vector<128x512xf32>
    tpu.vector_store %arg19[%c0_13, %c0_14], %20 {strides = array<i32>} : memref<128x512xf32, #tpu.memory_space<vmem>>, vector<128x512xf32>,
    %cst_15 = arith.constant 0.000000e+00 : f32
    %22 = vector.broadcast %cst_15 : f32 to vector<16x128xf32>
    %cst_16 = arith.constant 0.000000e+00 : f32
    %23 = vector.broadcast %cst_16 : f32 to vector<16x128xf32>
    %cst_17 = arith.constant 0.000000e+00 : f32
    %24 = vector.broadcast %cst_17 : f32 to vector<16x128xf32>
    %c0_18 = arith.constant 0 : index
    %c0_19 = arith.constant 0 : index
    %25 = vector.load %arg19[%c0_18, %c0_19] : memref<128x512xf32, #tpu.memory_space<vmem>>, vector<16x512xf32>
    %26 = arith.truncf %22 : vector<16x128xf32> to vector<16x128xbf16>
    %c0_20 = arith.constant 0 : index
    %c0_21 = arith.constant 0 : index
    %27 = vector.load %arg6[%c0_20, %c0_21] : memref<128x512xbf16, #tpu.memory_space<vmem>>, vector<128x512xbf16>
    %cst_22 = arith.constant dense<0.000000e+00> : vector<16x512xf32>
    %28 = tpu.matmul %26, %27, %cst_22 {dimension_numbers = #tpu.dot_dimension_numbers<[1], [0], [0], [1], [0, 0, 1, 1], [], []>} : vector<16x128xbf16>, vector<128x512xbf16>, vector<16x512xf32> -> vector<16x512xf32>
    %29 = arith.addf %25, %28 : vector<16x512xf32>
    %30 = vector.extract_strided_slice %29 {offsets = [0, 0], sizes = [16, 128], strides = [1, 1]} : vector<16x512xf32> to vector<16x128xf32>
    %cst_23 = arith.constant 5.000000e-01 : f32
    %31 = vector.broadcast %cst_23 : f32 to vector<16x128xf32>
    %32 = arith.mulf %31, %30 : vector<16x128xf32>
    %33 = math.tanh %32 : vector<16x128xf32>
    %cst_24 = arith.constant 1.000000e+00 : f32
    %34 = vector.broadcast %cst_24 : f32 to vector<16x128xf32>
    %35 = arith.addf %33, %34 : vector<16x128xf32>
    %cst_25 = arith.constant 5.000000e-01 : f32
    %36 = vector.broadcast %cst_25 : f32 to vector<16x128xf32>
    %37 = arith.mulf %36, %35 : vector<16x128xf32>
    %38 = vector.extract_strided_slice %29 {offsets = [0, 128], sizes = [16, 128], strides = [1, 1]} : vector<16x512xf32> to vector<16x128xf32>
    %cst_26 = arith.constant 5.000000e-01 : f32
    %39 = vector.broadcast %cst_26 : f32 to vector<16x128xf32>
    %40 = arith.mulf %39, %38 : vector<16x128xf32>
    %41 = math.tanh %40 : vector<16x128xf32>
    %cst_27 = arith.constant 1.000000e+00 : f32
    %42 = vector.broadcast %cst_27 : f32 to vector<16x128xf32>
    %43 = arith.addf %41, %42 : vector<16x128xf32>
    %cst_28 = arith.constant 5.000000e-01 : f32
    %44 = vector.broadcast %cst_28 : f32 to vector<16x128xf32>
    %45 = arith.mulf %44, %43 : vector<16x128xf32>
    %46 = vector.extract_strided_slice %29 {offsets = [0, 256], sizes = [16, 128], strides = [1, 1]} : vector<16x512xf32> to vector<16x128xf32>
    %47 = math.tanh %46 : vector<16x128xf32>
    %48 = vector.extract_strided_slice %29 {offsets = [0, 384], sizes = [16, 128], strides = [1, 1]} : vector<16x512xf32> to vector<16x128xf32>
    %cst_29 = arith.constant 5.000000e-01 : f32
    %49 = vector.broadcast %cst_29 : f32 to vector<16x128xf32>
    %50 = arith.mulf %49, %48 : vector<16x128xf32>
    %51 = math.tanh %50 : vector<16x128xf32>
    %cst_30 = arith.constant 1.000000e+00 : f32
    %52 = vector.broadcast %cst_30 : f32 to vector<16x128xf32>
    %53 = arith.addf %51, %52 : vector<16x128xf32>
    %cst_31 = arith.constant 5.000000e-01 : f32
    %54 = vector.broadcast %cst_31 : f32 to vector<16x128xf32>
    %55 = arith.mulf %54, %53 : vector<16x128xf32>
    %56 = arith.mulf %45, %23 : vector<16x128xf32>
    %57 = arith.mulf %37, %47 : vector<16x128xf32>
    %58 = arith.addf %56, %57 : vector<16x128xf32>
    %59 = math.tanh %58 : vector<16x128xf32>
    %60 = arith.mulf %55, %59 : vector<16x128xf32>
    %c0_i32_32 = arith.constant 0 : i32
    %61 = vector.broadcast %c0_i32_32 : i32 to vector<16x1xi32>
    %62 = arith.cmpi eq, %6, %61 : vector<16x1xi32>
    %63 = vector.shape_cast %62 : vector<16x1xi1> to vector<16x1xi1>
    %64 = vector.broadcast %63 : vector<16x1xi1> to vector<16x128xi1>
    %65 = arith.select %64, %60, %24 : vector<16x128xi1>, vector<16x128xf32>
    %c16 = arith.constant 16 : index
    %c0_33 = arith.constant 0 : index
    %66 = vector.load %arg19[%c16, %c0_33] : memref<128x512xf32, #tpu.memory_space<vmem>>, vector<16x512xf32>
    %67 = arith.truncf %60 : vector<16x128xf32> to vector<16x128xbf16>
    %c0_34 = arith.constant 0 : index
    %c0_35 = arith.constant 0 : index
    %68 = vector.load %arg6[%c0_34, %c0_35] : memref<128x512xbf16, #tpu.memory_space<vmem>>, vector<128x512xbf16>
    %cst_36 = arith.constant dense<0.000000e+00> : vector<16x512xf32>
    %69 = tpu.matmul %67, %68, %cst_36 {dimension_numbers = #tpu.dot_dimension_numbers<[1], [0], [0], [1], [0, 0, 1, 1], [], []>} : vector<16x128xbf16>, vector<128x512xbf16>, vector<16x512xf32> -> vector<16x512xf32>
    %70 = arith.addf %66, %69 : vector<16x512xf32>
    %71 = vector.extract_strided_slice %70 {offsets = [0, 0], sizes = [16, 128], strides = [1, 1]} : vector<16x512xf32> to vector<16x128xf32>
    %cst_37 = arith.constant 5.000000e-01 : f32
    %72 = vector.broadcast %cst_37 : f32 to vector<16x128xf32>
    %73 = arith.mulf %72, %71 : vector<16x128xf32>
    %74 = math.tanh %73 : vector<16x128xf32>
    %cst_38 = arith.constant 1.000000e+00 : f32
    %75 = vector.broadcast %cst_38 : f32 to vector<16x128xf32>
    %76 = arith.addf %74, %75 : vector<16x128xf32>
    %cst_39 = arith.constant 5.000000e-01 : f32
    %77 = vector.broadcast %cst_39 : f32 to vector<16x128xf32>
    %78 = arith.mulf %77, %76 : vector<16x128xf32>
    %79 = vector.extract_strided_slice %70 {offsets = [0, 128], sizes = [16, 128], strides = [1, 1]} : vector<16x512xf32> to vector<16x128xf32>
    %cst_40 = arith.constant 5.000000e-01 : f32
    %80 = vector.broadcast %cst_40 : f32 to vector<16x128xf32>
    %81 = arith.mulf %80, %79 : vector<16x128xf32>
    %82 = math.tanh %81 : vector<16x128xf32>
    %cst_41 = arith.constant 1.000000e+00 : f32
    %83 = vector.broadcast %cst_41 : f32 to vector<16x128xf32>
    %84 = arith.addf %82, %83 : vector<16x128xf32>
    %cst_42 = arith.constant 5.000000e-01 : f32
    %85 = vector.broadcast %cst_42 : f32 to vector<16x128xf32>
    %86 = arith.mulf %85, %84 : vector<16x128xf32>
    %87 = vector.extract_strided_slice %70 {offsets = [0, 256], sizes = [16, 128], strides = [1, 1]} : vector<16x512xf32> to vector<16x128xf32>
    %88 = math.tanh %87 : vector<16x128xf32>
    %89 = vector.extract_strided_slice %70 {offsets = [0, 384], sizes = [16, 128], strides = [1, 1]} : vector<16x512xf32> to vector<16x128xf32>
    %cst_43 = arith.constant 5.000000e-01 : f32
    %90 = vector.broadcast %cst_43 : f32 to vector<16x128xf32>
    %91 = arith.mulf %90, %89 : vector<16x128xf32>
    %92 = math.tanh %91 : vector<16x128xf32>
    %cst_44 = arith.constant 1.000000e+00 : f32
    %93 = vector.broadcast %cst_44 : f32 to vector<16x128xf32>
    %94 = arith.addf %92, %93 : vector<16x128xf32>
    %cst_45 = arith.constant 5.000000e-01 : f32
    %95 = vector.broadcast %cst_45 : f32 to vector<16x128xf32>
    %96 = arith.mulf %95, %94 : vector<16x128xf32>
    %97 = arith.mulf %86, %58 : vector<16x128xf32>
    %98 = arith.mulf %78, %88 : vector<16x128xf32>
    %99 = arith.addf %97, %98 : vector<16x128xf32>
    %100 = math.tanh %99 : vector<16x128xf32>
    %101 = arith.mulf %96, %100 : vector<16x128xf32>
    %c1_i32_46 = arith.constant 1 : i32
    %102 = vector.broadcast %c1_i32_46 : i32 to vector<16x1xi32>
    %103 = arith.cmpi eq, %6, %102 : vector<16x1xi32>
    %104 = vector.shape_cast %103 : vector<16x1xi1> to vector<16x1xi1>
    %105 = vector.broadcast %104 : vector<16x1xi1> to vector<16x128xi1>
    %106 = arith.select %105, %101, %65 : vector<16x128xi1>, vector<16x128xf32>
    %c32 = arith.constant 32 : index
    %c0_47 = arith.constant 0 : index
    %107 = vector.load %arg19[%c32, %c0_47] : memref<128x512xf32, #tpu.memory_space<vmem>>, vector<16x512xf32>
    %108 = arith.truncf %101 : vector<16x128xf32> to vector<16x128xbf16>
    %c0_48 = arith.constant 0 : index
    %c0_49 = arith.constant 0 : index
    %109 = vector.load %arg6[%c0_48, %c0_49] : memref<128x512xbf16, #tpu.memory_space<vmem>>, vector<128x512xbf16>
    %cst_50 = arith.constant dense<0.000000e+00> : vector<16x512xf32>
    %110 = tpu.matmul %108, %109, %cst_50 {dimension_numbers = #tpu.dot_dimension_numbers<[1], [0], [0], [1], [0, 0, 1, 1], [], []>} : vector<16x128xbf16>, vector<128x512xbf16>, vector<16x512xf32> -> vector<16x512xf32>
    %111 = arith.addf %107, %110 : vector<16x512xf32>
    %112 = vector.extract_strided_slice %111 {offsets = [0, 0], sizes = [16, 128], strides = [1, 1]} : vector<16x512xf32> to vector<16x128xf32>
    %cst_51 = arith.constant 5.000000e-01 : f32
    %113 = vector.broadcast %cst_51 : f32 to vector<16x128xf32>
    %114 = arith.mulf %113, %112 : vector<16x128xf32>
    %115 = math.tanh %114 : vector<16x128xf32>
    %cst_52 = arith.constant 1.000000e+00 : f32
    %116 = vector.broadcast %cst_52 : f32 to vector<16x128xf32>
    %117 = arith.addf %115, %116 : vector<16x128xf32>
    %cst_53 = arith.constant 5.000000e-01 : f32
    %118 = vector.broadcast %cst_53 : f32 to vector<16x128xf32>
    %119 = arith.mulf %118, %117 : vector<16x128xf32>
    %120 = vector.extract_strided_slice %111 {offsets = [0, 128], sizes = [16, 128], strides = [1, 1]} : vector<16x512xf32> to vector<16x128xf32>
    %cst_54 = arith.constant 5.000000e-01 : f32
    %121 = vector.broadcast %cst_54 : f32 to vector<16x128xf32>
    %122 = arith.mulf %121, %120 : vector<16x128xf32>
    %123 = math.tanh %122 : vector<16x128xf32>
    %cst_55 = arith.constant 1.000000e+00 : f32
    %124 = vector.broadcast %cst_55 : f32 to vector<16x128xf32>
    %125 = arith.addf %123, %124 : vector<16x128xf32>
    %cst_56 = arith.constant 5.000000e-01 : f32
    %126 = vector.broadcast %cst_56 : f32 to vector<16x128xf32>
    %127 = arith.mulf %126, %125 : vector<16x128xf32>
    %128 = vector.extract_strided_slice %111 {offsets = [0, 256], sizes = [16, 128], strides = [1, 1]} : vector<16x512xf32> to vector<16x128xf32>
    %129 = math.tanh %128 : vector<16x128xf32>
    %130 = vector.extract_strided_slice %111 {offsets = [0, 384], sizes = [16, 128], strides = [1, 1]} : vector<16x512xf32> to vector<16x128xf32>
    %cst_57 = arith.constant 5.000000e-01 : f32
    %131 = vector.broadcast %cst_57 : f32 to vector<16x128xf32>
    %132 = arith.mulf %131, %130 : vector<16x128xf32>
    %133 = math.tanh %132 : vector<16x128xf32>
    %cst_58 = arith.constant 1.000000e+00 : f32
    %134 = vector.broadcast %cst_58 : f32 to vector<16x128xf32>
    %135 = arith.addf %133, %134 : vector<16x128xf32>
    %cst_59 = arith.constant 5.000000e-01 : f32
    %136 = vector.broadcast %cst_59 : f32 to vector<16x128xf32>
    %137 = arith.mulf %136, %135 : vector<16x128xf32>
    %138 = arith.mulf %127, %99 : vector<16x128xf32>
    %139 = arith.mulf %119, %129 : vector<16x128xf32>
    %140 = arith.addf %138, %139 : vector<16x128xf32>
    %141 = math.tanh %140 : vector<16x128xf32>
    %142 = arith.mulf %137, %141 : vector<16x128xf32>
    %c2_i32_60 = arith.constant 2 : i32
    %143 = vector.broadcast %c2_i32_60 : i32 to vector<16x1xi32>
    %144 = arith.cmpi eq, %6, %143 : vector<16x1xi32>
    %145 = vector.shape_cast %144 : vector<16x1xi1> to vector<16x1xi1>
    %146 = vector.broadcast %145 : vector<16x1xi1> to vector<16x128xi1>
    %147 = arith.select %146, %142, %106 : vector<16x128xi1>, vector<16x128xf32>
    %c48 = arith.constant 48 : index
    %c0_61 = arith.constant 0 : index
    %148 = vector.load %arg19[%c48, %c0_61] : memref<128x512xf32, #tpu.memory_space<vmem>>, vector<16x512xf32>
    %149 = arith.truncf %142 : vector<16x128xf32> to vector<16x128xbf16>
    %c0_62 = arith.constant 0 : index
    %c0_63 = arith.constant 0 : index
    %150 = vector.load %arg6[%c0_62, %c0_63] : memref<128x512xbf16, #tpu.memory_space<vmem>>, vector<128x512xbf16>
    %cst_64 = arith.constant dense<0.000000e+00> : vector<16x512xf32>
    %151 = tpu.matmul %149, %150, %cst_64 {dimension_numbers = #tpu.dot_dimension_numbers<[1], [0], [0], [1], [0, 0, 1, 1], [], []>} : vector<16x128xbf16>, vector<128x512xbf16>, vector<16x512xf32> -> vector<16x512xf32>
    %152 = arith.addf %148, %151 : vector<16x512xf32>
    %153 = vector.extract_strided_slice %152 {offsets = [0, 0], sizes = [16, 128], strides = [1, 1]} : vector<16x512xf32> to vector<16x128xf32>
    %cst_65 = arith.constant 5.000000e-01 : f32
    %154 = vector.broadcast %cst_65 : f32 to vector<16x128xf32>
    %155 = arith.mulf %154, %153 : vector<16x128xf32>
    %156 = math.tanh %155 : vector<16x128xf32>
    %cst_66 = arith.constant 1.000000e+00 : f32
    %157 = vector.broadcast %cst_66 : f32 to vector<16x128xf32>
    %158 = arith.addf %156, %157 : vector<16x128xf32>
    %cst_67 = arith.constant 5.000000e-01 : f32
    %159 = vector.broadcast %cst_67 : f32 to vector<16x128xf32>
    %160 = arith.mulf %159, %158 : vector<16x128xf32>
    %161 = vector.extract_strided_slice %152 {offsets = [0, 128], sizes = [16, 128], strides = [1, 1]} : vector<16x512xf32> to vector<16x128xf32>
    %cst_68 = arith.constant 5.000000e-01 : f32
    %162 = vector.broadcast %cst_68 : f32 to vector<16x128xf32>
    %163 = arith.mulf %162, %161 : vector<16x128xf32>
    %164 = math.tanh %163 : vector<16x128xf32>
    %cst_69 = arith.constant 1.000000e+00 : f32
    %165 = vector.broadcast %cst_69 : f32 to vector<16x128xf32>
    %166 = arith.addf %164, %165 : vector<16x128xf32>
    %cst_70 = arith.constant 5.000000e-01 : f32
    %167 = vector.broadcast %cst_70 : f32 to vector<16x128xf32>
    %168 = arith.mulf %167, %166 : vector<16x128xf32>
    %169 = vector.extract_strided_slice %152 {offsets = [0, 256], sizes = [16, 128], strides = [1, 1]} : vector<16x512xf32> to vector<16x128xf32>
    %170 = math.tanh %169 : vector<16x128xf32>
    %171 = vector.extract_strided_slice %152 {offsets = [0, 384], sizes = [16, 128], strides = [1, 1]} : vector<16x512xf32> to vector<16x128xf32>
    %cst_71 = arith.constant 5.000000e-01 : f32
    %172 = vector.broadcast %cst_71 : f32 to vector<16x128xf32>
    %173 = arith.mulf %172, %171 : vector<16x128xf32>
    %174 = math.tanh %173 : vector<16x128xf32>
    %cst_72 = arith.constant 1.000000e+00 : f32
    %175 = vector.broadcast %cst_72 : f32 to vector<16x128xf32>
    %176 = arith.addf %174, %175 : vector<16x128xf32>
    %cst_73 = arith.constant 5.000000e-01 : f32
    %177 = vector.broadcast %cst_73 : f32 to vector<16x128xf32>
    %178 = arith.mulf %177, %176 : vector<16x128xf32>
    %179 = arith.mulf %168, %140 : vector<16x128xf32>
    %180 = arith.mulf %160, %170 : vector<16x128xf32>
    %181 = arith.addf %179, %180 : vector<16x128xf32>
    %182 = math.tanh %181 : vector<16x128xf32>
    %183 = arith.mulf %178, %182 : vector<16x128xf32>
    %c3_i32 = arith.constant 3 : i32
    %184 = vector.broadcast %c3_i32 : i32 to vector<16x1xi32>
    %185 = arith.cmpi eq, %6, %184 : vector<16x1xi32>
    %186 = vector.shape_cast %185 : vector<16x1xi1> to vector<16x1xi1>
    %187 = vector.broadcast %186 : vector<16x1xi1> to vector<16x128xi1>
    %188 = arith.select %187, %183, %147 : vector<16x128xi1>, vector<16x128xf32>
    %c64 = arith.constant 64 : index
    %c0_74 = arith.constant 0 : index
    %189 = vector.load %arg19[%c64, %c0_74] : memref<128x512xf32, #tpu.memory_space<vmem>>, vector<16x512xf32>
    %190 = arith.truncf %183 : vector<16x128xf32> to vector<16x128xbf16>
    %c0_75 = arith.constant 0 : index
    %c0_76 = arith.constant 0 : index
    %191 = vector.load %arg6[%c0_75, %c0_76] : memref<128x512xbf16, #tpu.memory_space<vmem>>, vector<128x512xbf16>
    %cst_77 = arith.constant dense<0.000000e+00> : vector<16x512xf32>
    %192 = tpu.matmul %190, %191, %cst_77 {dimension_numbers = #tpu.dot_dimension_numbers<[1], [0], [0], [1], [0, 0, 1, 1], [], []>} : vector<16x128xbf16>, vector<128x512xbf16>, vector<16x512xf32> -> vector<16x512xf32>
    %193 = arith.addf %189, %192 : vector<16x512xf32>
    %194 = vector.extract_strided_slice %193 {offsets = [0, 0], sizes = [16, 128], strides = [1, 1]} : vector<16x512xf32> to vector<16x128xf32>
    %cst_78 = arith.constant 5.000000e-01 : f32
    %195 = vector.broadcast %cst_78 : f32 to vector<16x128xf32>
    %196 = arith.mulf %195, %194 : vector<16x128xf32>
    %197 = math.tanh %196 : vector<16x128xf32>
    %cst_79 = arith.constant 1.000000e+00 : f32
    %198 = vector.broadcast %cst_79 : f32 to vector<16x128xf32>
    %199 = arith.addf %197, %198 : vector<16x128xf32>
    %cst_80 = arith.constant 5.000000e-01 : f32
    %200 = vector.broadcast %cst_80 : f32 to vector<16x128xf32>
    %201 = arith.mulf %200, %199 : vector<16x128xf32>
    %202 = vector.extract_strided_slice %193 {offsets = [0, 128], sizes = [16, 128], strides = [1, 1]} : vector<16x512xf32> to vector<16x128xf32>
    %cst_81 = arith.constant 5.000000e-01 : f32
    %203 = vector.broadcast %cst_81 : f32 to vector<16x128xf32>
    %204 = arith.mulf %203, %202 : vector<16x128xf32>
    %205 = math.tanh %204 : vector<16x128xf32>
    %cst_82 = arith.constant 1.000000e+00 : f32
    %206 = vector.broadcast %cst_82 : f32 to vector<16x128xf32>
    %207 = arith.addf %205, %206 : vector<16x128xf32>
    %cst_83 = arith.constant 5.000000e-01 : f32
    %208 = vector.broadcast %cst_83 : f32 to vector<16x128xf32>
    %209 = arith.mulf %208, %207 : vector<16x128xf32>
    %210 = vector.extract_strided_slice %193 {offsets = [0, 256], sizes = [16, 128], strides = [1, 1]} : vector<16x512xf32> to vector<16x128xf32>
    %211 = math.tanh %210 : vector<16x128xf32>
    %212 = vector.extract_strided_slice %193 {offsets = [0, 384], sizes = [16, 128], strides = [1, 1]} : vector<16x512xf32> to vector<16x128xf32>
    %cst_84 = arith.constant 5.000000e-01 : f32
    %213 = vector.broadcast %cst_84 : f32 to vector<16x128xf32>
    %214 = arith.mulf %213, %212 : vector<16x128xf32>
    %215 = math.tanh %214 : vector<16x128xf32>
    %cst_85 = arith.constant 1.000000e+00 : f32
    %216 = vector.broadcast %cst_85 : f32 to vector<16x128xf32>
    %217 = arith.addf %215, %216 : vector<16x128xf32>
    %cst_86 = arith.constant 5.000000e-01 : f32
    %218 = vector.broadcast %cst_86 : f32 to vector<16x128xf32>
    %219 = arith.mulf %218, %217 : vector<16x128xf32>
    %220 = arith.mulf %209, %181 : vector<16x128xf32>
    %221 = arith.mulf %201, %211 : vector<16x128xf32>
    %222 = arith.addf %220, %221 : vector<16x128xf32>
    %223 = math.tanh %222 : vector<16x128xf32>
    %224 = arith.mulf %219, %223 : vector<16x128xf32>
    %c4_i32 = arith.constant 4 : i32
    %225 = vector.broadcast %c4_i32 : i32 to vector<16x1xi32>
    %226 = arith.cmpi eq, %6, %225 : vector<16x1xi32>
    %227 = vector.shape_cast %226 : vector<16x1xi1> to vector<16x1xi1>
    %228 = vector.broadcast %227 : vector<16x1xi1> to vector<16x128xi1>
    %229 = arith.select %228, %224, %188 : vector<16x128xi1>, vector<16x128xf32>
    %c80 = arith.constant 80 : index
    %c0_87 = arith.constant 0 : index
    %230 = vector.load %arg19[%c80, %c0_87] : memref<128x512xf32, #tpu.memory_space<vmem>>, vector<16x512xf32>
    %231 = arith.truncf %224 : vector<16x128xf32> to vector<16x128xbf16>
    %c0_88 = arith.constant 0 : index
    %c0_89 = arith.constant 0 : index
    %232 = vector.load %arg6[%c0_88, %c0_89] : memref<128x512xbf16, #tpu.memory_space<vmem>>, vector<128x512xbf16>
    %cst_90 = arith.constant dense<0.000000e+00> : vector<16x512xf32>
    %233 = tpu.matmul %231, %232, %cst_90 {dimension_numbers = #tpu.dot_dimension_numbers<[1], [0], [0], [1], [0, 0, 1, 1], [], []>} : vector<16x128xbf16>, vector<128x512xbf16>, vector<16x512xf32> -> vector<16x512xf32>
    %234 = arith.addf %230, %233 : vector<16x512xf32>
    %235 = vector.extract_strided_slice %234 {offsets = [0, 0], sizes = [16, 128], strides = [1, 1]} : vector<16x512xf32> to vector<16x128xf32>
    %cst_91 = arith.constant 5.000000e-01 : f32
    %236 = vector.broadcast %cst_91 : f32 to vector<16x128xf32>
    %237 = arith.mulf %236, %235 : vector<16x128xf32>
    %238 = math.tanh %237 : vector<16x128xf32>
    %cst_92 = arith.constant 1.000000e+00 : f32
    %239 = vector.broadcast %cst_92 : f32 to vector<16x128xf32>
    %240 = arith.addf %238, %239 : vector<16x128xf32>
    %cst_93 = arith.constant 5.000000e-01 : f32
    %241 = vector.broadcast %cst_93 : f32 to vector<16x128xf32>
    %242 = arith.mulf %241, %240 : vector<16x128xf32>
    %243 = vector.extract_strided_slice %234 {offsets = [0, 128], sizes = [16, 128], strides = [1, 1]} : vector<16x512xf32> to vector<16x128xf32>
    %cst_94 = arith.constant 5.000000e-01 : f32
    %244 = vector.broadcast %cst_94 : f32 to vector<16x128xf32>
    %245 = arith.mulf %244, %243 : vector<16x128xf32>
    %246 = math.tanh %245 : vector<16x128xf32>
    %cst_95 = arith.constant 1.000000e+00 : f32
    %247 = vector.broadcast %cst_95 : f32 to vector<16x128xf32>
    %248 = arith.addf %246, %247 : vector<16x128xf32>
    %cst_96 = arith.constant 5.000000e-01 : f32
    %249 = vector.broadcast %cst_96 : f32 to vector<16x128xf32>
    %250 = arith.mulf %249, %248 : vector<16x128xf32>
    %251 = vector.extract_strided_slice %234 {offsets = [0, 256], sizes = [16, 128], strides = [1, 1]} : vector<16x512xf32> to vector<16x128xf32>
    %252 = math.tanh %251 : vector<16x128xf32>
    %253 = vector.extract_strided_slice %234 {offsets = [0, 384], sizes = [16, 128], strides = [1, 1]} : vector<16x512xf32> to vector<16x128xf32>
    %cst_97 = arith.constant 5.000000e-01 : f32
    %254 = vector.broadcast %cst_97 : f32 to vector<16x128xf32>
    %255 = arith.mulf %254, %253 : vector<16x128xf32>
    %256 = math.tanh %255 : vector<16x128xf32>
    %cst_98 = arith.constant 1.000000e+00 : f32
    %257 = vector.broadcast %cst_98 : f32 to vector<16x128xf32>
    %258 = arith.addf %256, %257 : vector<16x128xf32>
    %cst_99 = arith.constant 5.000000e-01 : f32
    %259 = vector.broadcast %cst_99 : f32 to vector<16x128xf32>
    %260 = arith.mulf %259, %258 : vector<16x128xf32>
    %261 = arith.mulf %250, %222 : vector<16x128xf32>
    %262 = arith.mulf %242, %252 : vector<16x128xf32>
    %263 = arith.addf %261, %262 : vector<16x128xf32>
    %264 = math.tanh %263 : vector<16x128xf32>
    %265 = arith.mulf %260, %264 : vector<16x128xf32>
    %c5_i32 = arith.constant 5 : i32
    %266 = vector.broadcast %c5_i32 : i32 to vector<16x1xi32>
    %267 = arith.cmpi eq, %6, %266 : vector<16x1xi32>
    %268 = vector.shape_cast %267 : vector<16x1xi1> to vector<16x1xi1>
    %269 = vector.broadcast %268 : vector<16x1xi1> to vector<16x128xi1>
    %270 = arith.select %269, %265, %229 : vector<16x128xi1>, vector<16x128xf32>
    %c96 = arith.constant 96 : index
    %c0_100 = arith.constant 0 : index
    %271 = vector.load %arg19[%c96, %c0_100] : memref<128x512xf32, #tpu.memory_space<vmem>>, vector<16x512xf32>
    %272 = arith.truncf %265 : vector<16x128xf32> to vector<16x128xbf16>
    %c0_101 = arith.constant 0 : index
    %c0_102 = arith.constant 0 : index
    %273 = vector.load %arg6[%c0_101, %c0_102] : memref<128x512xbf16, #tpu.memory_space<vmem>>, vector<128x512xbf16>
    %cst_103 = arith.constant dense<0.000000e+00> : vector<16x512xf32>
    %274 = tpu.matmul %272, %273, %cst_103 {dimension_numbers = #tpu.dot_dimension_numbers<[1], [0], [0], [1], [0, 0, 1, 1], [], []>} : vector<16x128xbf16>, vector<128x512xbf16>, vector<16x512xf32> -> vector<16x512xf32>
    %275 = arith.addf %271, %274 : vector<16x512xf32>
    %276 = vector.extract_strided_slice %275 {offsets = [0, 0], sizes = [16, 128], strides = [1, 1]} : vector<16x512xf32> to vector<16x128xf32>
    %cst_104 = arith.constant 5.000000e-01 : f32
    %277 = vector.broadcast %cst_104 : f32 to vector<16x128xf32>
    %278 = arith.mulf %277, %276 : vector<16x128xf32>
    %279 = math.tanh %278 : vector<16x128xf32>
    %cst_105 = arith.constant 1.000000e+00 : f32
    %280 = vector.broadcast %cst_105 : f32 to vector<16x128xf32>
    %281 = arith.addf %279, %280 : vector<16x128xf32>
    %cst_106 = arith.constant 5.000000e-01 : f32
    %282 = vector.broadcast %cst_106 : f32 to vector<16x128xf32>
    %283 = arith.mulf %282, %281 : vector<16x128xf32>
    %284 = vector.extract_strided_slice %275 {offsets = [0, 128], sizes = [16, 128], strides = [1, 1]} : vector<16x512xf32> to vector<16x128xf32>
    %cst_107 = arith.constant 5.000000e-01 : f32
    %285 = vector.broadcast %cst_107 : f32 to vector<16x128xf32>
    %286 = arith.mulf %285, %284 : vector<16x128xf32>
    %287 = math.tanh %286 : vector<16x128xf32>
    %cst_108 = arith.constant 1.000000e+00 : f32
    %288 = vector.broadcast %cst_108 : f32 to vector<16x128xf32>
    %289 = arith.addf %287, %288 : vector<16x128xf32>
    %cst_109 = arith.constant 5.000000e-01 : f32
    %290 = vector.broadcast %cst_109 : f32 to vector<16x128xf32>
    %291 = arith.mulf %290, %289 : vector<16x128xf32>
    %292 = vector.extract_strided_slice %275 {offsets = [0, 256], sizes = [16, 128], strides = [1, 1]} : vector<16x512xf32> to vector<16x128xf32>
    %293 = math.tanh %292 : vector<16x128xf32>
    %294 = vector.extract_strided_slice %275 {offsets = [0, 384], sizes = [16, 128], strides = [1, 1]} : vector<16x512xf32> to vector<16x128xf32>
    %cst_110 = arith.constant 5.000000e-01 : f32
    %295 = vector.broadcast %cst_110 : f32 to vector<16x128xf32>
    %296 = arith.mulf %295, %294 : vector<16x128xf32>
    %297 = math.tanh %296 : vector<16x128xf32>
    %cst_111 = arith.constant 1.000000e+00 : f32
    %298 = vector.broadcast %cst_111 : f32 to vector<16x128xf32>
    %299 = arith.addf %297, %298 : vector<16x128xf32>
    %cst_112 = arith.constant 5.000000e-01 : f32
    %300 = vector.broadcast %cst_112 : f32 to vector<16x128xf32>
    %301 = arith.mulf %300, %299 : vector<16x128xf32>
    %302 = arith.mulf %291, %263 : vector<16x128xf32>
    %303 = arith.mulf %283, %293 : vector<16x128xf32>
    %304 = arith.addf %302, %303 : vector<16x128xf32>
    %305 = math.tanh %304 : vector<16x128xf32>
    %306 = arith.mulf %301, %305 : vector<16x128xf32>
    %c6_i32 = arith.constant 6 : i32
    %307 = vector.broadcast %c6_i32 : i32 to vector<16x1xi32>
    %308 = arith.cmpi eq, %6, %307 : vector<16x1xi32>
    %309 = vector.shape_cast %308 : vector<16x1xi1> to vector<16x1xi1>
    %310 = vector.broadcast %309 : vector<16x1xi1> to vector<16x128xi1>
    %311 = arith.select %310, %306, %270 : vector<16x128xi1>, vector<16x128xf32>
    %c112 = arith.constant 112 : index
    %c0_113 = arith.constant 0 : index
    %312 = vector.load %arg19[%c112, %c0_113] : memref<128x512xf32, #tpu.memory_space<vmem>>, vector<16x512xf32>
    %313 = arith.truncf %306 : vector<16x128xf32> to vector<16x128xbf16>
    %c0_114 = arith.constant 0 : index
    %c0_115 = arith.constant 0 : index
    %314 = vector.load %arg6[%c0_114, %c0_115] : memref<128x512xbf16, #tpu.memory_space<vmem>>, vector<128x512xbf16>
    %cst_116 = arith.constant dense<0.000000e+00> : vector<16x512xf32>
    %315 = tpu.matmul %313, %314, %cst_116 {dimension_numbers = #tpu.dot_dimension_numbers<[1], [0], [0], [1], [0, 0, 1, 1], [], []>} : vector<16x128xbf16>, vector<128x512xbf16>, vector<16x512xf32> -> vector<16x512xf32>
    %316 = arith.addf %312, %315 : vector<16x512xf32>
    %317 = vector.extract_strided_slice %316 {offsets = [0, 0], sizes = [16, 128], strides = [1, 1]} : vector<16x512xf32> to vector<16x128xf32>
    %cst_117 = arith.constant 5.000000e-01 : f32
    %318 = vector.broadcast %cst_117 : f32 to vector<16x128xf32>
    %319 = arith.mulf %318, %317 : vector<16x128xf32>
    %320 = math.tanh %319 : vector<16x128xf32>
    %cst_118 = arith.constant 1.000000e+00 : f32
    %321 = vector.broadcast %cst_118 : f32 to vector<16x128xf32>
    %322 = arith.addf %320, %321 : vector<16x128xf32>
    %cst_119 = arith.constant 5.000000e-01 : f32
    %323 = vector.broadcast %cst_119 : f32 to vector<16x128xf32>
    %324 = arith.mulf %323, %322 : vector<16x128xf32>
    %325 = vector.extract_strided_slice %316 {offsets = [0, 128], sizes = [16, 128], strides = [1, 1]} : vector<16x512xf32> to vector<16x128xf32>
    %cst_120 = arith.constant 5.000000e-01 : f32
    %326 = vector.broadcast %cst_120 : f32 to vector<16x128xf32>
    %327 = arith.mulf %326, %325 : vector<16x128xf32>
    %328 = math.tanh %327 : vector<16x128xf32>
    %cst_121 = arith.constant 1.000000e+00 : f32
    %329 = vector.broadcast %cst_121 : f32 to vector<16x128xf32>
    %330 = arith.addf %328, %329 : vector<16x128xf32>
    %cst_122 = arith.constant 5.000000e-01 : f32
    %331 = vector.broadcast %cst_122 : f32 to vector<16x128xf32>
    %332 = arith.mulf %331, %330 : vector<16x128xf32>
    %333 = vector.extract_strided_slice %316 {offsets = [0, 256], sizes = [16, 128], strides = [1, 1]} : vector<16x512xf32> to vector<16x128xf32>
    %334 = math.tanh %333 : vector<16x128xf32>
    %335 = vector.extract_strided_slice %316 {offsets = [0, 384], sizes = [16, 128], strides = [1, 1]} : vector<16x512xf32> to vector<16x128xf32>
    %cst_123 = arith.constant 5.000000e-01 : f32
    %336 = vector.broadcast %cst_123 : f32 to vector<16x128xf32>
    %337 = arith.mulf %336, %335 : vector<16x128xf32>
    %338 = math.tanh %337 : vector<16x128xf32>
    %cst_124 = arith.constant 1.000000e+00 : f32
    %339 = vector.broadcast %cst_124 : f32 to vector<16x128xf32>
    %340 = arith.addf %338, %339 : vector<16x128xf32>
    %cst_125 = arith.constant 5.000000e-01 : f32
    %341 = vector.broadcast %cst_125 : f32 to vector<16x128xf32>
    %342 = arith.mulf %341, %340 : vector<16x128xf32>
    %343 = arith.mulf %332, %304 : vector<16x128xf32>
    %344 = arith.mulf %324, %334 : vector<16x128xf32>
    %345 = arith.addf %343, %344 : vector<16x128xf32>
    %346 = math.tanh %345 : vector<16x128xf32>
    %347 = arith.mulf %342, %346 : vector<16x128xf32>
    %c7_i32 = arith.constant 7 : i32
    %348 = vector.broadcast %c7_i32 : i32 to vector<16x1xi32>
    %349 = arith.cmpi eq, %6, %348 : vector<16x1xi32>
    %350 = vector.shape_cast %349 : vector<16x1xi1> to vector<16x1xi1>
    %351 = vector.broadcast %350 : vector<16x1xi1> to vector<16x128xi1>
    %352 = arith.select %351, %347, %311 : vector<16x128xi1>, vector<16x128xf32>
    %c0_i32_126 = arith.constant 0 : i32
    %353 = tpu.memref_slice %arg23[%c0_i32_126] : memref<3x!tpu.dma_semaphore, #tpu.memory_space<semaphore_mem>> -> memref<1x!tpu.dma_semaphore, #tpu.memory_space<semaphore_mem>>
    %354 = tpu.memref_squeeze %353 : memref<1x!tpu.dma_semaphore, #tpu.memory_space<semaphore_mem>> -> memref<!tpu.dma_semaphore, #tpu.memory_space<semaphore_mem>>
    tpu.wait_dma2 semaphore(%354 : memref<!tpu.dma_semaphore, #tpu.memory_space<semaphore_mem>>) src(%arg8 : memref<128x128xbf16, #tpu.memory_space<any>>) dst(%arg20 : memref<128x128xbf16, #tpu.memory_space<vmem>>)
    %355 = arith.truncf %352 : vector<16x128xf32> to vector<16x128xbf16>
    %c0_127 = arith.constant 0 : index
    %c0_128 = arith.constant 0 : index
    %356 = vector.load %arg20[%c0_127, %c0_128] : memref<128x128xbf16, #tpu.memory_space<vmem>>, vector<128x128xbf16>
    %cst_129 = arith.constant dense<0.000000e+00> : vector<16x128xf32>
    %357 = tpu.matmul %355, %356, %cst_129 {dimension_numbers = #tpu.dot_dimension_numbers<[1], [0], [0], [1], [0, 0, 1, 1], [], []>} : vector<16x128xbf16>, vector<128x128xbf16>, vector<16x128xf32> -> vector<16x128xf32>
    %c0_130 = arith.constant 0 : index
    %c0_131 = arith.constant 0 : index
    %358 = vector.load %arg9[%c0_130, %c0_131] : memref<1x128xf32, #tpu.memory_space<vmem>>, vector<1x128xf32>
    %359 = vector.broadcast %358 : vector<1x128xf32> to vector<16x128xf32>
    %360 = arith.addf %357, %359 : vector<16x128xf32>
    %cst_132 = arith.constant 0.000000e+00 : f32
    %361 = vector.broadcast %cst_132 : f32 to vector<16x128xf32>
    %362 = arith.maximumf %360, %361 : vector<16x128xf32>
    %c0_133 = arith.constant 0 : index
    %c0_134 = arith.constant 0 : index
    %363 = vector.load %arg2[%c0_133, %c0_134] : memref<16x20xbf16, #tpu.memory_space<vmem>>, vector<16x20xbf16>
    %c0_135 = arith.constant 0 : index
    %c0_136 = arith.constant 0 : index
    %364 = vector.load %arg10[%c0_135, %c0_136] : memref<20x128xbf16, #tpu.memory_space<vmem>>, vector<20x128xbf16>
    %cst_137 = arith.constant dense<0.000000e+00> : vector<16x128xf32>
    %365 = tpu.matmul %363, %364, %cst_137 {dimension_numbers = #tpu.dot_dimension_numbers<[1], [0], [0], [1], [0, 0, 1, 1], [], []>} : vector<16x20xbf16>, vector<20x128xbf16>, vector<16x128xf32> -> vector<16x128xf32>
    %c0_138 = arith.constant 0 : index
    %c0_139 = arith.constant 0 : index
    %366 = vector.load %arg11[%c0_138, %c0_139] : memref<1x128xf32, #tpu.memory_space<vmem>>, vector<1x128xf32>
    %367 = vector.broadcast %366 : vector<1x128xf32> to vector<16x128xf32>
    %368 = arith.addf %365, %367 : vector<16x128xf32>
    %cst_140 = arith.constant 0.000000e+00 : f32
    %369 = vector.broadcast %cst_140 : f32 to vector<16x128xf32>
    %370 = arith.maximumf %368, %369 : vector<16x128xf32>
    %c1_i32_141 = arith.constant 1 : i32
    %371 = tpu.memref_slice %arg23[%c1_i32_141] : memref<3x!tpu.dma_semaphore, #tpu.memory_space<semaphore_mem>> -> memref<1x!tpu.dma_semaphore, #tpu.memory_space<semaphore_mem>>
    %372 = tpu.memref_squeeze %371 : memref<1x!tpu.dma_semaphore, #tpu.memory_space<semaphore_mem>> -> memref<!tpu.dma_semaphore, #tpu.memory_space<semaphore_mem>>
    tpu.wait_dma2 semaphore(%372 : memref<!tpu.dma_semaphore, #tpu.memory_space<semaphore_mem>>) src(%arg12 : memref<128x128xbf16, #tpu.memory_space<any>>) dst(%arg21 : memref<128x128xbf16, #tpu.memory_space<vmem>>)
    %c2_i32_142 = arith.constant 2 : i32
    %373 = tpu.memref_slice %arg23[%c2_i32_142] : memref<3x!tpu.dma_semaphore, #tpu.memory_space<semaphore_mem>> -> memref<1x!tpu.dma_semaphore, #tpu.memory_space<semaphore_mem>>
    %374 = tpu.memref_squeeze %373 : memref<1x!tpu.dma_semaphore, #tpu.memory_space<semaphore_mem>> -> memref<!tpu.dma_semaphore, #tpu.memory_space<semaphore_mem>>
    tpu.wait_dma2 semaphore(%374 : memref<!tpu.dma_semaphore, #tpu.memory_space<semaphore_mem>>) src(%arg13 : memref<128x128xbf16, #tpu.memory_space<any>>) dst(%arg22 : memref<128x128xbf16, #tpu.memory_space<vmem>>)
    %375 = arith.truncf %362 : vector<16x128xf32> to vector<16x128xbf16>
    %c0_143 = arith.constant 0 : index
    %c0_144 = arith.constant 0 : index
    %376 = vector.load %arg21[%c0_143, %c0_144] : memref<128x128xbf16, #tpu.memory_space<vmem>>, vector<128x128xbf16>
    %cst_145 = arith.constant dense<0.000000e+00> : vector<16x128xf32>
    %377 = tpu.matmul %375, %376, %cst_145 {dimension_numbers = #tpu.dot_dimension_numbers<[1], [0], [0], [1], [0, 0, 1, 1], [], []>} : vector<16x128xbf16>, vector<128x128xbf16>, vector<16x128xf32> -> vector<16x128xf32>
    %378 = arith.truncf %370 : vector<16x128xf32> to vector<16x128xbf16>
    %c0_146 = arith.constant 0 : index
    %c0_147 = arith.constant 0 : index
    %379 = vector.load %arg22[%c0_146, %c0_147] : memref<128x128xbf16, #tpu.memory_space<vmem>>, vector<128x128xbf16>
    %cst_148 = arith.constant dense<0.000000e+00> : vector<16x128xf32>
    %380 = tpu.matmul %378, %379, %cst_148 {dimension_numbers = #tpu.dot_dimension_numbers<[1], [0], [0], [1], [0, 0, 1, 1], [], []>} : vector<16x128xbf16>, vector<128x128xbf16>, vector<16x128xf32> -> vector<16x128xf32>
    %381 = arith.addf %377, %380 : vector<16x128xf32>
    %c0_149 = arith.constant 0 : index
    %c0_150 = arith.constant 0 : index
    %382 = vector.load %arg14[%c0_149, %c0_150] : memref<1x128xf32, #tpu.memory_space<vmem>>, vector<1x128xf32>
    %383 = vector.broadcast %382 : vector<1x128xf32> to vector<16x128xf32>
    %384 = arith.addf %381, %383 : vector<16x128xf32>
    %cst_151 = arith.constant 0.000000e+00 : f32
    %385 = vector.broadcast %cst_151 : f32 to vector<16x128xf32>
    %386 = arith.maximumf %384, %385 : vector<16x128xf32>
    %c0_152 = arith.constant 0 : index
    %c0_153 = arith.constant 0 : index
    %387 = vector.load %arg15[%c0_152, %c0_153] : memref<1x128xf32, #tpu.memory_space<vmem>>, vector<1x128xf32>
    %388 = vector.broadcast %387 : vector<1x128xf32> to vector<16x128xf32>
    %389 = arith.mulf %386, %388 : vector<16x128xf32>
    %cst_154 = arith.constant dense<0.000000e+00> : vector<16xf32>
    %390 = vector.multi_reduction <add>, %389, %cst_154 [1] : vector<16x128xf32> to vector<16xf32>
    %391 = vector.shape_cast %390 : vector<16xf32> to vector<16x1xf32>
    %c0_155 = arith.constant 0 : index
    %c0_156 = arith.constant 0 : index
    %392 = vector.load %arg16[%c0_155, %c0_156] : memref<1x1xf32, #tpu.memory_space<vmem>>, vector<1x1xf32>
    %393 = vector.broadcast %392 : vector<1x1xf32> to vector<16x1xf32>
    %394 = arith.addf %391, %393 : vector<16x1xf32>
    %c0_157 = arith.constant 0 : index
    %c0_158 = arith.constant 0 : index
    %395 = vector.load %arg17[%c0_157, %c0_158] : memref<16x1xf32, #tpu.memory_space<vmem>>, vector<16x1xf32>
    tpu.vector_store %arg17[%c0_157, %c0_158], %394 {strides = array<i32>} : memref<16x1xf32, #tpu.memory_space<vmem>>, vector<16x1xf32>,
    %c0_159 = arith.constant 0 : index
    %c0_160 = arith.constant 0 : index
    %396 = vector.load %arg18[%c0_159, %c0_160] : memref<16x128xf32, #tpu.memory_space<vmem>>, vector<16x128xf32>
    tpu.vector_store %arg18[%c0_159, %c0_160], %362 {strides = array<i32>} : memref<16x128xf32, #tpu.memory_space<vmem>>, vector<16x128xf32>,
    return
  }
}

</mosaic_0001>

<llo_original>
// kernel: critic_lstm_td3_forward.1
$region0: #{critic_lstm_td3_forward.1}
  #allocation0 [shape = 'u32[]', space=smem, size = 0x4, offset = 0x4, fixed_abs, tag = 'smem constant byte address 0x4 - core index']
  #allocation1 [shape = 'u32[144,128]{1,0:T(1,128)}', space=vmem, size = 0x12000, scoped, tag = 'internal scratch']
  #allocation2 [shape = 'f32[128,512]{1,0:T(8,128)}', space=vmem, size = 0x40000, scoped, tag = 'scratch operand']
  #allocation3 [shape = 'bf16[128,128]{1,0:T(16,128)(2,1)}', space=vmem, size = 0x8000, scoped, tag = 'scratch operand']
  #allocation4 [shape = 'bf16[128,128]{1,0:T(16,128)(2,1)}', space=vmem, size = 0x8000, scoped, tag = 'scratch operand']
  #allocation5 [shape = 'bf16[128,128]{1,0:T(16,128)(2,1)}', space=vmem, size = 0x8000, scoped, tag = 'scratch operand']
  #allocation6 [shape = 's32[3]{0}', space=sflag, size = 0xc, scoped, tag = 'scratch operand']
  #allocation7 [shape = 'f32[1,1]{1,0:T(1,128)S(1)}', space=vmem, size = 0x200, scoped, tag = 'scoped memory for critic_lstm_td3_forward.1']
  #allocation8 [shape = 's32[]', space=sflag, size = 0x4, offset = 0, fixed_abs, tag = 'sflag constant byte address 0x0 - dummy sync flag']
  #allocation9 [shape = 's32[]', space=sflag, size = 0x4, offset = 0, fixed_abs, tag = 'sflag constant byte address 0x0 - dummy sync flag']
  #allocation10 [shape = 's32[]', space=sflag, size = 0x4, offset = 0, fixed_abs, tag = 'sflag constant byte address 0x0 - dummy sync flag']
  %s0 = inlined_call_operand.vmem [shape: s32[16,1], index: 0, kind: input, shape index: {}]
  %s1 = inlined_call_operand.vmem [shape: bf16[128,20], index: 1, kind: input, shape index: {}]
  %s2 = inlined_call_operand.vmem [shape: bf16[16,20], index: 2, kind: input, shape index: {}]
  %s3 = inlined_call_operand.vmem [shape: bf16[20,128], index: 3, kind: input, shape index: {}]
  %s4 = inlined_call_operand.vmem [shape: f32[1,128], index: 4, kind: input, shape index: {}]
  %s5 = inlined_call_operand.vmem [shape: bf16[128,512], index: 5, kind: input, shape index: {}]
  %s6 = inlined_call_operand.vmem [shape: bf16[128,512], index: 6, kind: input, shape index: {}]
  %s7 = inlined_call_operand.vmem [shape: f32[1,512], index: 7, kind: input, shape index: {}]
  %s8 = inlined_call_operand.vmem [shape: bf16[128,128], index: 8, kind: input, shape index: {}]
  %s9 = inlined_call_operand.vmem [shape: f32[1,128], index: 9, kind: input, shape index: {}]
  %s10 = inlined_call_operand.vmem [shape: bf16[20,128], index: 10, kind: input, shape index: {}]
  %s11 = inlined_call_operand.vmem [shape: f32[1,128], index: 11, kind: input, shape index: {}]
  %s12 = inlined_call_operand.vmem [shape: bf16[128,128], index: 12, kind: input, shape index: {}]
  %s13 = inlined_call_operand.vmem [shape: bf16[128,128], index: 13, kind: input, shape index: {}]
  %s14 = inlined_call_operand.vmem [shape: f32[1,128], index: 14, kind: input, shape index: {}]
  %s15 = inlined_call_operand.vmem [shape: f32[1,128], index: 15, kind: input, shape index: {}]
  %s16 = inlined_call_operand.<no memory space> [shape: f32[1,1], index: 16, kind: input, shape index: {}]
  %s17 = inlined_call_operand.vmem [shape: f32[16,1], index: 17, kind: output, shape index: {0}]
  %s18 = inlined_call_operand.vmem [shape: f32[16,128], index: 18, kind: output, shape index: {1}]
  %19 = xla_tuple %s17, %s18
  %s20 = sld [smem:[#allocation0]]
  $region176: #{critic_lstm_td3_forward.1} parent=0
    _
  %s22 = ssub.s32 1, %s20
  %s23 = scalar_select 0, %s22, %s20
  %v24 = vstv %s16
  %25 = vst [vmem:[#allocation7] sm:$0x1] %v24
  // Predicated region
  $region2: #{critic_lstm_td3_forward.1} parent=0 // pred_check
    _
  $region3: #{critic_lstm_td3_forward.1} parent=0 // pred_check_branch
    %27 = sbr.rel (0) target = $region5
  $region4: #{critic_lstm_td3_forward.1} parent=0 // pred_region
    _
  $region5: #{critic_lstm_td3_forward.1} parent=0 // pred_fallthru
    _
  // Predicated region
  $region6: #{critic_lstm_td3_forward.1} parent=0 // pred_check
    _
  $region7: #{critic_lstm_td3_forward.1} parent=0 // pred_check_branch
    %29 = sbr.rel (0) target = $region9
  $region8: #{critic_lstm_td3_forward.1} parent=0 // pred_region
    _
  $region9: #{critic_lstm_td3_forward.1} parent=0 // pred_fallthru
    _
  // Predicated region
  $region10: #{critic_lstm_td3_forward.1} parent=0 // pred_check
    _
  $region11: #{critic_lstm_td3_forward.1} parent=0 // pred_check_branch
    %31 = sbr.rel (0) target = $region13
  $region12: #{critic_lstm_td3_forward.1} parent=0 // pred_region
    _
  $region13: #{critic_lstm_td3_forward.1} parent=0 // pred_fallthru
    _
  // Predicated region
  $region14: #{critic_lstm_td3_forward.1} parent=0 // pred_check
    _
  $region15: #{critic_lstm_td3_forward.1} parent=0 // pred_check_branch
    %33 = sbr.rel (0) target = $region17
  $region16: #{critic_lstm_td3_forward.1} parent=0 // pred_region
    _
  $region17: #{critic_lstm_td3_forward.1} parent=0 // pred_fallthru
    _
  // Predicated region
  $region18: #{critic_lstm_td3_forward.1} parent=0 // pred_check
    _
  $region19: #{critic_lstm_td3_forward.1} parent=0 // pred_check_branch
    %35 = sbr.rel (0) target = $region21
  $region20: #{critic_lstm_td3_forward.1} parent=0 // pred_region
    _
  $region21: #{critic_lstm_td3_forward.1} parent=0 // pred_fallthru
    _
  // Predicated region
  $region22: #{critic_lstm_td3_forward.1} parent=0 // pred_check
    _
  $region23: #{critic_lstm_td3_forward.1} parent=0 // pred_check_branch
    %37 = sbr.rel (0) target = $region25
  $region24: #{critic_lstm_td3_forward.1} parent=0 // pred_region
    _
  $region25: #{critic_lstm_td3_forward.1} parent=0 // pred_fallthru
    _
  // Predicated region
  $region26: #{critic_lstm_td3_forward.1} parent=0 // pred_check
    _
  $region27: #{critic_lstm_td3_forward.1} parent=0 // pred_check_branch
    %39 = sbr.rel (0) target = $region29
  $region28: #{critic_lstm_td3_forward.1} parent=0 // pred_region
    _
  $region29: #{critic_lstm_td3_forward.1} parent=0 // pred_fallthru
    _
  // Predicated region
  $region30: #{critic_lstm_td3_forward.1} parent=0 // pred_check
    _
  $region31: #{critic_lstm_td3_forward.1} parent=0 // pred_check_branch
    %41 = sbr.rel (0) target = $region33
  $region32: #{critic_lstm_td3_forward.1} parent=0 // pred_region
    _
  $region33: #{critic_lstm_td3_forward.1} parent=0 // pred_fallthru
    _
  // Predicated region
  $region34: #{critic_lstm_td3_forward.1} parent=0 // pred_check
    _
  $region35: #{critic_lstm_td3_forward.1} parent=0 // pred_check_branch
    %43 = sbr.rel (0) target = $region37
  $region36: #{critic_lstm_td3_forward.1} parent=0 // pred_region
    _
  $region37: #{critic_lstm_td3_forward.1} parent=0 // pred_fallthru
    _
  // Predicated region
  $region38: #{critic_lstm_td3_forward.1} parent=0 // pred_check
    _
  $region39: #{critic_lstm_td3_forward.1} parent=0 // pred_check_branch
    %45 = sbr.rel (0) target = $region41
  $region40: #{critic_lstm_td3_forward.1} parent=0 // pred_region
    _
  $region41: #{critic_lstm_td3_forward.1} parent=0 // pred_fallthru
    _
  // Predicated region
  $region42: #{critic_lstm_td3_forward.1} parent=0 // pred_check
    _
  $region43: #{critic_lstm_td3_forward.1} parent=0 // pred_check_branch
    %47 = sbr.rel (0) target = $region45
  $region44: #{critic_lstm_td3_forward.1} parent=0 // pred_region
    _
  $region45: #{critic_lstm_td3_forward.1} parent=0 // pred_fallthru
    _
  // Predicated region
  $region46: #{critic_lstm_td3_forward.1} parent=0 // pred_check
    _
  $region47: #{critic_lstm_td3_forward.1} parent=0 // pred_check_branch
    %49 = sbr.rel (0) target = $region49
  $region48: #{critic_lstm_td3_forward.1} parent=0 // pred_region
    _
  $region49: #{critic_lstm_td3_forward.1} parent=0 // pred_fallthru
    _
  // Predicated region
  $region50: #{critic_lstm_td3_forward.1} parent=0 // pred_check
    _
  $region51: #{critic_lstm_td3_forward.1} parent=0 // pred_check_branch
    %51 = sbr.rel (0) target = $region53
  $region52: #{critic_lstm_td3_forward.1} parent=0 // pred_region
    _
  $region53: #{critic_lstm_td3_forward.1} parent=0 // pred_fallthru
    _
  // Predicated region
  $region54: #{critic_lstm_td3_forward.1} parent=0 // pred_check
    _
  $region55: #{critic_lstm_td3_forward.1} parent=0 // pred_check_branch
    %53 = sbr.rel (0) target = $region57
  $region56: #{critic_lstm_td3_forward.1} parent=0 // pred_region
    _
  $region57: #{critic_lstm_td3_forward.1} parent=0 // pred_fallthru
    _
  %p56 = scmp.lt.u32.totalorder 64, 8
  %p57 = pneg %p56
  // Predicated region
  $region58: #{critic_lstm_td3_forward.1} parent=0 // pred_check
    _
  $region59: #{critic_lstm_td3_forward.1} parent=0 // pred_check_branch
    %59 = sbr.rel (%p56) target = $region61
  $region60: #{critic_lstm_td3_forward.1} parent=0 // pred_region
    %s74 = sand.u32 64, 7
    %p75 = scmp.eq.s32.totalorder %s74, 0
    // Predicated region
    $region73: #{critic_lstm_td3_forward.1} parent=60 // pred_check
      %p76 = pneg %p75
    $region74: #{critic_lstm_td3_forward.1} parent=60 // pred_check_branch
      %78 = sbr.rel (%p76) target = $region76
    $region75: #{critic_lstm_td3_forward.1} parent=60 // pred_region
      loop: start=0, step=1, limit=1
      $region77: #{critic_lstm_td3_forward.1} parent=75 // loop_pre_header
        _
      $region78: #{critic_lstm_td3_forward.1} parent=75 // loop_header
        %s80 = sphi 0, %s84
        %p81 = scmp.ge.s32.totalorder %s80, 1
        %s85 = sphi %s8, %s8
        %s86 = sphi [#allocation3], [#allocation3]
      $region79: #{critic_lstm_td3_forward.1} parent=75 // loop_header_branch
        %83 = sbr.rel (%p81) target = $region83
      $region80: #{critic_lstm_td3_forward.1} parent=75 // loop_body
        %v87 = vld [vmem:[%s85] sm:$0xff]
        %88 = vst [vmem:[%s86] sm:$0xff] %v87
        %v89 = vld [vmem:[%s85 + $0x8] sm:$0xff]
        %90 = vst [vmem:[%s86 + $0x8] sm:$0xff] %v89
        %v91 = vld [vmem:[%s85 + $0x10] sm:$0xff]
        %92 = vst [vmem:[%s86 + $0x10] sm:$0xff] %v91
        %v93 = vld [vmem:[%s85 + $0x18] sm:$0xff]
        %94 = vst [vmem:[%s86 + $0x18] sm:$0xff] %v93
        %v95 = vld [vmem:[%s85 + $0x20] sm:$0xff]
        %96 = vst [vmem:[%s86 + $0x20] sm:$0xff] %v95
        %v97 = vld [vmem:[%s85 + $0x28] sm:$0xff]
        %98 = vst [vmem:[%s86 + $0x28] sm:$0xff] %v97
        %v99 = vld [vmem:[%s85 + $0x30] sm:$0xff]
        %100 = vst [vmem:[%s86 + $0x30] sm:$0xff] %v99
        %v101 = vld [vmem:[%s85 + $0x38] sm:$0xff]
        %102 = vst [vmem:[%s86 + $0x38] sm:$0xff] %v101
      $region81: #{critic_lstm_td3_forward.1} parent=75 // loop_footer
        %s84 = sadd.s32 1, %s80
      $region82: #{critic_lstm_td3_forward.1} parent=75 // loop_footer_branch
        %79 = sbr.rel target = $region78
      $region83: #{critic_lstm_td3_forward.1} parent=75 // loop_exit
        _
    $region76: #{critic_lstm_td3_forward.1} parent=60 // pred_fallthru
      _
    %p103 = pneg %p75
    // Predicated region
    $region84: #{critic_lstm_td3_forward.1} parent=60 // pred_check
      _
    $region85: #{critic_lstm_td3_forward.1} parent=60 // pred_check_branch
      %105 = sbr.rel (%p75) target = $region87
    $region86: #{critic_lstm_td3_forward.1} parent=60 // pred_region
      %s106 = sand.u32 64, 7
    $region87: #{critic_lstm_td3_forward.1} parent=60 // pred_fallthru
      _
  $region61: #{critic_lstm_td3_forward.1} parent=0 // pred_fallthru
    _
  // Predicated region
  $region62: #{critic_lstm_td3_forward.1} parent=0 // pred_check
    %p60 = pneg %p56
  $region63: #{critic_lstm_td3_forward.1} parent=0 // pred_check_branch
    %62 = sbr.rel (%p60) target = $region65
  $region64: #{critic_lstm_td3_forward.1} parent=0 // pred_region
    %s63 = sshllo.u32 0, 64
    loop: start=0, step=1, limit=1
    $region66: #{critic_lstm_td3_forward.1} parent=64 // loop_pre_header
      _
    $region67: #{critic_lstm_td3_forward.1} parent=64 // loop_header
      %s65 = sphi 0, %s69
      %p66 = scmp.ge.s32.totalorder %s65, 1
      %s70 = sphi %s8, %s8
      %s71 = sphi [#allocation3], [#allocation3]
    $region68: #{critic_lstm_td3_forward.1} parent=64 // loop_header_branch
      %68 = sbr.rel (%p66) target = $region72
    $region69: #{critic_lstm_td3_forward.1} parent=64 // loop_body
      %v72 = vld [vmem:[%s70] sm:%s63]
      %73 = vst [vmem:[%s71] sm:%s63] %v72
    $region70: #{critic_lstm_td3_forward.1} parent=64 // loop_footer
      %s69 = sadd.s32 1, %s65
    $region71: #{critic_lstm_td3_forward.1} parent=64 // loop_footer_branch
      %64 = sbr.rel target = $region67
    $region72: #{critic_lstm_td3_forward.1} parent=64 // loop_exit
      _
  $region65: #{critic_lstm_td3_forward.1} parent=0 // pred_fallthru
    _
  // Predicated region
  $region88: #{critic_lstm_td3_forward.1} parent=0 // pred_check
    _
  $region89: #{critic_lstm_td3_forward.1} parent=0 // pred_check_branch
    %109 = sbr.rel (0) target = $region91
  $region90: #{critic_lstm_td3_forward.1} parent=0 // pred_region
    %110 = vsyncadd [#allocation6], 1024
  $region91: #{critic_lstm_td3_forward.1} parent=0 // pred_fallthru
    _
  %s111 = scalar_lea.sflag [#allocation6], 1
  %p113 = scmp.lt.u32.totalorder 64, 8
  %p114 = pneg %p113
  // Predicated region
  $region92: #{critic_lstm_td3_forward.1} parent=0 // pred_check
    _
  $region93: #{critic_lstm_td3_forward.1} parent=0 // pred_check_branch
    %116 = sbr.rel (%p113) target = $region95
  $region94: #{critic_lstm_td3_forward.1} parent=0 // pred_region
    %s131 = sand.u32 64, 7
    %p132 = scmp.eq.s32.totalorder %s131, 0
    // Predicated region
    $region107: #{critic_lstm_td3_forward.1} parent=94 // pred_check
      %p133 = pneg %p132
    $region108: #{critic_lstm_td3_forward.1} parent=94 // pred_check_branch
      %135 = sbr.rel (%p133) target = $region110
    $region109: #{critic_lstm_td3_forward.1} parent=94 // pred_region
      loop: start=0, step=1, limit=1
      $region111: #{critic_lstm_td3_forward.1} parent=109 // loop_pre_header
        _
      $region112: #{critic_lstm_td3_forward.1} parent=109 // loop_header
        %s137 = sphi 0, %s141
        %p138 = scmp.ge.s32.totalorder %s137, 1
        %s142 = sphi %s12, %s12
        %s143 = sphi [#allocation4], [#allocation4]
      $region113: #{critic_lstm_td3_forward.1} parent=109 // loop_header_branch
        %140 = sbr.rel (%p138) target = $region117
      $region114: #{critic_lstm_td3_forward.1} parent=109 // loop_body
        %v144 = vld [vmem:[%s142] sm:$0xff]
        %145 = vst [vmem:[%s143] sm:$0xff] %v144
        %v146 = vld [vmem:[%s142 + $0x8] sm:$0xff]
        %147 = vst [vmem:[%s143 + $0x8] sm:$0xff] %v146
        %v148 = vld [vmem:[%s142 + $0x10] sm:$0xff]
        %149 = vst [vmem:[%s143 + $0x10] sm:$0xff] %v148
        %v150 = vld [vmem:[%s142 + $0x18] sm:$0xff]
        %151 = vst [vmem:[%s143 + $0x18] sm:$0xff] %v150
        %v152 = vld [vmem:[%s142 + $0x20] sm:$0xff]
        %153 = vst [vmem:[%s143 + $0x20] sm:$0xff] %v152
        %v154 = vld [vmem:[%s142 + $0x28] sm:$0xff]
        %155 = vst [vmem:[%s143 + $0x28] sm:$0xff] %v154
        %v156 = vld [vmem:[%s142 + $0x30] sm:$0xff]
        %157 = vst [vmem:[%s143 + $0x30] sm:$0xff] %v156
        %v158 = vld [vmem:[%s142 + $0x38] sm:$0xff]
        %159 = vst [vmem:[%s143 + $0x38] sm:$0xff] %v158
      $region115: #{critic_lstm_td3_forward.1} parent=109 // loop_footer
        %s141 = sadd.s32 1, %s137
      $region116: #{critic_lstm_td3_forward.1} parent=109 // loop_footer_branch
        %136 = sbr.rel target = $region112
      $region117: #{critic_lstm_td3_forward.1} parent=109 // loop_exit
        _
    $region110: #{critic_lstm_td3_forward.1} parent=94 // pred_fallthru
      _
    %p160 = pneg %p132
    // Predicated region
    $region118: #{critic_lstm_td3_forward.1} parent=94 // pred_check
      _
    $region119: #{critic_lstm_td3_forward.1} parent=94 // pred_check_branch
      %162 = sbr.rel (%p132) target = $region121
    $region120: #{critic_lstm_td3_forward.1} parent=94 // pred_region
      %s163 = sand.u32 64, 7
    $region121: #{critic_lstm_td3_forward.1} parent=94 // pred_fallthru
      _
  $region95: #{critic_lstm_td3_forward.1} parent=0 // pred_fallthru
    _
  // Predicated region
  $region96: #{critic_lstm_td3_forward.1} parent=0 // pred_check
    %p117 = pneg %p113
  $region97: #{critic_lstm_td3_forward.1} parent=0 // pred_check_branch
    %119 = sbr.rel (%p117) target = $region99
  $region98: #{critic_lstm_td3_forward.1} parent=0 // pred_region
    %s120 = sshllo.u32 0, 64
    loop: start=0, step=1, limit=1
    $region100: #{critic_lstm_td3_forward.1} parent=98 // loop_pre_header
      _
    $region101: #{critic_lstm_td3_forward.1} parent=98 // loop_header
      %s122 = sphi 0, %s126
      %p123 = scmp.ge.s32.totalorder %s122, 1
      %s127 = sphi %s12, %s12
      %s128 = sphi [#allocation4], [#allocation4]
    $region102: #{critic_lstm_td3_forward.1} parent=98 // loop_header_branch
      %125 = sbr.rel (%p123) target = $region106
    $region103: #{critic_lstm_td3_forward.1} parent=98 // loop_body
      %v129 = vld [vmem:[%s127] sm:%s120]
      %130 = vst [vmem:[%s128] sm:%s120] %v129
    $region104: #{critic_lstm_td3_forward.1} parent=98 // loop_footer
      %s126 = sadd.s32 1, %s122
    $region105: #{critic_lstm_td3_forward.1} parent=98 // loop_footer_branch
      %121 = sbr.rel target = $region101
    $region106: #{critic_lstm_td3_forward.1} parent=98 // loop_exit
      _
  $region99: #{critic_lstm_td3_forward.1} parent=0 // pred_fallthru
    _
  // Predicated region
  $region122: #{critic_lstm_td3_forward.1} parent=0 // pred_check
    _
  $region123: #{critic_lstm_td3_forward.1} parent=0 // pred_check_branch
    %166 = sbr.rel (0) target = $region125
  $region124: #{critic_lstm_td3_forward.1} parent=0 // pred_region
    %167 = vsyncadd %s111, 1024
  $region125: #{critic_lstm_td3_forward.1} parent=0 // pred_fallthru
    _
  %s168 = scalar_lea.sflag [#allocation6], 2
  %p170 = scmp.lt.u32.totalorder 64, 8
  %p171 = pneg %p170
  // Predicated region
  $region126: #{critic_lstm_td3_forward.1} parent=0 // pred_check
    _
  $region127: #{critic_lstm_td3_forward.1} parent=0 // pred_check_branch
    %173 = sbr.rel (%p170) target = $region129
  $region128: #{critic_lstm_td3_forward.1} parent=0 // pred_region
    %s188 = sand.u32 64, 7
    %p189 = scmp.eq.s32.totalorder %s188, 0
    // Predicated region
    $region141: #{critic_lstm_td3_forward.1} parent=128 // pred_check
      %p190 = pneg %p189
    $region142: #{critic_lstm_td3_forward.1} parent=128 // pred_check_branch
      %192 = sbr.rel (%p190) target = $region144
    $region143: #{critic_lstm_td3_forward.1} parent=128 // pred_region
      loop: start=0, step=1, limit=1
      $region145: #{critic_lstm_td3_forward.1} parent=143 // loop_pre_header
        _
      $region146: #{critic_lstm_td3_forward.1} parent=143 // loop_header
        %s194 = sphi 0, %s198
        %p195 = scmp.ge.s32.totalorder %s194, 1
        %s199 = sphi %s13, %s13
        %s200 = sphi [#allocation5], [#allocation5]
      $region147: #{critic_lstm_td3_forward.1} parent=143 // loop_header_branch
        %197 = sbr.rel (%p195) target = $region151
      $region148: #{critic_lstm_td3_forward.1} parent=143 // loop_body
        %v201 = vld [vmem:[%s199] sm:$0xff]
        %202 = vst [vmem:[%s200] sm:$0xff] %v201
        %v203 = vld [vmem:[%s199 + $0x8] sm:$0xff]
        %204 = vst [vmem:[%s200 + $0x8] sm:$0xff] %v203
        %v205 = vld [vmem:[%s199 + $0x10] sm:$0xff]
        %206 = vst [vmem:[%s200 + $0x10] sm:$0xff] %v205
        %v207 = vld [vmem:[%s199 + $0x18] sm:$0xff]
        %208 = vst [vmem:[%s200 + $0x18] sm:$0xff] %v207
        %v209 = vld [vmem:[%s199 + $0x20] sm:$0xff]
        %210 = vst [vmem:[%s200 + $0x20] sm:$0xff] %v209
        %v211 = vld [vmem:[%s199 + $0x28] sm:$0xff]
        %212 = vst [vmem:[%s200 + $0x28] sm:$0xff] %v211
        %v213 = vld [vmem:[%s199 + $0x30] sm:$0xff]
        %214 = vst [vmem:[%s200 + $0x30] sm:$0xff] %v213
        %v215 = vld [vmem:[%s199 + $0x38] sm:$0xff]
        %216 = vst [vmem:[%s200 + $0x38] sm:$0xff] %v215
      $region149: #{critic_lstm_td3_forward.1} parent=143 // loop_footer
        %s198 = sadd.s32 1, %s194
      $region150: #{critic_lstm_td3_forward.1} parent=143 // loop_footer_branch
        %193 = sbr.rel target = $region146
      $region151: #{critic_lstm_td3_forward.1} parent=143 // loop_exit
        _
    $region144: #{critic_lstm_td3_forward.1} parent=128 // pred_fallthru
      _
    %p217 = pneg %p189
    // Predicated region
    $region152: #{critic_lstm_td3_forward.1} parent=128 // pred_check
      _
    $region153: #{critic_lstm_td3_forward.1} parent=128 // pred_check_branch
      %219 = sbr.rel (%p189) target = $region155
    $region154: #{critic_lstm_td3_forward.1} parent=128 // pred_region
      %s220 = sand.u32 64, 7
    $region155: #{critic_lstm_td3_forward.1} parent=128 // pred_fallthru
      _
  $region129: #{critic_lstm_td3_forward.1} parent=0 // pred_fallthru
    _
  // Predicated region
  $region130: #{critic_lstm_td3_forward.1} parent=0 // pred_check
    %p174 = pneg %p170
  $region131: #{critic_lstm_td3_forward.1} parent=0 // pred_check_branch
    %176 = sbr.rel (%p174) target = $region133
  $region132: #{critic_lstm_td3_forward.1} parent=0 // pred_region
    %s177 = sshllo.u32 0, 64
    loop: start=0, step=1, limit=1
    $region134: #{critic_lstm_td3_forward.1} parent=132 // loop_pre_header
      _
    $region135: #{critic_lstm_td3_forward.1} parent=132 // loop_header
      %s179 = sphi 0, %s183
      %p180 = scmp.ge.s32.totalorder %s179, 1
      %s184 = sphi %s13, %s13
      %s185 = sphi [#allocation5], [#allocation5]
    $region136: #{critic_lstm_td3_forward.1} parent=132 // loop_header_branch
      %182 = sbr.rel (%p180) target = $region140
    $region137: #{critic_lstm_td3_forward.1} parent=132 // loop_body
      %v186 = vld [vmem:[%s184] sm:%s177]
      %187 = vst [vmem:[%s185] sm:%s177] %v186
    $region138: #{critic_lstm_td3_forward.1} parent=132 // loop_footer
      %s183 = sadd.s32 1, %s179
    $region139: #{critic_lstm_td3_forward.1} parent=132 // loop_footer_branch
      %178 = sbr.rel target = $region135
    $region140: #{critic_lstm_td3_forward.1} parent=132 // loop_exit
      _
  $region133: #{critic_lstm_td3_forward.1} parent=0 // pred_fallthru
    _
  // Predicated region
  $region156: #{critic_lstm_td3_forward.1} parent=0 // pred_check
    _
  $region157: #{critic_lstm_td3_forward.1} parent=0 // pred_check_branch
    %223 = sbr.rel (0) target = $region159
  $region158: #{critic_lstm_td3_forward.1} parent=0 // pred_region
    %224 = vsyncadd %s168, 1024
  $region159: #{critic_lstm_td3_forward.1} parent=0 // pred_fallthru
    _
  %v225 = vld [vmem:[%s0] sm:$0xff]
  %v226 = vld [vmem:[%s0 + $0x8] sm:$0xff]
  %v227 = vld [vmem:[%s1] sm:$0xf]
  %v228 = vld [vmem:[%s1 + $0x4] sm:$0xf]
  %v229 = vld [vmem:[%s1 + $0x8] sm:$0xf]
  %v230 = vld [vmem:[%s1 + $0xc] sm:$0xf]
  %v231 = vld [vmem:[%s1 + $0x10] sm:$0xf]
  %v232 = vld [vmem:[%s1 + $0x14] sm:$0xf]
  %v233 = vld [vmem:[%s1 + $0x18] sm:$0xf]
  %v234 = vld [vmem:[%s1 + $0x1c] sm:$0xf]
  %v235 = vld [vmem:[%s1 + $0x20] sm:$0xf]
  %v236 = vld [vmem:[%s1 + $0x24] sm:$0xf]
  %v237 = vld [vmem:[%s1 + $0x28] sm:$0xf]
  %v238 = vld [vmem:[%s1 + $0x2c] sm:$0xf]
  %v239 = vld [vmem:[%s1 + $0x30] sm:$0xf]
  %v240 = vld [vmem:[%s1 + $0x34] sm:$0xf]
  %v241 = vld [vmem:[%s1 + $0x38] sm:$0xf]
  %v242 = vld [vmem:[%s1 + $0x3c] sm:$0xf]
  %v243 = vld [vmem:[%s3] sm:$0xf]
  %v244 = vld [vmem:[%s3 + $0x4] sm:$0xf]
  %v245 = vld [vmem:[%s3 + $0x8] sm:$0x3]
  %v246 = vld [vmem:[%s4] sm:$0x1]
  %v248 = vlaneseq
  %v249 = vshrl.u32 %v248, 7
  %v250 = vsub.s32 0, %v249
  %v251 = vrot.slane %v246, %v250
  %v269 = vunpack.c.l.b16 %v227
  %v270 = vunpack.c.l.b16 %v228
  %v271 = vunpack.c.l.b16 %v229
  %v272 = vunpack.c.l.b16 %v230
  %v273 = vunpack.c.l.b16 %v231
  %v274 = vunpack.c.l.b16 %v232
  %v275 = vunpack.c.l.b16 %v233
  %v276 = vunpack.c.l.b16 %v234
  %v277 = vunpack.c.l.b16 %v235
  %v278 = vunpack.c.l.b16 %v236
  %v279 = vunpack.c.l.b16 %v237
  %v280 = vunpack.c.l.b16 %v238
  %v281 = vunpack.c.l.b16 %v239
  %v282 = vunpack.c.l.b16 %v240
  %v283 = vunpack.c.l.b16 %v241
  %v284 = vunpack.c.l.b16 %v242
  %v285 = vpack.c.b16 %v270, %v269
  %v286 = vpack.c.b16 %v272, %v271
  %v287 = vpack.c.b16 %v274, %v273
  %v288 = vpack.c.b16 %v276, %v275
  %v289 = vpack.c.b16 %v278, %v277
  %v290 = vpack.c.b16 %v280, %v279
  %v291 = vpack.c.b16 %v282, %v281
  %v292 = vpack.c.b16 %v284, %v283
  %v296 = vunpack.c.l.b16 %v243
  %v297 = vunpack.c.l.b16 %v244
  %v298 = vunpack.c.l.b16 %v245
  %v299 = vpack.c.b16 %v297, %v296
  %v300 = vpack.c.b16 %v298, %v298
  %vm302 = vcmask 162816
  %v304 = vsel %vm302, %v285, 0
  %v307 = vsel %vm302, %v286, 0
  %v310 = vsel %vm302, %v287, 0
  %v313 = vsel %vm302, %v288, 0
  %v316 = vsel %vm302, %v289, 0
  %v319 = vsel %vm302, %v290, 0
  %v322 = vsel %vm302, %v291, 0
  %v325 = vsel %vm302, %v292, 0
  %vm327 = vcmask 1041408
  %v329 = vsel %vm327, %v300, 0
  %331 = vmatprep.subr.bf16.mxu0 0
  %332 = vmatpush1.bf16.msra.mxu0 %v299
  %333 = vmatprep.subr.bf16.mxu0 0
  %334 = vmatpush1.bf16.msra.mxu0 %v329
  %335 = vmatprep.subr.bf16.mxu0 0
  %336 = vmatpush1.bf16.msra.mxu0 0
  %337 = vmatprep.subr.bf16.mxu0 0
  %338 = vmatpush1.bf16.msra.mxu0 0
  %339 = vmatprep.subr.bf16.mxu0 0
  %340 = vmatpush1.bf16.msra.mxu0 0
  %341 = vmatprep.subr.bf16.mxu0 0
  %342 = vmatpush1.bf16.msra.mxu0 0
  %343 = vmatprep.subr.bf16.mxu0 0
  %344 = vmatpush1.bf16.msra.mxu0 0
  %345 = vmatprep.subr.bf16.mxu0 0
  %346 = vmatpush1.bf16.msra.mxu0 0
  %347 = vmatprep.subr.bf16.mxu0 0
  %348 = vmatpush1.bf16.msra.mxu0 0
  %349 = vmatprep.subr.bf16.mxu0 0
  %350 = vmatpush1.bf16.msra.mxu0 0
  %351 = vmatprep.subr.bf16.mxu0 0
  %352 = vmatpush1.bf16.msra.mxu0 0
  %353 = vmatprep.subr.bf16.mxu0 0
  %354 = vmatpush1.bf16.msra.mxu0 0
  %355 = vmatprep.subr.bf16.mxu0 0
  %356 = vmatpush1.bf16.msra.mxu0 0
  %357 = vmatprep.subr.bf16.mxu0 0
  %358 = vmatpush1.bf16.msra.mxu0 0
  %359 = vmatprep.subr.bf16.mxu0 0
  %360 = vmatpush1.bf16.msra.mxu0 0
  %361 = vmatprep.subr.bf16.mxu0 0
  %362 = vmatpush1.bf16.msra.mxu0 0
  %363 = vmatprep.mubr.bf16.mxu0 0
  %364 = vmatmul.mubr.bf16.gmra.mrb[0].mxu0 %v304
  %v365 = vpop.f32.mrb[0].mxu0
  %v366 = vadd.f32 %v251, %v365
  %v367 = vpop.f32.mrb[0].mxu0
  %v368 = vpop.f32.mrb[0].mxu0
  %v369 = vadd.f32 %v251, %v368
  %v370 = vpop.f32.mrb[0].mxu0
  %371 = vmatprep.mubr.bf16.mxu0 0
  %372 = vmatmul.mubr.bf16.gmra.mrb[0].mxu0 %v307
  %v373 = vpop.f32.mrb[0].mxu0
  %v374 = vadd.f32 %v251, %v373
  %v375 = vpop.f32.mrb[0].mxu0
  %v376 = vpop.f32.mrb[0].mxu0
  %v377 = vadd.f32 %v251, %v376
  %v378 = vpop.f32.mrb[0].mxu0
  %379 = vmatprep.mubr.bf16.mxu0 0
  %380 = vmatmul.mubr.bf16.gmra.mrb[0].mxu0 %v310
  %v381 = vpop.f32.mrb[0].mxu0
  %v382 = vadd.f32 %v251, %v381
  %v383 = vpop.f32.mrb[0].mxu0
  %v384 = vpop.f32.mrb[0].mxu0
  %v385 = vadd.f32 %v251, %v384
  %v386 = vpop.f32.mrb[0].mxu0
  %387 = vmatprep.mubr.bf16.mxu0 0
  %388 = vmatmul.mubr.bf16.gmra.mrb[0].mxu0 %v313
  %v389 = vpop.f32.mrb[0].mxu0
  %v390 = vadd.f32 %v251, %v389
  %v391 = vpop.f32.mrb[0].mxu0
  %v392 = vpop.f32.mrb[0].mxu0
  %v393 = vadd.f32 %v251, %v392
  %v394 = vpop.f32.mrb[0].mxu0
  %395 = vmatprep.mubr.bf16.mxu0 0
  %396 = vmatmul.mubr.bf16.gmra.mrb[0].mxu0 %v316
  %v397 = vpop.f32.mrb[0].mxu0
  %v398 = vadd.f32 %v251, %v397
  %v399 = vpop.f32.mrb[0].mxu0
  %v400 = vpop.f32.mrb[0].mxu0
  %v401 = vadd.f32 %v251, %v400
  %v402 = vpop.f32.mrb[0].mxu0
  %403 = vmatprep.mubr.bf16.mxu0 0
  %404 = vmatmul.mubr.bf16.gmra.mrb[0].mxu0 %v319
  %v405 = vpop.f32.mrb[0].mxu0
  %v406 = vadd.f32 %v251, %v405
  %v407 = vpop.f32.mrb[0].mxu0
  %v408 = vpop.f32.mrb[0].mxu0
  %v409 = vadd.f32 %v251, %v408
  %v410 = vpop.f32.mrb[0].mxu0
  %411 = vmatprep.mubr.bf16.mxu0 0
  %412 = vmatmul.mubr.bf16.gmra.mrb[0].mxu0 %v322
  %v413 = vpop.f32.mrb[0].mxu0
  %v414 = vadd.f32 %v251, %v413
  %v415 = vpop.f32.mrb[0].mxu0
  %v416 = vpop.f32.mrb[0].mxu0
  %v417 = vadd.f32 %v251, %v416
  %v418 = vpop.f32.mrb[0].mxu0
  %419 = vmatprep.mubr.bf16.mxu0 0
  %420 = vmatmul.mubr.bf16.gmra.mrb[0].mxu0 %v325
  %v421 = vpop.f32.mrb[0].mxu0
  %v422 = vadd.f32 %v251, %v421
  %v423 = vpop.f32.mrb[0].mxu0
  %v424 = vpop.f32.mrb[0].mxu0
  %v425 = vadd.f32 %v251, %v424
  %v426 = vpop.f32.mrb[0].mxu0
  %427 = vdwg.mxu0
  %v428 = vmax.f32 %v366, 0.0
  %v429 = vmax.f32 %v369, 0.0
  %v430 = vmax.f32 %v374, 0.0
  %v431 = vmax.f32 %v377, 0.0
  %v432 = vmax.f32 %v382, 0.0
  %v433 = vmax.f32 %v385, 0.0
  %v434 = vmax.f32 %v390, 0.0
  %v435 = vmax.f32 %v393, 0.0
  %v436 = vmax.f32 %v398, 0.0
  %v437 = vmax.f32 %v401, 0.0
  %v438 = vmax.f32 %v406, 0.0
  %v439 = vmax.f32 %v409, 0.0
  %v440 = vmax.f32 %v414, 0.0
  %v441 = vmax.f32 %v417, 0.0
  %v442 = vmax.f32 %v422, 0.0
  %v443 = vmax.f32 %v425, 0.0
  %v444 = vpack.c.bf16 %v429, %v428
  %v445 = vpack.c.bf16 %v431, %v430
  %v446 = vpack.c.bf16 %v433, %v432
  %v447 = vpack.c.bf16 %v435, %v434
  %v448 = vpack.c.bf16 %v437, %v436
  %v449 = vpack.c.bf16 %v439, %v438
  %v450 = vpack.c.bf16 %v441, %v440
  %v451 = vpack.c.bf16 %v443, %v442
  %v452 = vld [vmem:[%s5] sm:$0xff]
  %v453 = vld [vmem:[%s5 + $0x8] sm:$0xff]
  %v454 = vld [vmem:[%s5 + $0x10] sm:$0xff]
  %v455 = vld [vmem:[%s5 + $0x18] sm:$0xff]
  %v456 = vld [vmem:[%s5 + $0x20] sm:$0xff]
  %v457 = vld [vmem:[%s5 + $0x28] sm:$0xff]
  %v458 = vld [vmem:[%s5 + $0x30] sm:$0xff]
  %v459 = vld [vmem:[%s5 + $0x38] sm:$0xff]
  %v460 = vld [vmem:[%s5 + $0x40] sm:$0xff]
  %v461 = vld [vmem:[%s5 + $0x48] sm:$0xff]
  %v462 = vld [vmem:[%s5 + $0x50] sm:$0xff]
  %v463 = vld [vmem:[%s5 + $0x58] sm:$0xff]
  %v464 = vld [vmem:[%s5 + $0x60] sm:$0xff]
  %v465 = vld [vmem:[%s5 + $0x68] sm:$0xff]
  %v466 = vld [vmem:[%s5 + $0x70] sm:$0xff]
  %v467 = vld [vmem:[%s5 + $0x78] sm:$0xff]
  %v468 = vld [vmem:[%s5 + $0x80] sm:$0xff]
  %v469 = vld [vmem:[%s5 + $0x88] sm:$0xff]
  %v470 = vld [vmem:[%s5 + $0x90] sm:$0xff]
  %v471 = vld [vmem:[%s5 + $0x98] sm:$0xff]
  %v472 = vld [vmem:[%s5 + $0xa0] sm:$0xff]
  %v473 = vld [vmem:[%s5 + $0xa8] sm:$0xff]
  %v474 = vld [vmem:[%s5 + $0xb0] sm:$0xff]
  %v475 = vld [vmem:[%s5 + $0xb8] sm:$0xff]
  %v476 = vld [vmem:[%s5 + $0xc0] sm:$0xff]
  %v477 = vld [vmem:[%s5 + $0xc8] sm:$0xff]
  %v478 = vld [vmem:[%s5 + $0xd0] sm:$0xff]
  %v479 = vld [vmem:[%s5 + $0xd8] sm:$0xff]
  %v480 = vld [vmem:[%s5 + $0xe0] sm:$0xff]
  %v481 = vld [vmem:[%s5 + $0xe8] sm:$0xff]
  %v482 = vld [vmem:[%s5 + $0xf0] sm:$0xff]
  %v483 = vld [vmem:[%s5 + $0xf8] sm:$0xff]
  %v484 = vld [vmem:[%s7] sm:$0xf]
  %v486 = vlaneseq
  %v487 = vshrl.u32 %v486, 7
  %v488 = vsub.s32 0, %v487
  %v489 = vrot.slane %v484, %v488
  %v490 = vlaneseq
  %v491 = vshrl.u32 %v490, 7
  %v492 = vsub.s32 1, %v491
  %v493 = vrot.slane %v484, %v492
  %v494 = vlaneseq
  %v495 = vshrl.u32 %v494, 7
  %v496 = vsub.s32 2, %v495
  %v497 = vrot.slane %v484, %v496
  %v498 = vlaneseq
  %v499 = vshrl.u32 %v498, 7
  %v500 = vsub.s32 3, %v499
  %v501 = vrot.slane %v484, %v500
  %v538 = vunpack.c.l.b16 %v452
  %v539 = vunpack.c.h.b16 %v452
  %v540 = vunpack.c.l.b16 %v453
  %v541 = vunpack.c.h.b16 %v453
  %v542 = vunpack.c.l.b16 %v454
  %v543 = vunpack.c.h.b16 %v454
  %v544 = vunpack.c.l.b16 %v455
  %v545 = vunpack.c.h.b16 %v455
  %v546 = vunpack.c.l.b16 %v456
  %v547 = vunpack.c.h.b16 %v456
  %v548 = vunpack.c.l.b16 %v457
  %v549 = vunpack.c.h.b16 %v457
  %v550 = vunpack.c.l.b16 %v458
  %v551 = vunpack.c.h.b16 %v458
  %v552 = vunpack.c.l.b16 %v459
  %v553 = vunpack.c.h.b16 %v459
  %v554 = vunpack.c.l.b16 %v460
  %v555 = vunpack.c.h.b16 %v460
  %v556 = vunpack.c.l.b16 %v461
  %v557 = vunpack.c.h.b16 %v461
  %v558 = vunpack.c.l.b16 %v462
  %v559 = vunpack.c.h.b16 %v462
  %v560 = vunpack.c.l.b16 %v463
  %v561 = vunpack.c.h.b16 %v463
  %v562 = vunpack.c.l.b16 %v464
  %v563 = vunpack.c.h.b16 %v464
  %v564 = vunpack.c.l.b16 %v465
  %v565 = vunpack.c.h.b16 %v465
  %v566 = vunpack.c.l.b16 %v466
  %v567 = vunpack.c.h.b16 %v466
  %v568 = vunpack.c.l.b16 %v467
  %v569 = vunpack.c.h.b16 %v467
  %v570 = vunpack.c.l.b16 %v468
  %v571 = vunpack.c.h.b16 %v468
  %v572 = vunpack.c.l.b16 %v469
  %v573 = vunpack.c.h.b16 %v469
  %v574 = vunpack.c.l.b16 %v470
  %v575 = vunpack.c.h.b16 %v470
  %v576 = vunpack.c.l.b16 %v471
  %v577 = vunpack.c.h.b16 %v471
  %v578 = vunpack.c.l.b16 %v472
  %v579 = vunpack.c.h.b16 %v472
  %v580 = vunpack.c.l.b16 %v473
  %v581 = vunpack.c.h.b16 %v473
  %v582 = vunpack.c.l.b16 %v474
  %v583 = vunpack.c.h.b16 %v474
  %v584 = vunpack.c.l.b16 %v475
  %v585 = vunpack.c.h.b16 %v475
  %v586 = vunpack.c.l.b16 %v476
  %v587 = vunpack.c.h.b16 %v476
  %v588 = vunpack.c.l.b16 %v477
  %v589 = vunpack.c.h.b16 %v477
  %v590 = vunpack.c.l.b16 %v478
  %v591 = vunpack.c.h.b16 %v478
  %v592 = vunpack.c.l.b16 %v479
  %v593 = vunpack.c.h.b16 %v479
  %v594 = vunpack.c.l.b16 %v480
  %v595 = vunpack.c.h.b16 %v480
  %v596 = vunpack.c.l.b16 %v481
  %v597 = vunpack.c.h.b16 %v481
  %v598 = vunpack.c.l.b16 %v482
  %v599 = vunpack.c.h.b16 %v482
  %v600 = vunpack.c.l.b16 %v483
  %v601 = vunpack.c.h.b16 %v483
  %v602 = vpack.c.b16 %v542, %v538
  %v603 = vpack.c.b16 %v543, %v539
  %v604 = vpack.c.b16 %v544, %v540
  %v605 = vpack.c.b16 %v545, %v541
  %v606 = vpack.c.b16 %v550, %v546
  %v607 = vpack.c.b16 %v551, %v547
  %v608 = vpack.c.b16 %v552, %v548
  %v609 = vpack.c.b16 %v553, %v549
  %v610 = vpack.c.b16 %v558, %v554
  %v611 = vpack.c.b16 %v559, %v555
  %v612 = vpack.c.b16 %v560, %v556
  %v613 = vpack.c.b16 %v561, %v557
  %v614 = vpack.c.b16 %v566, %v562
  %v615 = vpack.c.b16 %v567, %v563
  %v616 = vpack.c.b16 %v568, %v564
  %v617 = vpack.c.b16 %v569, %v565
  %v618 = vpack.c.b16 %v574, %v570
  %v619 = vpack.c.b16 %v575, %v571
  %v620 = vpack.c.b16 %v576, %v572
  %v621 = vpack.c.b16 %v577, %v573
  %v622 = vpack.c.b16 %v582, %v578
  %v623 = vpack.c.b16 %v583, %v579
  %v624 = vpack.c.b16 %v584, %v580
  %v625 = vpack.c.b16 %v585, %v581
  %v626 = vpack.c.b16 %v590, %v586
  %v627 = vpack.c.b16 %v591, %v587
  %v628 = vpack.c.b16 %v592, %v588
  %v629 = vpack.c.b16 %v593, %v589
  %v630 = vpack.c.b16 %v598, %v594
  %v631 = vpack.c.b16 %v599, %v595
  %v632 = vpack.c.b16 %v600, %v596
  %v633 = vpack.c.b16 %v601, %v597
  %666 = vmatprep.subr.bf16.mxu0 %v603
  %667 = vmatpush1.bf16.msra.mxu0 %v602
  %668 = vmatprep.subr.bf16.mxu0 %v607
  %669 = vmatpush1.bf16.msra.mxu0 %v606
  %670 = vmatprep.subr.bf16.mxu0 %v611
  %671 = vmatpush1.bf16.msra.mxu0 %v610
  %672 = vmatprep.subr.bf16.mxu0 %v615
  %673 = vmatpush1.bf16.msra.mxu0 %v614
  %674 = vmatprep.subr.bf16.mxu0 %v619
  %675 = vmatpush1.bf16.msra.mxu0 %v618
  %676 = vmatprep.subr.bf16.mxu0 %v623
  %677 = vmatpush1.bf16.msra.mxu0 %v622
  %678 = vmatprep.subr.bf16.mxu0 %v627
  %679 = vmatpush1.bf16.msra.mxu0 %v626
  %680 = vmatprep.subr.bf16.mxu0 %v631
  %681 = vmatpush1.bf16.msra.mxu0 %v630
  %682 = vmatprep.subr.bf16.mxu0 0
  %683 = vmatpush1.bf16.msra.mxu0 0
  %684 = vmatprep.subr.bf16.mxu0 0
  %685 = vmatpush1.bf16.msra.mxu0 0
  %686 = vmatprep.subr.bf16.mxu0 0
  %687 = vmatpush1.bf16.msra.mxu0 0
  %688 = vmatprep.subr.bf16.mxu0 0
  %689 = vmatpush1.bf16.msra.mxu0 0
  %690 = vmatprep.subr.bf16.mxu0 0
  %691 = vmatpush1.bf16.msra.mxu0 0
  %692 = vmatprep.subr.bf16.mxu0 0
  %693 = vmatpush1.bf16.msra.mxu0 0
  %694 = vmatprep.subr.bf16.mxu0 0
  %695 = vmatpush1.bf16.msra.mxu0 0
  %696 = vmatprep.subr.bf16.mxu0 0
  %697 = vmatpush1.bf16.msra.mxu0 0
  %698 = vmatprep.mubr.bf16.mxu0 0
  %699 = vmatmul.mubr.bf16.gmra.mrb[0].mxu0 %v444
  %v700 = vpop.f32.mrb[0].mxu0
  %v701 = vadd.f32 %v489, %v700
  %v702 = vpop.f32.mrb[0].mxu0
  %v703 = vadd.f32 %v493, %v702
  %v704 = vpop.f32.mrb[0].mxu0
  %v705 = vadd.f32 %v489, %v704
  %v706 = vpop.f32.mrb[0].mxu0
  %v707 = vadd.f32 %v493, %v706
  %708 = vmatprep.mubr.bf16.mxu0 0
  %709 = vmatmul.mubr.bf16.gmra.mrb[0].mxu0 %v445
  %v710 = vpop.f32.mrb[0].mxu0
  %v711 = vadd.f32 %v489, %v710
  %v712 = vpop.f32.mrb[0].mxu0
  %v713 = vadd.f32 %v493, %v712
  %v714 = vpop.f32.mrb[0].mxu0
  %v715 = vadd.f32 %v489, %v714
  %v716 = vpop.f32.mrb[0].mxu0
  %v717 = vadd.f32 %v493, %v716
  %718 = vmatprep.mubr.bf16.mxu0 0
  %719 = vmatmul.mubr.bf16.gmra.mrb[0].mxu0 %v446
  %v720 = vpop.f32.mrb[0].mxu0
  %v721 = vadd.f32 %v489, %v720
  %v722 = vpop.f32.mrb[0].mxu0
  %v723 = vadd.f32 %v493, %v722
  %v724 = vpop.f32.mrb[0].mxu0
  %v725 = vadd.f32 %v489, %v724
  %v726 = vpop.f32.mrb[0].mxu0
  %v727 = vadd.f32 %v493, %v726
  %728 = vmatprep.mubr.bf16.mxu0 0
  %729 = vmatmul.mubr.bf16.gmra.mrb[0].mxu0 %v447
  %v730 = vpop.f32.mrb[0].mxu0
  %v731 = vadd.f32 %v489, %v730
  %v732 = vpop.f32.mrb[0].mxu0
  %v733 = vadd.f32 %v493, %v732
  %v734 = vpop.f32.mrb[0].mxu0
  %v735 = vadd.f32 %v489, %v734
  %v736 = vpop.f32.mrb[0].mxu0
  %v737 = vadd.f32 %v493, %v736
  %738 = vmatprep.mubr.bf16.mxu0 0
  %739 = vmatmul.mubr.bf16.gmra.mrb[0].mxu0 %v448
  %v740 = vpop.f32.mrb[0].mxu0
  %v741 = vadd.f32 %v489, %v740
  %v742 = vpop.f32.mrb[0].mxu0
  %v743 = vadd.f32 %v493, %v742
  %v744 = vpop.f32.mrb[0].mxu0
  %v745 = vadd.f32 %v489, %v744
  %v746 = vpop.f32.mrb[0].mxu0
  %v747 = vadd.f32 %v493, %v746
  %748 = vmatprep.mubr.bf16.mxu0 0
  %749 = vmatmul.mubr.bf16.gmra.mrb[0].mxu0 %v449
  %v750 = vpop.f32.mrb[0].mxu0
  %v751 = vadd.f32 %v489, %v750
  %v752 = vpop.f32.mrb[0].mxu0
  %v753 = vadd.f32 %v493, %v752
  %v754 = vpop.f32.mrb[0].mxu0
  %v755 = vadd.f32 %v489, %v754
  %v756 = vpop.f32.mrb[0].mxu0
  %v757 = vadd.f32 %v493, %v756
  %758 = vmatprep.mubr.bf16.mxu0 0
  %759 = vmatmul.mubr.bf16.gmra.mrb[0].mxu0 %v450
  %v760 = vpop.f32.mrb[0].mxu0
  %v761 = vadd.f32 %v489, %v760
  %v762 = vpop.f32.mrb[0].mxu0
  %v763 = vadd.f32 %v493, %v762
  %v764 = vpop.f32.mrb[0].mxu0
  %v765 = vadd.f32 %v489, %v764
  %v766 = vpop.f32.mrb[0].mxu0
  %v767 = vadd.f32 %v493, %v766
  %768 = vmatprep.mubr.bf16.mxu0 0
  %769 = vmatmul.mubr.bf16.gmra.mrb[0].mxu0 %v451
  %v770 = vpop.f32.mrb[0].mxu0
  %v771 = vadd.f32 %v489, %v770
  %v772 = vpop.f32.mrb[0].mxu0
  %v773 = vadd.f32 %v493, %v772
  %v774 = vpop.f32.mrb[0].mxu0
  %v775 = vadd.f32 %v489, %v774
  %v776 = vpop.f32.mrb[0].mxu0
  %v777 = vadd.f32 %v493, %v776
  %778 = vdwg.mxu0
  %779 = vmatprep.subr.bf16.mxu0 %v605
  %780 = vmatpush1.bf16.msra.mxu0 %v604
  %781 = vmatprep.subr.bf16.mxu0 %v609
  %782 = vmatpush1.bf16.msra.mxu0 %v608
  %783 = vmatprep.subr.bf16.mxu0 %v613
  %784 = vmatpush1.bf16.msra.mxu0 %v612
  %785 = vmatprep.subr.bf16.mxu0 %v617
  %786 = vmatpush1.bf16.msra.mxu0 %v616
  %787 = vmatprep.subr.bf16.mxu0 %v621
  %788 = vmatpush1.bf16.msra.mxu0 %v620
  %789 = vmatprep.subr.bf16.mxu0 %v625
  %790 = vmatpush1.bf16.msra.mxu0 %v624
  %791 = vmatprep.subr.bf16.mxu0 %v629
  %792 = vmatpush1.bf16.msra.mxu0 %v628
  %793 = vmatprep.subr.bf16.mxu0 %v633
  %794 = vmatpush1.bf16.msra.mxu0 %v632
  %795 = vmatprep.subr.bf16.mxu0 0
  %796 = vmatpush1.bf16.msra.mxu0 0
  %797 = vmatprep.subr.bf16.mxu0 0
  %798 = vmatpush1.bf16.msra.mxu0 0
  %799 = vmatprep.subr.bf16.mxu0 0
  %800 = vmatpush1.bf16.msra.mxu0 0
  %801 = vmatprep.subr.bf16.mxu0 0
  %802 = vmatpush1.bf16.msra.mxu0 0
  %803 = vmatprep.subr.bf16.mxu0 0
  %804 = vmatpush1.bf16.msra.mxu0 0
  %805 = vmatprep.subr.bf16.mxu0 0
  %806 = vmatpush1.bf16.msra.mxu0 0
  %807 = vmatprep.subr.bf16.mxu0 0
  %808 = vmatpush1.bf16.msra.mxu0 0
  %809 = vmatprep.subr.bf16.mxu0 0
  %810 = vmatpush1.bf16.msra.mxu0 0
  %811 = vmatprep.mubr.bf16.mxu0 0
  %812 = vmatmul.mubr.bf16.gmra.mrb[0].mxu0 %v444
  %v813 = vpop.f32.mrb[0].mxu0
  %v814 = vadd.f32 %v497, %v813
  %v815 = vpop.f32.mrb[0].mxu0
  %v816 = vadd.f32 %v501, %v815
  %v817 = vpop.f32.mrb[0].mxu0
  %v818 = vadd.f32 %v497, %v817
  %v819 = vpop.f32.mrb[0].mxu0
  %v820 = vadd.f32 %v501, %v819
  %821 = vmatprep.mubr.bf16.mxu0 0
  %822 = vmatmul.mubr.bf16.gmra.mrb[0].mxu0 %v445
  %v823 = vpop.f32.mrb[0].mxu0
  %v824 = vadd.f32 %v497, %v823
  %v825 = vpop.f32.mrb[0].mxu0
  %v826 = vadd.f32 %v501, %v825
  %v827 = vpop.f32.mrb[0].mxu0
  %v828 = vadd.f32 %v497, %v827
  %v829 = vpop.f32.mrb[0].mxu0
  %v830 = vadd.f32 %v501, %v829
  %831 = vmatprep.mubr.bf16.mxu0 0
  %832 = vmatmul.mubr.bf16.gmra.mrb[0].mxu0 %v446
  %v833 = vpop.f32.mrb[0].mxu0
  %v834 = vadd.f32 %v497, %v833
  %v835 = vpop.f32.mrb[0].mxu0
  %v836 = vadd.f32 %v501, %v835
  %v837 = vpop.f32.mrb[0].mxu0
  %v838 = vadd.f32 %v497, %v837
  %v839 = vpop.f32.mrb[0].mxu0
  %v840 = vadd.f32 %v501, %v839
  %841 = vmatprep.mubr.bf16.mxu0 0
  %842 = vmatmul.mubr.bf16.gmra.mrb[0].mxu0 %v447
  %v843 = vpop.f32.mrb[0].mxu0
  %v844 = vadd.f32 %v497, %v843
  %v845 = vpop.f32.mrb[0].mxu0
  %v846 = vadd.f32 %v501, %v845
  %v847 = vpop.f32.mrb[0].mxu0
  %v848 = vadd.f32 %v497, %v847
  %v849 = vpop.f32.mrb[0].mxu0
  %v850 = vadd.f32 %v501, %v849
  %851 = vmatprep.mubr.bf16.mxu0 0
  %852 = vmatmul.mubr.bf16.gmra.mrb[0].mxu0 %v448
  %v853 = vpop.f32.mrb[0].mxu0
  %v854 = vadd.f32 %v497, %v853
  %v855 = vpop.f32.mrb[0].mxu0
  %v856 = vadd.f32 %v501, %v855
  %v857 = vpop.f32.mrb[0].mxu0
  %v858 = vadd.f32 %v497, %v857
  %v859 = vpop.f32.mrb[0].mxu0
  %v860 = vadd.f32 %v501, %v859
  %861 = vmatprep.mubr.bf16.mxu0 0
  %862 = vmatmul.mubr.bf16.gmra.mrb[0].mxu0 %v449
  %v863 = vpop.f32.mrb[0].mxu0
  %v864 = vadd.f32 %v497, %v863
  %v865 = vpop.f32.mrb[0].mxu0
  %v866 = vadd.f32 %v501, %v865
  %v867 = vpop.f32.mrb[0].mxu0
  %v868 = vadd.f32 %v497, %v867
  %v869 = vpop.f32.mrb[0].mxu0
  %v870 = vadd.f32 %v501, %v869
  %871 = vmatprep.mubr.bf16.mxu0 0
  %872 = vmatmul.mubr.bf16.gmra.mrb[0].mxu0 %v450
  %v873 = vpop.f32.mrb[0].mxu0
  %v874 = vadd.f32 %v497, %v873
  %v875 = vpop.f32.mrb[0].mxu0
  %v876 = vadd.f32 %v501, %v875
  %v877 = vpop.f32.mrb[0].mxu0
  %v878 = vadd.f32 %v497, %v877
  %v879 = vpop.f32.mrb[0].mxu0
  %v880 = vadd.f32 %v501, %v879
  %881 = vmatprep.mubr.bf16.mxu0 0
  %882 = vmatmul.mubr.bf16.gmra.mrb[0].mxu0 %v451
  %v883 = vpop.f32.mrb[0].mxu0
  %v884 = vadd.f32 %v497, %v883
  %v885 = vpop.f32.mrb[0].mxu0
  %v886 = vadd.f32 %v501, %v885
  %v887 = vpop.f32.mrb[0].mxu0
  %v888 = vadd.f32 %v497, %v887
  %v889 = vpop.f32.mrb[0].mxu0
  %v890 = vadd.f32 %v501, %v889
  %891 = vdwg.mxu0
  %892 = vst [vmem:[#allocation2] sm:$0xff] %v701
  %893 = vst [vmem:[#allocation2 + $0x8] sm:$0xff] %v703
  %894 = vst [vmem:[#allocation2 + $0x10] sm:$0xff] %v814
  %895 = vst [vmem:[#allocation2 + $0x18] sm:$0xff] %v816
  %896 = vst [vmem:[#allocation2 + $0x20] sm:$0xff] %v705
  %897 = vst [vmem:[#allocation2 + $0x28] sm:$0xff] %v707
  %898 = vst [vmem:[#allocation2 + $0x30] sm:$0xff] %v818
  %899 = vst [vmem:[#allocation2 + $0x38] sm:$0xff] %v820
  %900 = vst [vmem:[#allocation2 + $0x40] sm:$0xff] %v711
  %901 = vst [vmem:[#allocation2 + $0x48] sm:$0xff] %v713
  %902 = vst [vmem:[#allocation2 + $0x50] sm:$0xff] %v824
  %903 = vst [vmem:[#allocation2 + $0x58] sm:$0xff] %v826
  %904 = vst [vmem:[#allocation2 + $0x60] sm:$0xff] %v715
  %905 = vst [vmem:[#allocation2 + $0x68] sm:$0xff] %v717
  %906 = vst [vmem:[#allocation2 + $0x70] sm:$0xff] %v828
  %907 = vst [vmem:[#allocation2 + $0x78] sm:$0xff] %v830
  %908 = vst [vmem:[#allocation2 + $0x80] sm:$0xff] %v721
  %909 = vst [vmem:[#allocation2 + $0x88] sm:$0xff] %v723
  %910 = vst [vmem:[#allocation2 + $0x90] sm:$0xff] %v834
  %911 = vst [vmem:[#allocation2 + $0x98] sm:$0xff] %v836
  %912 = vst [vmem:[#allocation2 + $0xa0] sm:$0xff] %v725
  %913 = vst [vmem:[#allocation2 + $0xa8] sm:$0xff] %v727
  %914 = vst [vmem:[#allocation2 + $0xb0] sm:$0xff] %v838
  %915 = vst [vmem:[#allocation2 + $0xb8] sm:$0xff] %v840
  %916 = vst [vmem:[#allocation2 + $0xc0] sm:$0xff] %v731
  %917 = vst [vmem:[#allocation2 + $0xc8] sm:$0xff] %v733
  %918 = vst [vmem:[#allocation2 + $0xd0] sm:$0xff] %v844
  %919 = vst [vmem:[#allocation2 + $0xd8] sm:$0xff] %v846
  %920 = vst [vmem:[#allocation2 + $0xe0] sm:$0xff] %v735
  %921 = vst [vmem:[#allocation2 + $0xe8] sm:$0xff] %v737
  %922 = vst [vmem:[#allocation2 + $0xf0] sm:$0xff] %v848
  %923 = vst [vmem:[#allocation2 + $0xf8] sm:$0xff] %v850
  %924 = vst [vmem:[#allocation2 + $0x100] sm:$0xff] %v741
  %925 = vst [vmem:[#allocation2 + $0x108] sm:$0xff] %v743
  %926 = vst [vmem:[#allocation2 + $0x110] sm:$0xff] %v854
  %927 = vst [vmem:[#allocation2 + $0x118] sm:$0xff] %v856
  %928 = vst [vmem:[#allocation2 + $0x120] sm:$0xff] %v745
  %929 = vst [vmem:[#allocation2 + $0x128] sm:$0xff] %v747
  %930 = vst [vmem:[#allocation2 + $0x130] sm:$0xff] %v858
  %931 = vst [vmem:[#allocation2 + $0x138] sm:$0xff] %v860
  %932 = vst [vmem:[#allocation2 + $0x140] sm:$0xff] %v751
  %933 = vst [vmem:[#allocation2 + $0x148] sm:$0xff] %v753
  %934 = vst [vmem:[#allocation2 + $0x150] sm:$0xff] %v864
  %935 = vst [vmem:[#allocation2 + $0x158] sm:$0xff] %v866
  %936 = vst [vmem:[#allocation2 + $0x160] sm:$0xff] %v755
  %937 = vst [vmem:[#allocation2 + $0x168] sm:$0xff] %v757
  %938 = vst [vmem:[#allocation2 + $0x170] sm:$0xff] %v868
  %939 = vst [vmem:[#allocation2 + $0x178] sm:$0xff] %v870
  %940 = vst [vmem:[#allocation2 + $0x180] sm:$0xff] %v761
  %941 = vst [vmem:[#allocation2 + $0x188] sm:$0xff] %v763
  %942 = vst [vmem:[#allocation2 + $0x190] sm:$0xff] %v874
  %943 = vst [vmem:[#allocation2 + $0x198] sm:$0xff] %v876
  %944 = vst [vmem:[#allocation2 + $0x1a0] sm:$0xff] %v765
  %945 = vst [vmem:[#allocation2 + $0x1a8] sm:$0xff] %v767
  %946 = vst [vmem:[#allocation2 + $0x1b0] sm:$0xff] %v878
  %947 = vst [vmem:[#allocation2 + $0x1b8] sm:$0xff] %v880
  %948 = vst [vmem:[#allocation2 + $0x1c0] sm:$0xff] %v771
  %949 = vst [vmem:[#allocation2 + $0x1c8] sm:$0xff] %v773
  %950 = vst [vmem:[#allocation2 + $0x1d0] sm:$0xff] %v884
  %951 = vst [vmem:[#allocation2 + $0x1d8] sm:$0xff] %v886
  %952 = vst [vmem:[#allocation2 + $0x1e0] sm:$0xff] %v775
  %953 = vst [vmem:[#allocation2 + $0x1e8] sm:$0xff] %v777
  %954 = vst [vmem:[#allocation2 + $0x1f0] sm:$0xff] %v888
  %955 = vst [vmem:[#allocation2 + $0x1f8] sm:$0xff] %v890
  %v956 = vld [vmem:[#allocation2] sm:$0xff]
  %v957 = vld [vmem:[#allocation2 + $0x8] sm:$0xff]
  %v958 = vld [vmem:[#allocation2 + $0x10] sm:$0xff]
  %v959 = vld [vmem:[#allocation2 + $0x18] sm:$0xff]
  %v960 = vld [vmem:[#allocation2 + $0x20] sm:$0xff]
  %v961 = vld [vmem:[#allocation2 + $0x28] sm:$0xff]
  %v962 = vld [vmem:[#allocation2 + $0x30] sm:$0xff]
  %v963 = vld [vmem:[#allocation2 + $0x38] sm:$0xff]
  %v964 = vld [vmem:[%s6] sm:$0xff]
  %v965 = vld [vmem:[%s6 + $0x8] sm:$0xff]
  %v966 = vld [vmem:[%s6 + $0x10] sm:$0xff]
  %v967 = vld [vmem:[%s6 + $0x18] sm:$0xff]
  %v968 = vld [vmem:[%s6 + $0x20] sm:$0xff]
  %v969 = vld [vmem:[%s6 + $0x28] sm:$0xff]
  %v970 = vld [vmem:[%s6 + $0x30] sm:$0xff]
  %v971 = vld [vmem:[%s6 + $0x38] sm:$0xff]
  %v972 = vld [vmem:[%s6 + $0x40] sm:$0xff]
  %v973 = vld [vmem:[%s6 + $0x48] sm:$0xff]
  %v974 = vld [vmem:[%s6 + $0x50] sm:$0xff]
  %v975 = vld [vmem:[%s6 + $0x58] sm:$0xff]
  %v976 = vld [vmem:[%s6 + $0x60] sm:$0xff]
  %v977 = vld [vmem:[%s6 + $0x68] sm:$0xff]
  %v978 = vld [vmem:[%s6 + $0x70] sm:$0xff]
  %v979 = vld [vmem:[%s6 + $0x78] sm:$0xff]
  %v980 = vld [vmem:[%s6 + $0x80] sm:$0xff]
  %v981 = vld [vmem:[%s6 + $0x88] sm:$0xff]
  %v982 = vld [vmem:[%s6 + $0x90] sm:$0xff]
  %v983 = vld [vmem:[%s6 + $0x98] sm:$0xff]
  %v984 = vld [vmem:[%s6 + $0xa0] sm:$0xff]
  %v985 = vld [vmem:[%s6 + $0xa8] sm:$0xff]
  %v986 = vld [vmem:[%s6 + $0xb0] sm:$0xff]
  %v987 = vld [vmem:[%s6 + $0xb8] sm:$0xff]
  %v988 = vld [vmem:[%s6 + $0xc0] sm:$0xff]
  %v989 = vld [vmem:[%s6 + $0xc8] sm:$0xff]
  %v990 = vld [vmem:[%s6 + $0xd0] sm:$0xff]
  %v991 = vld [vmem:[%s6 + $0xd8] sm:$0xff]
  %v992 = vld [vmem:[%s6 + $0xe0] sm:$0xff]
  %v993 = vld [vmem:[%s6 + $0xe8] sm:$0xff]
  %v994 = vld [vmem:[%s6 + $0xf0] sm:$0xff]
  %v995 = vld [vmem:[%s6 + $0xf8] sm:$0xff]
  %v1028 = vunpack.c.l.b16 %v964
  %v1029 = vunpack.c.h.b16 %v964
  %v1030 = vunpack.c.l.b16 %v965
  %v1031 = vunpack.c.h.b16 %v965
  %v1032 = vunpack.c.l.b16 %v966
  %v1033 = vunpack.c.h.b16 %v966
  %v1034 = vunpack.c.l.b16 %v967
  %v1035 = vunpack.c.h.b16 %v967
  %v1036 = vunpack.c.l.b16 %v968
  %v1037 = vunpack.c.h.b16 %v968
  %v1038 = vunpack.c.l.b16 %v969
  %v1039 = vunpack.c.h.b16 %v969
  %v1040 = vunpack.c.l.b16 %v970
  %v1041 = vunpack.c.h.b16 %v970
  %v1042 = vunpack.c.l.b16 %v971
  %v1043 = vunpack.c.h.b16 %v971
  %v1044 = vunpack.c.l.b16 %v972
  %v1045 = vunpack.c.h.b16 %v972
  %v1046 = vunpack.c.l.b16 %v973
  %v1047 = vunpack.c.h.b16 %v973
  %v1048 = vunpack.c.l.b16 %v974
  %v1049 = vunpack.c.h.b16 %v974
  %v1050 = vunpack.c.l.b16 %v975
  %v1051 = vunpack.c.h.b16 %v975
  %v1052 = vunpack.c.l.b16 %v976
  %v1053 = vunpack.c.h.b16 %v976
  %v1054 = vunpack.c.l.b16 %v977
  %v1055 = vunpack.c.h.b16 %v977
  %v1056 = vunpack.c.l.b16 %v978
  %v1057 = vunpack.c.h.b16 %v978
  %v1058 = vunpack.c.l.b16 %v979
  %v1059 = vunpack.c.h.b16 %v979
  %v1060 = vunpack.c.l.b16 %v980
  %v1061 = vunpack.c.h.b16 %v980
  %v1062 = vunpack.c.l.b16 %v981
  %v1063 = vunpack.c.h.b16 %v981
  %v1064 = vunpack.c.l.b16 %v982
  %v1065 = vunpack.c.h.b16 %v982
  %v1066 = vunpack.c.l.b16 %v983
  %v1067 = vunpack.c.h.b16 %v983
  %v1068 = vunpack.c.l.b16 %v984
  %v1069 = vunpack.c.h.b16 %v984
  %v1070 = vunpack.c.l.b16 %v985
  %v1071 = vunpack.c.h.b16 %v985
  %v1072 = vunpack.c.l.b16 %v986
  %v1073 = vunpack.c.h.b16 %v986
  %v1074 = vunpack.c.l.b16 %v987
  %v1075 = vunpack.c.h.b16 %v987
  %v1076 = vunpack.c.l.b16 %v988
  %v1077 = vunpack.c.h.b16 %v988
  %v1078 = vunpack.c.l.b16 %v989
  %v1079 = vunpack.c.h.b16 %v989
  %v1080 = vunpack.c.l.b16 %v990
  %v1081 = vunpack.c.h.b16 %v990
  %v1082 = vunpack.c.l.b16 %v991
  %v1083 = vunpack.c.h.b16 %v991
  %v1084 = vunpack.c.l.b16 %v992
  %v1085 = vunpack.c.h.b16 %v992
  %v1086 = vunpack.c.l.b16 %v993
  %v1087 = vunpack.c.h.b16 %v993
  %v1088 = vunpack.c.l.b16 %v994
  %v1089 = vunpack.c.h.b16 %v994
  %v1090 = vunpack.c.l.b16 %v995
  %v1091 = vunpack.c.h.b16 %v995
  %v1092 = vpack.c.b16 %v1032, %v1028
  %v1093 = vpack.c.b16 %v1033, %v1029
  %v1094 = vpack.c.b16 %v1034, %v1030
  %v1095 = vpack.c.b16 %v1035, %v1031
  %v1096 = vpack.c.b16 %v1040, %v1036
  %v1097 = vpack.c.b16 %v1041, %v1037
  %v1098 = vpack.c.b16 %v1042, %v1038
  %v1099 = vpack.c.b16 %v1043, %v1039
  %v1100 = vpack.c.b16 %v1048, %v1044
  %v1101 = vpack.c.b16 %v1049, %v1045
  %v1102 = vpack.c.b16 %v1050, %v1046
  %v1103 = vpack.c.b16 %v1051, %v1047
  %v1104 = vpack.c.b16 %v1056, %v1052
  %v1105 = vpack.c.b16 %v1057, %v1053
  %v1106 = vpack.c.b16 %v1058, %v1054
  %v1107 = vpack.c.b16 %v1059, %v1055
  %v1108 = vpack.c.b16 %v1064, %v1060
  %v1109 = vpack.c.b16 %v1065, %v1061
  %v1110 = vpack.c.b16 %v1066, %v1062
  %v1111 = vpack.c.b16 %v1067, %v1063
  %v1112 = vpack.c.b16 %v1072, %v1068
  %v1113 = vpack.c.b16 %v1073, %v1069
  %v1114 = vpack.c.b16 %v1074, %v1070
  %v1115 = vpack.c.b16 %v1075, %v1071
  %v1116 = vpack.c.b16 %v1080, %v1076
  %v1117 = vpack.c.b16 %v1081, %v1077
  %v1118 = vpack.c.b16 %v1082, %v1078
  %v1119 = vpack.c.b16 %v1083, %v1079
  %v1120 = vpack.c.b16 %v1088, %v1084
  %v1121 = vpack.c.b16 %v1089, %v1085
  %v1122 = vpack.c.b16 %v1090, %v1086
  %v1123 = vpack.c.b16 %v1091, %v1087
  %1156 = vmatprep.subr.bf16.mxu0 %v1093
  %1157 = vmatpush1.bf16.msra.mxu0 %v1092
  %1158 = vmatprep.subr.bf16.mxu0 %v1097
  %1159 = vmatpush1.bf16.msra.mxu0 %v1096
  %1160 = vmatprep.subr.bf16.mxu0 %v1101
  %1161 = vmatpush1.bf16.msra.mxu0 %v1100
  %1162 = vmatprep.subr.bf16.mxu0 %v1105
  %1163 = vmatpush1.bf16.msra.mxu0 %v1104
  %1164 = vmatprep.subr.bf16.mxu0 %v1109
  %1165 = vmatpush1.bf16.msra.mxu0 %v1108
  %1166 = vmatprep.subr.bf16.mxu0 %v1113
  %1167 = vmatpush1.bf16.msra.mxu0 %v1112
  %1168 = vmatprep.subr.bf16.mxu0 %v1117
  %1169 = vmatpush1.bf16.msra.mxu0 %v1116
  %1170 = vmatprep.subr.bf16.mxu0 %v1121
  %1171 = vmatpush1.bf16.msra.mxu0 %v1120
  %1172 = vmatprep.subr.bf16.mxu0 0
  %1173 = vmatpush1.bf16.msra.mxu0 0
  %1174 = vmatprep.subr.bf16.mxu0 0
  %1175 = vmatpush1.bf16.msra.mxu0 0
  %1176 = vmatprep.subr.bf16.mxu0 0
  %1177 = vmatpush1.bf16.msra.mxu0 0
  %1178 = vmatprep.subr.bf16.mxu0 0
  %1179 = vmatpush1.bf16.msra.mxu0 0
  %1180 = vmatprep.subr.bf16.mxu0 0
  %1181 = vmatpush1.bf16.msra.mxu0 0
  %1182 = vmatprep.subr.bf16.mxu0 0
  %1183 = vmatpush1.bf16.msra.mxu0 0
  %1184 = vmatprep.subr.bf16.mxu0 0
  %1185 = vmatpush1.bf16.msra.mxu0 0
  %1186 = vmatprep.subr.bf16.mxu0 0
  %1187 = vmatpush1.bf16.msra.mxu0 0
  %1188 = vmatprep.mubr.bf16.mxu0 0
  %1189 = vmatmul.mubr.bf16.gmra.mrb[0].mxu0 0
  %v1190 = vpop.f32.mrb[0].mxu0
  %v1191 = vadd.f32 0.0, %v1190
  %v1192 = vpop.f32.mrb[0].mxu0
  %v1193 = vadd.f32 0.0, %v1192
  %v1194 = vpop.f32.mrb[0].mxu0
  %v1195 = vadd.f32 0.0, %v1194
  %v1196 = vpop.f32.mrb[0].mxu0
  %v1197 = vadd.f32 0.0, %v1196
  %1198 = vdwg.mxu0
  %1199 = vmatprep.subr.bf16.mxu0 %v1095
  %1200 = vmatpush1.bf16.msra.mxu0 %v1094
  %1201 = vmatprep.subr.bf16.mxu0 %v1099
  %1202 = vmatpush1.bf16.msra.mxu0 %v1098
  %1203 = vmatprep.subr.bf16.mxu0 %v1103
  %1204 = vmatpush1.bf16.msra.mxu0 %v1102
  %1205 = vmatprep.subr.bf16.mxu0 %v1107
  %1206 = vmatpush1.bf16.msra.mxu0 %v1106
  %1207 = vmatprep.subr.bf16.mxu0 %v1111
  %1208 = vmatpush1.bf16.msra.mxu0 %v1110
  %1209 = vmatprep.subr.bf16.mxu0 %v1115
  %1210 = vmatpush1.bf16.msra.mxu0 %v1114
  %1211 = vmatprep.subr.bf16.mxu0 %v1119
  %1212 = vmatpush1.bf16.msra.mxu0 %v1118
  %1213 = vmatprep.subr.bf16.mxu0 %v1123
  %1214 = vmatpush1.bf16.msra.mxu0 %v1122
  %1215 = vmatprep.subr.bf16.mxu0 0
  %1216 = vmatpush1.bf16.msra.mxu0 0
  %1217 = vmatprep.subr.bf16.mxu0 0
  %1218 = vmatpush1.bf16.msra.mxu0 0
  %1219 = vmatprep.subr.bf16.mxu0 0
  %1220 = vmatpush1.bf16.msra.mxu0 0
  %1221 = vmatprep.subr.bf16.mxu0 0
  %1222 = vmatpush1.bf16.msra.mxu0 0
  %1223 = vmatprep.subr.bf16.mxu0 0
  %1224 = vmatpush1.bf16.msra.mxu0 0
  %1225 = vmatprep.subr.bf16.mxu0 0
  %1226 = vmatpush1.bf16.msra.mxu0 0
  %1227 = vmatprep.subr.bf16.mxu0 0
  %1228 = vmatpush1.bf16.msra.mxu0 0
  %1229 = vmatprep.subr.bf16.mxu0 0
  %1230 = vmatpush1.bf16.msra.mxu0 0
  %1231 = vmatprep.mubr.bf16.mxu0 0
  %1232 = vmatmul.mubr.bf16.gmra.mrb[0].mxu0 0
  %v1233 = vpop.f32.mrb[0].mxu0
  %v1234 = vadd.f32 0.0, %v1233
  %v1235 = vpop.f32.mrb[0].mxu0
  %v1236 = vadd.f32 0.0, %v1235
  %v1237 = vpop.f32.mrb[0].mxu0
  %v1238 = vadd.f32 0.0, %v1237
  %v1239 = vpop.f32.mrb[0].mxu0
  %v1240 = vadd.f32 0.0, %v1239
  %1241 = vdwg.mxu0
  %v1242 = vadd.f32 %v956, %v1191
  %v1243 = vadd.f32 %v957, %v1193
  %v1244 = vadd.f32 %v958, %v1234
  %v1245 = vadd.f32 %v959, %v1236
  %v1246 = vadd.f32 %v960, %v1195
  %v1247 = vadd.f32 %v961, %v1197
  %v1248 = vadd.f32 %v962, %v1238
  %v1249 = vadd.f32 %v963, %v1240
  %v1250 = vmul.f32 %v1242, 0.5
  %v1251 = vmul.f32 %v1246, 0.5
  %v1252 = vtanh.pop %v1250
  %v1253 = vtanh.pop %v1251
  %v1254 = vadd.f32 %v1252, 1.0
  %v1255 = vadd.f32 %v1253, 1.0
  %v1256 = vmul.f32 %v1254, 0.5
  %v1257 = vmul.f32 %v1255, 0.5
  %v1258 = vmul.f32 %v1243, 0.5
  %v1259 = vmul.f32 %v1247, 0.5
  %v1260 = vtanh.pop %v1258
  %v1261 = vtanh.pop %v1259
  %v1262 = vadd.f32 %v1260, 1.0
  %v1263 = vadd.f32 %v1261, 1.0
  %v1264 = vmul.f32 %v1262, 0.5
  %v1265 = vmul.f32 %v1263, 0.5
  %v1266 = vtanh.pop %v1244
  %v1267 = vtanh.pop %v1248
  %v1268 = vmul.f32 %v1245, 0.5
  %v1269 = vmul.f32 %v1249, 0.5
  %v1270 = vtanh.pop %v1268
  %v1271 = vtanh.pop %v1269
  %v1272 = vadd.f32 %v1270, 1.0
  %v1273 = vadd.f32 %v1271, 1.0
  %v1274 = vmul.f32 %v1272, 0.5
  %v1275 = vmul.f32 %v1273, 0.5
  %v1276 = vmul.f32 %v1264, 0.0
  %v1277 = vmul.f32 %v1265, 0.0
  %v1278 = vmul.f32 %v1256, %v1266
  %v1279 = vmul.f32 %v1257, %v1267
  %v1280 = vadd.f32 %v1276, %v1278
  %v1281 = vadd.f32 %v1277, %v1279
  %v1282 = vtanh.pop %v1280
  %v1283 = vtanh.pop %v1281
  %v1284 = vmul.f32 %v1274, %v1282
  %v1285 = vmul.f32 %v1275, %v1283
  %vm1286 = vcmp.eq.s32.totalorder %v225, 0
  %vm1287 = vcmp.eq.s32.totalorder %v226, 0
  %v1288 = vsel %vm1286, 1, 0
  %v1289 = vsel %vm1287, 1, 0
  %1290 = vset.pattern.permute.xlu0 0
  %1291 = vperm.xlu0 %1290, %v1288
  %v1292 = vpop.permute.xlu0 %1291
  %1293 = vset.pattern.permute.xlu0 0
  %1294 = vperm.xlu0 %1293, %v1289
  %v1295 = vpop.permute.xlu0 %1294
  %vm1296 = vcmp.eq.s32.totalorder %v1292, 1
  %vm1297 = vcmp.eq.s32.totalorder %v1295, 1
  %v1298 = vsel %vm1296, %v1284, 0.0
  %v1299 = vsel %vm1297, %v1285, 0.0
  %v1300 = vld [vmem:[#allocation2 + $0x40] sm:$0xff]
  %v1301 = vld [vmem:[#allocation2 + $0x48] sm:$0xff]
  %v1302 = vld [vmem:[#allocation2 + $0x50] sm:$0xff]
  %v1303 = vld [vmem:[#allocation2 + $0x58] sm:$0xff]
  %v1304 = vld [vmem:[#allocation2 + $0x60] sm:$0xff]
  %v1305 = vld [vmem:[#allocation2 + $0x68] sm:$0xff]
  %v1306 = vld [vmem:[#allocation2 + $0x70] sm:$0xff]
  %v1307 = vld [vmem:[#allocation2 + $0x78] sm:$0xff]
  %v1308 = vpack.c.bf16 %v1285, %v1284
  %1309 = vmatprep.subr.bf16.mxu0 %v1093
  %1310 = vmatpush1.bf16.msra.mxu0 %v1092
  %1311 = vmatprep.subr.bf16.mxu0 %v1097
  %1312 = vmatpush1.bf16.msra.mxu0 %v1096
  %1313 = vmatprep.subr.bf16.mxu0 %v1101
  %1314 = vmatpush1.bf16.msra.mxu0 %v1100
  %1315 = vmatprep.subr.bf16.mxu0 %v1105
  %1316 = vmatpush1.bf16.msra.mxu0 %v1104
  %1317 = vmatprep.subr.bf16.mxu0 %v1109
  %1318 = vmatpush1.bf16.msra.mxu0 %v1108
  %1319 = vmatprep.subr.bf16.mxu0 %v1113
  %1320 = vmatpush1.bf16.msra.mxu0 %v1112
  %1321 = vmatprep.subr.bf16.mxu0 %v1117
  %1322 = vmatpush1.bf16.msra.mxu0 %v1116
  %1323 = vmatprep.subr.bf16.mxu0 %v1121
  %1324 = vmatpush1.bf16.msra.mxu0 %v1120
  %1325 = vmatprep.subr.bf16.mxu0 0
  %1326 = vmatpush1.bf16.msra.mxu0 0
  %1327 = vmatprep.subr.bf16.mxu0 0
  %1328 = vmatpush1.bf16.msra.mxu0 0
  %1329 = vmatprep.subr.bf16.mxu0 0
  %1330 = vmatpush1.bf16.msra.mxu0 0
  %1331 = vmatprep.subr.bf16.mxu0 0
  %1332 = vmatpush1.bf16.msra.mxu0 0
  %1333 = vmatprep.subr.bf16.mxu0 0
  %1334 = vmatpush1.bf16.msra.mxu0 0
  %1335 = vmatprep.subr.bf16.mxu0 0
  %1336 = vmatpush1.bf16.msra.mxu0 0
  %1337 = vmatprep.subr.bf16.mxu0 0
  %1338 = vmatpush1.bf16.msra.mxu0 0
  %1339 = vmatprep.subr.bf16.mxu0 0
  %1340 = vmatpush1.bf16.msra.mxu0 0
  %1341 = vmatprep.mubr.bf16.mxu0 0
  %1342 = vmatmul.mubr.bf16.gmra.mrb[0].mxu0 %v1308
  %v1343 = vpop.f32.mrb[0].mxu0
  %v1344 = vadd.f32 0.0, %v1343
  %v1345 = vpop.f32.mrb[0].mxu0
  %v1346 = vadd.f32 0.0, %v1345
  %v1347 = vpop.f32.mrb[0].mxu0
  %v1348 = vadd.f32 0.0, %v1347
  %v1349 = vpop.f32.mrb[0].mxu0
  %v1350 = vadd.f32 0.0, %v1349
  %1351 = vdwg.mxu0
  %1352 = vmatprep.subr.bf16.mxu0 %v1095
  %1353 = vmatpush1.bf16.msra.mxu0 %v1094
  %1354 = vmatprep.subr.bf16.mxu0 %v1099
  %1355 = vmatpush1.bf16.msra.mxu0 %v1098
  %1356 = vmatprep.subr.bf16.mxu0 %v1103
  %1357 = vmatpush1.bf16.msra.mxu0 %v1102
  %1358 = vmatprep.subr.bf16.mxu0 %v1107
  %1359 = vmatpush1.bf16.msra.mxu0 %v1106
  %1360 = vmatprep.subr.bf16.mxu0 %v1111
  %1361 = vmatpush1.bf16.msra.mxu0 %v1110
  %1362 = vmatprep.subr.bf16.mxu0 %v1115
  %1363 = vmatpush1.bf16.msra.mxu0 %v1114
  %1364 = vmatprep.subr.bf16.mxu0 %v1119
  %1365 = vmatpush1.bf16.msra.mxu0 %v1118
  %1366 = vmatprep.subr.bf16.mxu0 %v1123
  %1367 = vmatpush1.bf16.msra.mxu0 %v1122
  %1368 = vmatprep.subr.bf16.mxu0 0
  %1369 = vmatpush1.bf16.msra.mxu0 0
  %1370 = vmatprep.subr.bf16.mxu0 0
  %1371 = vmatpush1.bf16.msra.mxu0 0
  %1372 = vmatprep.subr.bf16.mxu0 0
  %1373 = vmatpush1.bf16.msra.mxu0 0
  %1374 = vmatprep.subr.bf16.mxu0 0
  %1375 = vmatpush1.bf16.msra.mxu0 0
  %1376 = vmatprep.subr.bf16.mxu0 0
  %1377 = vmatpush1.bf16.msra.mxu0 0
  %1378 = vmatprep.subr.bf16.mxu0 0
  %1379 = vmatpush1.bf16.msra.mxu0 0
  %1380 = vmatprep.subr.bf16.mxu0 0
  %1381 = vmatpush1.bf16.msra.mxu0 0
  %1382 = vmatprep.subr.bf16.mxu0 0
  %1383 = vmatpush1.bf16.msra.mxu0 0
  %1384 = vmatprep.mubr.bf16.mxu0 0
  %1385 = vmatmul.mubr.bf16.gmra.mrb[0].mxu0 %v1308
  %v1386 = vpop.f32.mrb[0].mxu0
  %v1387 = vadd.f32 0.0, %v1386
  %v1388 = vpop.f32.mrb[0].mxu0
  %v1389 = vadd.f32 0.0, %v1388
  %v1390 = vpop.f32.mrb[0].mxu0
  %v1391 = vadd.f32 0.0, %v1390
  %v1392 = vpop.f32.mrb[0].mxu0
  %v1393 = vadd.f32 0.0, %v1392
  %1394 = vdwg.mxu0
  %v1395 = vadd.f32 %v1300, %v1344
  %v1396 = vadd.f32 %v1301, %v1346
  %v1397 = vadd.f32 %v1302, %v1387
  %v1398 = vadd.f32 %v1303, %v1389
  %v1399 = vadd.f32 %v1304, %v1348
  %v1400 = vadd.f32 %v1305, %v1350
  %v1401 = vadd.f32 %v1306, %v1391
  %v1402 = vadd.f32 %v1307, %v1393
  %v1403 = vmul.f32 %v1395, 0.5
  %v1404 = vmul.f32 %v1399, 0.5
  %v1405 = vtanh.pop %v1403
  %v1406 = vtanh.pop %v1404
  %v1407 = vadd.f32 %v1405, 1.0
  %v1408 = vadd.f32 %v1406, 1.0
  %v1409 = vmul.f32 %v1407, 0.5
  %v1410 = vmul.f32 %v1408, 0.5
  %v1411 = vmul.f32 %v1396, 0.5
  %v1412 = vmul.f32 %v1400, 0.5
  %v1413 = vtanh.pop %v1411
  %v1414 = vtanh.pop %v1412
  %v1415 = vadd.f32 %v1413, 1.0
  %v1416 = vadd.f32 %v1414, 1.0
  %v1417 = vmul.f32 %v1415, 0.5
  %v1418 = vmul.f32 %v1416, 0.5
  %v1419 = vtanh.pop %v1397
  %v1420 = vtanh.pop %v1401
  %v1421 = vmul.f32 %v1398, 0.5
  %v1422 = vmul.f32 %v1402, 0.5
  %v1423 = vtanh.pop %v1421
  %v1424 = vtanh.pop %v1422
  %v1425 = vadd.f32 %v1423, 1.0
  %v1426 = vadd.f32 %v1424, 1.0
  %v1427 = vmul.f32 %v1425, 0.5
  %v1428 = vmul.f32 %v1426, 0.5
  %v1429 = vmul.f32 %v1417, %v1280
  %v1430 = vmul.f32 %v1418, %v1281
  %v1431 = vmul.f32 %v1409, %v1419
  %v1432 = vmul.f32 %v1410, %v1420
  %v1433 = vadd.f32 %v1429, %v1431
  %v1434 = vadd.f32 %v1430, %v1432
  %v1435 = vtanh.pop %v1433
  %v1436 = vtanh.pop %v1434
  %v1437 = vmul.f32 %v1427, %v1435
  %v1438 = vmul.f32 %v1428, %v1436
  %vm1439 = vcmp.eq.s32.totalorder %v225, 1
  %vm1440 = vcmp.eq.s32.totalorder %v226, 1
  %v1441 = vsel %vm1439, 1, 0
  %v1442 = vsel %vm1440, 1, 0
  %1443 = vset.pattern.permute.xlu0 0
  %1444 = vperm.xlu0 %1443, %v1441
  %v1445 = vpop.permute.xlu0 %1444
  %1446 = vset.pattern.permute.xlu0 0
  %1447 = vperm.xlu0 %1446, %v1442
  %v1448 = vpop.permute.xlu0 %1447
  %vm1449 = vcmp.eq.s32.totalorder %v1445, 1
  %vm1450 = vcmp.eq.s32.totalorder %v1448, 1
  %v1451 = vsel %vm1449, %v1437, %v1298
  %v1452 = vsel %vm1450, %v1438, %v1299
  %v1453 = vld [vmem:[#allocation2 + $0x80] sm:$0xff]
  %v1454 = vld [vmem:[#allocation2 + $0x88] sm:$0xff]
  %v1455 = vld [vmem:[#allocation2 + $0x90] sm:$0xff]
  %v1456 = vld [vmem:[#allocation2 + $0x98] sm:$0xff]
  %v1457 = vld [vmem:[#allocation2 + $0xa0] sm:$0xff]
  %v1458 = vld [vmem:[#allocation2 + $0xa8] sm:$0xff]
  %v1459 = vld [vmem:[#allocation2 + $0xb0] sm:$0xff]
  %v1460 = vld [vmem:[#allocation2 + $0xb8] sm:$0xff]
  %v1461 = vpack.c.bf16 %v1438, %v1437
  %1462 = vmatprep.subr.bf16.mxu0 %v1093
  %1463 = vmatpush1.bf16.msra.mxu0 %v1092
  %1464 = vmatprep.subr.bf16.mxu0 %v1097
  %1465 = vmatpush1.bf16.msra.mxu0 %v1096
  %1466 = vmatprep.subr.bf16.mxu0 %v1101
  %1467 = vmatpush1.bf16.msra.mxu0 %v1100
  %1468 = vmatprep.subr.bf16.mxu0 %v1105
  %1469 = vmatpush1.bf16.msra.mxu0 %v1104
  %1470 = vmatprep.subr.bf16.mxu0 %v1109
  %1471 = vmatpush1.bf16.msra.mxu0 %v1108
  %1472 = vmatprep.subr.bf16.mxu0 %v1113
  %1473 = vmatpush1.bf16.msra.mxu0 %v1112
  %1474 = vmatprep.subr.bf16.mxu0 %v1117
  %1475 = vmatpush1.bf16.msra.mxu0 %v1116
  %1476 = vmatprep.subr.bf16.mxu0 %v1121
  %1477 = vmatpush1.bf16.msra.mxu0 %v1120
  %1478 = vmatprep.subr.bf16.mxu0 0
  %1479 = vmatpush1.bf16.msra.mxu0 0
  %1480 = vmatprep.subr.bf16.mxu0 0
  %1481 = vmatpush1.bf16.msra.mxu0 0
  %1482 = vmatprep.subr.bf16.mxu0 0
  %1483 = vmatpush1.bf16.msra.mxu0 0
  %1484 = vmatprep.subr.bf16.mxu0 0
  %1485 = vmatpush1.bf16.msra.mxu0 0
  %1486 = vmatprep.subr.bf16.mxu0 0
  %1487 = vmatpush1.bf16.msra.mxu0 0
  %1488 = vmatprep.subr.bf16.mxu0 0
  %1489 = vmatpush1.bf16.msra.mxu0 0
  %1490 = vmatprep.subr.bf16.mxu0 0
  %1491 = vmatpush1.bf16.msra.mxu0 0
  %1492 = vmatprep.subr.bf16.mxu0 0
  %1493 = vmatpush1.bf16.msra.mxu0 0
  %1494 = vmatprep.mubr.bf16.mxu0 0
  %1495 = vmatmul.mubr.bf16.gmra.mrb[0].mxu0 %v1461
  %v1496 = vpop.f32.mrb[0].mxu0
  %v1497 = vadd.f32 0.0, %v1496
  %v1498 = vpop.f32.mrb[0].mxu0
  %v1499 = vadd.f32 0.0, %v1498
  %v1500 = vpop.f32.mrb[0].mxu0
  %v1501 = vadd.f32 0.0, %v1500
  %v1502 = vpop.f32.mrb[0].mxu0
  %v1503 = vadd.f32 0.0, %v1502
  %1504 = vdwg.mxu0
  %1505 = vmatprep.subr.bf16.mxu0 %v1095
  %1506 = vmatpush1.bf16.msra.mxu0 %v1094
  %1507 = vmatprep.subr.bf16.mxu0 %v1099
  %1508 = vmatpush1.bf16.msra.mxu0 %v1098
  %1509 = vmatprep.subr.bf16.mxu0 %v1103
  %1510 = vmatpush1.bf16.msra.mxu0 %v1102
  %1511 = vmatprep.subr.bf16.mxu0 %v1107
  %1512 = vmatpush1.bf16.msra.mxu0 %v1106
  %1513 = vmatprep.subr.bf16.mxu0 %v1111
  %1514 = vmatpush1.bf16.msra.mxu0 %v1110
  %1515 = vmatprep.subr.bf16.mxu0 %v1115
  %1516 = vmatpush1.bf16.msra.mxu0 %v1114
  %1517 = vmatprep.subr.bf16.mxu0 %v1119
  %1518 = vmatpush1.bf16.msra.mxu0 %v1118
  %1519 = vmatprep.subr.bf16.mxu0 %v1123
  %1520 = vmatpush1.bf16.msra.mxu0 %v1122
  %1521 = vmatprep.subr.bf16.mxu0 0
  %1522 = vmatpush1.bf16.msra.mxu0 0
  %1523 = vmatprep.subr.bf16.mxu0 0
  %1524 = vmatpush1.bf16.msra.mxu0 0
  %1525 = vmatprep.subr.bf16.mxu0 0
  %1526 = vmatpush1.bf16.msra.mxu0 0
  %1527 = vmatprep.subr.bf16.mxu0 0
  %1528 = vmatpush1.bf16.msra.mxu0 0
  %1529 = vmatprep.subr.bf16.mxu0 0
  %1530 = vmatpush1.bf16.msra.mxu0 0
  %1531 = vmatprep.subr.bf16.mxu0 0
  %1532 = vmatpush1.bf16.msra.mxu0 0
  %1533 = vmatprep.subr.bf16.mxu0 0
  %1534 = vmatpush1.bf16.msra.mxu0 0
  %1535 = vmatprep.subr.bf16.mxu0 0
  %1536 = vmatpush1.bf16.msra.mxu0 0
  %1537 = vmatprep.mubr.bf16.mxu0 0
  %1538 = vmatmul.mubr.bf16.gmra.mrb[0].mxu0 %v1461
  %v1539 = vpop.f32.mrb[0].mxu0
  %v1540 = vadd.f32 0.0, %v1539
  %v1541 = vpop.f32.mrb[0].mxu0
  %v1542 = vadd.f32 0.0, %v1541
  %v1543 = vpop.f32.mrb[0].mxu0
  %v1544 = vadd.f32 0.0, %v1543
  %v1545 = vpop.f32.mrb[0].mxu0
  %v1546 = vadd.f32 0.0, %v1545
  %1547 = vdwg.mxu0
  %v1548 = vadd.f32 %v1453, %v1497
  %v1549 = vadd.f32 %v1454, %v1499
  %v1550 = vadd.f32 %v1455, %v1540
  %v1551 = vadd.f32 %v1456, %v1542
  %v1552 = vadd.f32 %v1457, %v1501
  %v1553 = vadd.f32 %v1458, %v1503
  %v1554 = vadd.f32 %v1459, %v1544
  %v1555 = vadd.f32 %v1460, %v1546
  %v1556 = vmul.f32 %v1548, 0.5
  %v1557 = vmul.f32 %v1552, 0.5
  %v1558 = vtanh.pop %v1556
  %v1559 = vtanh.pop %v1557
  %v1560 = vadd.f32 %v1558, 1.0
  %v1561 = vadd.f32 %v1559, 1.0
  %v1562 = vmul.f32 %v1560, 0.5
  %v1563 = vmul.f32 %v1561, 0.5
  %v1564 = vmul.f32 %v1549, 0.5
  %v1565 = vmul.f32 %v1553, 0.5
  %v1566 = vtanh.pop %v1564
  %v1567 = vtanh.pop %v1565
  %v1568 = vadd.f32 %v1566, 1.0
  %v1569 = vadd.f32 %v1567, 1.0
  %v1570 = vmul.f32 %v1568, 0.5
  %v1571 = vmul.f32 %v1569, 0.5
  %v1572 = vtanh.pop %v1550
  %v1573 = vtanh.pop %v1554
  %v1574 = vmul.f32 %v1551, 0.5
  %v1575 = vmul.f32 %v1555, 0.5
  %v1576 = vtanh.pop %v1574
  %v1577 = vtanh.pop %v1575
  %v1578 = vadd.f32 %v1576, 1.0
  %v1579 = vadd.f32 %v1577, 1.0
  %v1580 = vmul.f32 %v1578, 0.5
  %v1581 = vmul.f32 %v1579, 0.5
  %v1582 = vmul.f32 %v1570, %v1433
  %v1583 = vmul.f32 %v1571, %v1434
  %v1584 = vmul.f32 %v1562, %v1572
  %v1585 = vmul.f32 %v1563, %v1573
  %v1586 = vadd.f32 %v1582, %v1584
  %v1587 = vadd.f32 %v1583, %v1585
  %v1588 = vtanh.pop %v1586
  %v1589 = vtanh.pop %v1587
  %v1590 = vmul.f32 %v1580, %v1588
  %v1591 = vmul.f32 %v1581, %v1589
  %vm1592 = vcmp.eq.s32.totalorder %v225, 2
  %vm1593 = vcmp.eq.s32.totalorder %v226, 2
  %v1594 = vsel %vm1592, 1, 0
  %v1595 = vsel %vm1593, 1, 0
  %1596 = vset.pattern.permute.xlu0 0
  %1597 = vperm.xlu0 %1596, %v1594
  %v1598 = vpop.permute.xlu0 %1597
  %1599 = vset.pattern.permute.xlu0 0
  %1600 = vperm.xlu0 %1599, %v1595
  %v1601 = vpop.permute.xlu0 %1600
  %vm1602 = vcmp.eq.s32.totalorder %v1598, 1
  %vm1603 = vcmp.eq.s32.totalorder %v1601, 1
  %v1604 = vsel %vm1602, %v1590, %v1451
  %v1605 = vsel %vm1603, %v1591, %v1452
  %v1606 = vld [vmem:[#allocation2 + $0xc0] sm:$0xff]
  %v1607 = vld [vmem:[#allocation2 + $0xc8] sm:$0xff]
  %v1608 = vld [vmem:[#allocation2 + $0xd0] sm:$0xff]
  %v1609 = vld [vmem:[#allocation2 + $0xd8] sm:$0xff]
  %v1610 = vld [vmem:[#allocation2 + $0xe0] sm:$0xff]
  %v1611 = vld [vmem:[#allocation2 + $0xe8] sm:$0xff]
  %v1612 = vld [vmem:[#allocation2 + $0xf0] sm:$0xff]
  %v1613 = vld [vmem:[#allocation2 + $0xf8] sm:$0xff]
  %v1614 = vpack.c.bf16 %v1591, %v1590
  %1615 = vmatprep.subr.bf16.mxu0 %v1093
  %1616 = vmatpush1.bf16.msra.mxu0 %v1092
  %1617 = vmatprep.subr.bf16.mxu0 %v1097
  %1618 = vmatpush1.bf16.msra.mxu0 %v1096
  %1619 = vmatprep.subr.bf16.mxu0 %v1101
  %1620 = vmatpush1.bf16.msra.mxu0 %v1100
  %1621 = vmatprep.subr.bf16.mxu0 %v1105
  %1622 = vmatpush1.bf16.msra.mxu0 %v1104
  %1623 = vmatprep.subr.bf16.mxu0 %v1109
  %1624 = vmatpush1.bf16.msra.mxu0 %v1108
  %1625 = vmatprep.subr.bf16.mxu0 %v1113
  %1626 = vmatpush1.bf16.msra.mxu0 %v1112
  %1627 = vmatprep.subr.bf16.mxu0 %v1117
  %1628 = vmatpush1.bf16.msra.mxu0 %v1116
  %1629 = vmatprep.subr.bf16.mxu0 %v1121
  %1630 = vmatpush1.bf16.msra.mxu0 %v1120
  %1631 = vmatprep.subr.bf16.mxu0 0
  %1632 = vmatpush1.bf16.msra.mxu0 0
  %1633 = vmatprep.subr.bf16.mxu0 0
  %1634 = vmatpush1.bf16.msra.mxu0 0
  %1635 = vmatprep.subr.bf16.mxu0 0
  %1636 = vmatpush1.bf16.msra.mxu0 0
  %1637 = vmatprep.subr.bf16.mxu0 0
  %1638 = vmatpush1.bf16.msra.mxu0 0
  %1639 = vmatprep.subr.bf16.mxu0 0
  %1640 = vmatpush1.bf16.msra.mxu0 0
  %1641 = vmatprep.subr.bf16.mxu0 0
  %1642 = vmatpush1.bf16.msra.mxu0 0
  %1643 = vmatprep.subr.bf16.mxu0 0
  %1644 = vmatpush1.bf16.msra.mxu0 0
  %1645 = vmatprep.subr.bf16.mxu0 0
  %1646 = vmatpush1.bf16.msra.mxu0 0
  %1647 = vmatprep.mubr.bf16.mxu0 0
  %1648 = vmatmul.mubr.bf16.gmra.mrb[0].mxu0 %v1614
  %v1649 = vpop.f32.mrb[0].mxu0
  %v1650 = vadd.f32 0.0, %v1649
  %v1651 = vpop.f32.mrb[0].mxu0
  %v1652 = vadd.f32 0.0, %v1651
  %v1653 = vpop.f32.mrb[0].mxu0
  %v1654 = vadd.f32 0.0, %v1653
  %v1655 = vpop.f32.mrb[0].mxu0
  %v1656 = vadd.f32 0.0, %v1655
  %1657 = vdwg.mxu0
  %1658 = vmatprep.subr.bf16.mxu0 %v1095
  %1659 = vmatpush1.bf16.msra.mxu0 %v1094
  %1660 = vmatprep.subr.bf16.mxu0 %v1099
  %1661 = vmatpush1.bf16.msra.mxu0 %v1098
  %1662 = vmatprep.subr.bf16.mxu0 %v1103
  %1663 = vmatpush1.bf16.msra.mxu0 %v1102
  %1664 = vmatprep.subr.bf16.mxu0 %v1107
  %1665 = vmatpush1.bf16.msra.mxu0 %v1106
  %1666 = vmatprep.subr.bf16.mxu0 %v1111
  %1667 = vmatpush1.bf16.msra.mxu0 %v1110
  %1668 = vmatprep.subr.bf16.mxu0 %v1115
  %1669 = vmatpush1.bf16.msra.mxu0 %v1114
  %1670 = vmatprep.subr.bf16.mxu0 %v1119
  %1671 = vmatpush1.bf16.msra.mxu0 %v1118
  %1672 = vmatprep.subr.bf16.mxu0 %v1123
  %1673 = vmatpush1.bf16.msra.mxu0 %v1122
  %1674 = vmatprep.subr.bf16.mxu0 0
  %1675 = vmatpush1.bf16.msra.mxu0 0
  %1676 = vmatprep.subr.bf16.mxu0 0
  %1677 = vmatpush1.bf16.msra.mxu0 0
  %1678 = vmatprep.subr.bf16.mxu0 0
  %1679 = vmatpush1.bf16.msra.mxu0 0
  %1680 = vmatprep.subr.bf16.mxu0 0
  %1681 = vmatpush1.bf16.msra.mxu0 0
  %1682 = vmatprep.subr.bf16.mxu0 0
  %1683 = vmatpush1.bf16.msra.mxu0 0
  %1684 = vmatprep.subr.bf16.mxu0 0
  %1685 = vmatpush1.bf16.msra.mxu0 0
  %1686 = vmatprep.subr.bf16.mxu0 0
  %1687 = vmatpush1.bf16.msra.mxu0 0
  %1688 = vmatprep.subr.bf16.mxu0 0
  %1689 = vmatpush1.bf16.msra.mxu0 0
  %1690 = vmatprep.mubr.bf16.mxu0 0
  %1691 = vmatmul.mubr.bf16.gmra.mrb[0].mxu0 %v1614
  %v1692 = vpop.f32.mrb[0].mxu0
  %v1693 = vadd.f32 0.0, %v1692
  %v1694 = vpop.f32.mrb[0].mxu0
  %v1695 = vadd.f32 0.0, %v1694
  %v1696 = vpop.f32.mrb[0].mxu0
  %v1697 = vadd.f32 0.0, %v1696
  %v1698 = vpop.f32.mrb[0].mxu0
  %v1699 = vadd.f32 0.0, %v1698
  %1700 = vdwg.mxu0
  %v1701 = vadd.f32 %v1606, %v1650
  %v1702 = vadd.f32 %v1607, %v1652
  %v1703 = vadd.f32 %v1608, %v1693
  %v1704 = vadd.f32 %v1609, %v1695
  %v1705 = vadd.f32 %v1610, %v1654
  %v1706 = vadd.f32 %v1611, %v1656
  %v1707 = vadd.f32 %v1612, %v1697
  %v1708 = vadd.f32 %v1613, %v1699
  %v1709 = vmul.f32 %v1701, 0.5
  %v1710 = vmul.f32 %v1705, 0.5
  %v1711 = vtanh.pop %v1709
  %v1712 = vtanh.pop %v1710
  %v1713 = vadd.f32 %v1711, 1.0
  %v1714 = vadd.f32 %v1712, 1.0
  %v1715 = vmul.f32 %v1713, 0.5
  %v1716 = vmul.f32 %v1714, 0.5
  %v1717 = vmul.f32 %v1702, 0.5
  %v1718 = vmul.f32 %v1706, 0.5
  %v1719 = vtanh.pop %v1717
  %v1720 = vtanh.pop %v1718
  %v1721 = vadd.f32 %v1719, 1.0
  %v1722 = vadd.f32 %v1720, 1.0
  %v1723 = vmul.f32 %v1721, 0.5
  %v1724 = vmul.f32 %v1722, 0.5
  %v1725 = vtanh.pop %v1703
  %v1726 = vtanh.pop %v1707
  %v1727 = vmul.f32 %v1704, 0.5
  %v1728 = vmul.f32 %v1708, 0.5
  %v1729 = vtanh.pop %v1727
  %v1730 = vtanh.pop %v1728
  %v1731 = vadd.f32 %v1729, 1.0
  %v1732 = vadd.f32 %v1730, 1.0
  %v1733 = vmul.f32 %v1731, 0.5
  %v1734 = vmul.f32 %v1732, 0.5
  %v1735 = vmul.f32 %v1723, %v1586
  %v1736 = vmul.f32 %v1724, %v1587
  %v1737 = vmul.f32 %v1715, %v1725
  %v1738 = vmul.f32 %v1716, %v1726
  %v1739 = vadd.f32 %v1735, %v1737
  %v1740 = vadd.f32 %v1736, %v1738
  %v1741 = vtanh.pop %v1739
  %v1742 = vtanh.pop %v1740
  %v1743 = vmul.f32 %v1733, %v1741
  %v1744 = vmul.f32 %v1734, %v1742
  %vm1745 = vcmp.eq.s32.totalorder %v225, 3
  %vm1746 = vcmp.eq.s32.totalorder %v226, 3
  %v1747 = vsel %vm1745, 1, 0
  %v1748 = vsel %vm1746, 1, 0
  %1749 = vset.pattern.permute.xlu0 0
  %1750 = vperm.xlu0 %1749, %v1747
  %v1751 = vpop.permute.xlu0 %1750
  %1752 = vset.pattern.permute.xlu0 0
  %1753 = vperm.xlu0 %1752, %v1748
  %v1754 = vpop.permute.xlu0 %1753
  %vm1755 = vcmp.eq.s32.totalorder %v1751, 1
  %vm1756 = vcmp.eq.s32.totalorder %v1754, 1
  %v1757 = vsel %vm1755, %v1743, %v1604
  %v1758 = vsel %vm1756, %v1744, %v1605
  %v1759 = vld [vmem:[#allocation2 + $0x100] sm:$0xff]
  %v1760 = vld [vmem:[#allocation2 + $0x108] sm:$0xff]
  %v1761 = vld [vmem:[#allocation2 + $0x110] sm:$0xff]
  %v1762 = vld [vmem:[#allocation2 + $0x118] sm:$0xff]
  %v1763 = vld [vmem:[#allocation2 + $0x120] sm:$0xff]
  %v1764 = vld [vmem:[#allocation2 + $0x128] sm:$0xff]
  %v1765 = vld [vmem:[#allocation2 + $0x130] sm:$0xff]
  %v1766 = vld [vmem:[#allocation2 + $0x138] sm:$0xff]
  %v1767 = vpack.c.bf16 %v1744, %v1743
  %1768 = vmatprep.subr.bf16.mxu0 %v1093
  %1769 = vmatpush1.bf16.msra.mxu0 %v1092
  %1770 = vmatprep.subr.bf16.mxu0 %v1097
  %1771 = vmatpush1.bf16.msra.mxu0 %v1096
  %1772 = vmatprep.subr.bf16.mxu0 %v1101
  %1773 = vmatpush1.bf16.msra.mxu0 %v1100
  %1774 = vmatprep.subr.bf16.mxu0 %v1105
  %1775 = vmatpush1.bf16.msra.mxu0 %v1104
  %1776 = vmatprep.subr.bf16.mxu0 %v1109
  %1777 = vmatpush1.bf16.msra.mxu0 %v1108
  %1778 = vmatprep.subr.bf16.mxu0 %v1113
  %1779 = vmatpush1.bf16.msra.mxu0 %v1112
  %1780 = vmatprep.subr.bf16.mxu0 %v1117
  %1781 = vmatpush1.bf16.msra.mxu0 %v1116
  %1782 = vmatprep.subr.bf16.mxu0 %v1121
  %1783 = vmatpush1.bf16.msra.mxu0 %v1120
  %1784 = vmatprep.subr.bf16.mxu0 0
  %1785 = vmatpush1.bf16.msra.mxu0 0
  %1786 = vmatprep.subr.bf16.mxu0 0
  %1787 = vmatpush1.bf16.msra.mxu0 0
  %1788 = vmatprep.subr.bf16.mxu0 0
  %1789 = vmatpush1.bf16.msra.mxu0 0
  %1790 = vmatprep.subr.bf16.mxu0 0
  %1791 = vmatpush1.bf16.msra.mxu0 0
  %1792 = vmatprep.subr.bf16.mxu0 0
  %1793 = vmatpush1.bf16.msra.mxu0 0
  %1794 = vmatprep.subr.bf16.mxu0 0
  %1795 = vmatpush1.bf16.msra.mxu0 0
  %1796 = vmatprep.subr.bf16.mxu0 0
  %1797 = vmatpush1.bf16.msra.mxu0 0
  %1798 = vmatprep.subr.bf16.mxu0 0
  %1799 = vmatpush1.bf16.msra.mxu0 0
  %1800 = vmatprep.mubr.bf16.mxu0 0
  %1801 = vmatmul.mubr.bf16.gmra.mrb[0].mxu0 %v1767
  %v1802 = vpop.f32.mrb[0].mxu0
  %v1803 = vadd.f32 0.0, %v1802
  %v1804 = vpop.f32.mrb[0].mxu0
  %v1805 = vadd.f32 0.0, %v1804
  %v1806 = vpop.f32.mrb[0].mxu0
  %v1807 = vadd.f32 0.0, %v1806
  %v1808 = vpop.f32.mrb[0].mxu0
  %v1809 = vadd.f32 0.0, %v1808
  %1810 = vdwg.mxu0
  %1811 = vmatprep.subr.bf16.mxu0 %v1095
  %1812 = vmatpush1.bf16.msra.mxu0 %v1094
  %1813 = vmatprep.subr.bf16.mxu0 %v1099
  %1814 = vmatpush1.bf16.msra.mxu0 %v1098
  %1815 = vmatprep.subr.bf16.mxu0 %v1103
  %1816 = vmatpush1.bf16.msra.mxu0 %v1102
  %1817 = vmatprep.subr.bf16.mxu0 %v1107
  %1818 = vmatpush1.bf16.msra.mxu0 %v1106
  %1819 = vmatprep.subr.bf16.mxu0 %v1111
  %1820 = vmatpush1.bf16.msra.mxu0 %v1110
  %1821 = vmatprep.subr.bf16.mxu0 %v1115
  %1822 = vmatpush1.bf16.msra.mxu0 %v1114
  %1823 = vmatprep.subr.bf16.mxu0 %v1119
  %1824 = vmatpush1.bf16.msra.mxu0 %v1118
  %1825 = vmatprep.subr.bf16.mxu0 %v1123
  %1826 = vmatpush1.bf16.msra.mxu0 %v1122
  %1827 = vmatprep.subr.bf16.mxu0 0
  %1828 = vmatpush1.bf16.msra.mxu0 0
  %1829 = vmatprep.subr.bf16.mxu0 0
  %1830 = vmatpush1.bf16.msra.mxu0 0
  %1831 = vmatprep.subr.bf16.mxu0 0
  %1832 = vmatpush1.bf16.msra.mxu0 0
  %1833 = vmatprep.subr.bf16.mxu0 0
  %1834 = vmatpush1.bf16.msra.mxu0 0
  %1835 = vmatprep.subr.bf16.mxu0 0
  %1836 = vmatpush1.bf16.msra.mxu0 0
  %1837 = vmatprep.subr.bf16.mxu0 0
  %1838 = vmatpush1.bf16.msra.mxu0 0
  %1839 = vmatprep.subr.bf16.mxu0 0
  %1840 = vmatpush1.bf16.msra.mxu0 0
  %1841 = vmatprep.subr.bf16.mxu0 0
  %1842 = vmatpush1.bf16.msra.mxu0 0
  %1843 = vmatprep.mubr.bf16.mxu0 0
  %1844 = vmatmul.mubr.bf16.gmra.mrb[0].mxu0 %v1767
  %v1845 = vpop.f32.mrb[0].mxu0
  %v1846 = vadd.f32 0.0, %v1845
  %v1847 = vpop.f32.mrb[0].mxu0
  %v1848 = vadd.f32 0.0, %v1847
  %v1849 = vpop.f32.mrb[0].mxu0
  %v1850 = vadd.f32 0.0, %v1849
  %v1851 = vpop.f32.mrb[0].mxu0
  %v1852 = vadd.f32 0.0, %v1851
  %1853 = vdwg.mxu0
  %v1854 = vadd.f32 %v1759, %v1803
  %v1855 = vadd.f32 %v1760, %v1805
  %v1856 = vadd.f32 %v1761, %v1846
  %v1857 = vadd.f32 %v1762, %v1848
  %v1858 = vadd.f32 %v1763, %v1807
  %v1859 = vadd.f32 %v1764, %v1809
  %v1860 = vadd.f32 %v1765, %v1850
  %v1861 = vadd.f32 %v1766, %v1852
  %v1862 = vmul.f32 %v1854, 0.5
  %v1863 = vmul.f32 %v1858, 0.5
  %v1864 = vtanh.pop %v1862
  %v1865 = vtanh.pop %v1863
  %v1866 = vadd.f32 %v1864, 1.0
  %v1867 = vadd.f32 %v1865, 1.0
  %v1868 = vmul.f32 %v1866, 0.5
  %v1869 = vmul.f32 %v1867, 0.5
  %v1870 = vmul.f32 %v1855, 0.5
  %v1871 = vmul.f32 %v1859, 0.5
  %v1872 = vtanh.pop %v1870
  %v1873 = vtanh.pop %v1871
  %v1874 = vadd.f32 %v1872, 1.0
  %v1875 = vadd.f32 %v1873, 1.0
  %v1876 = vmul.f32 %v1874, 0.5
  %v1877 = vmul.f32 %v1875, 0.5
  %v1878 = vtanh.pop %v1856
  %v1879 = vtanh.pop %v1860
  %v1880 = vmul.f32 %v1857, 0.5
  %v1881 = vmul.f32 %v1861, 0.5
  %v1882 = vtanh.pop %v1880
  %v1883 = vtanh.pop %v1881
  %v1884 = vadd.f32 %v1882, 1.0
  %v1885 = vadd.f32 %v1883, 1.0
  %v1886 = vmul.f32 %v1884, 0.5
  %v1887 = vmul.f32 %v1885, 0.5
  %v1888 = vmul.f32 %v1876, %v1739
  %v1889 = vmul.f32 %v1877, %v1740
  %v1890 = vmul.f32 %v1868, %v1878
  %v1891 = vmul.f32 %v1869, %v1879
  %v1892 = vadd.f32 %v1888, %v1890
  %v1893 = vadd.f32 %v1889, %v1891
  %v1894 = vtanh.pop %v1892
  %v1895 = vtanh.pop %v1893
  %v1896 = vmul.f32 %v1886, %v1894
  %v1897 = vmul.f32 %v1887, %v1895
  %vm1898 = vcmp.eq.s32.totalorder %v225, 4
  %vm1899 = vcmp.eq.s32.totalorder %v226, 4
  %v1900 = vsel %vm1898, 1, 0
  %v1901 = vsel %vm1899, 1, 0
  %1902 = vset.pattern.permute.xlu0 0
  %1903 = vperm.xlu0 %1902, %v1900
  %v1904 = vpop.permute.xlu0 %1903
  %1905 = vset.pattern.permute.xlu0 0
  %1906 = vperm.xlu0 %1905, %v1901
  %v1907 = vpop.permute.xlu0 %1906
  %vm1908 = vcmp.eq.s32.totalorder %v1904, 1
  %vm1909 = vcmp.eq.s32.totalorder %v1907, 1
  %v1910 = vsel %vm1908, %v1896, %v1757
  %v1911 = vsel %vm1909, %v1897, %v1758
  %v1912 = vld [vmem:[#allocation2 + $0x140] sm:$0xff]
  %v1913 = vld [vmem:[#allocation2 + $0x148] sm:$0xff]
  %v1914 = vld [vmem:[#allocation2 + $0x150] sm:$0xff]
  %v1915 = vld [vmem:[#allocation2 + $0x158] sm:$0xff]
  %v1916 = vld [vmem:[#allocation2 + $0x160] sm:$0xff]
  %v1917 = vld [vmem:[#allocation2 + $0x168] sm:$0xff]
  %v1918 = vld [vmem:[#allocation2 + $0x170] sm:$0xff]
  %v1919 = vld [vmem:[#allocation2 + $0x178] sm:$0xff]
  %v1920 = vpack.c.bf16 %v1897, %v1896
  %1921 = vmatprep.subr.bf16.mxu0 %v1093
  %1922 = vmatpush1.bf16.msra.mxu0 %v1092
  %1923 = vmatprep.subr.bf16.mxu0 %v1097
  %1924 = vmatpush1.bf16.msra.mxu0 %v1096
  %1925 = vmatprep.subr.bf16.mxu0 %v1101
  %1926 = vmatpush1.bf16.msra.mxu0 %v1100
  %1927 = vmatprep.subr.bf16.mxu0 %v1105
  %1928 = vmatpush1.bf16.msra.mxu0 %v1104
  %1929 = vmatprep.subr.bf16.mxu0 %v1109
  %1930 = vmatpush1.bf16.msra.mxu0 %v1108
  %1931 = vmatprep.subr.bf16.mxu0 %v1113
  %1932 = vmatpush1.bf16.msra.mxu0 %v1112
  %1933 = vmatprep.subr.bf16.mxu0 %v1117
  %1934 = vmatpush1.bf16.msra.mxu0 %v1116
  %1935 = vmatprep.subr.bf16.mxu0 %v1121
  %1936 = vmatpush1.bf16.msra.mxu0 %v1120
  %1937 = vmatprep.subr.bf16.mxu0 0
  %1938 = vmatpush1.bf16.msra.mxu0 0
  %1939 = vmatprep.subr.bf16.mxu0 0
  %1940 = vmatpush1.bf16.msra.mxu0 0
  %1941 = vmatprep.subr.bf16.mxu0 0
  %1942 = vmatpush1.bf16.msra.mxu0 0
  %1943 = vmatprep.subr.bf16.mxu0 0
  %1944 = vmatpush1.bf16.msra.mxu0 0
  %1945 = vmatprep.subr.bf16.mxu0 0
  %1946 = vmatpush1.bf16.msra.mxu0 0
  %1947 = vmatprep.subr.bf16.mxu0 0
  %1948 = vmatpush1.bf16.msra.mxu0 0
  %1949 = vmatprep.subr.bf16.mxu0 0
  %1950 = vmatpush1.bf16.msra.mxu0 0
  %1951 = vmatprep.subr.bf16.mxu0 0
  %1952 = vmatpush1.bf16.msra.mxu0 0
  %1953 = vmatprep.mubr.bf16.mxu0 0
  %1954 = vmatmul.mubr.bf16.gmra.mrb[0].mxu0 %v1920
  %v1955 = vpop.f32.mrb[0].mxu0
  %v1956 = vadd.f32 0.0, %v1955
  %v1957 = vpop.f32.mrb[0].mxu0
  %v1958 = vadd.f32 0.0, %v1957
  %v1959 = vpop.f32.mrb[0].mxu0
  %v1960 = vadd.f32 0.0, %v1959
  %v1961 = vpop.f32.mrb[0].mxu0
  %v1962 = vadd.f32 0.0, %v1961
  %1963 = vdwg.mxu0
  %1964 = vmatprep.subr.bf16.mxu0 %v1095
  %1965 = vmatpush1.bf16.msra.mxu0 %v1094
  %1966 = vmatprep.subr.bf16.mxu0 %v1099
  %1967 = vmatpush1.bf16.msra.mxu0 %v1098
  %1968 = vmatprep.subr.bf16.mxu0 %v1103
  %1969 = vmatpush1.bf16.msra.mxu0 %v1102
  %1970 = vmatprep.subr.bf16.mxu0 %v1107
  %1971 = vmatpush1.bf16.msra.mxu0 %v1106
  %1972 = vmatprep.subr.bf16.mxu0 %v1111
  %1973 = vmatpush1.bf16.msra.mxu0 %v1110
  %1974 = vmatprep.subr.bf16.mxu0 %v1115
  %1975 = vmatpush1.bf16.msra.mxu0 %v1114
  %1976 = vmatprep.subr.bf16.mxu0 %v1119
  %1977 = vmatpush1.bf16.msra.mxu0 %v1118
  %1978 = vmatprep.subr.bf16.mxu0 %v1123
  %1979 = vmatpush1.bf16.msra.mxu0 %v1122
  %1980 = vmatprep.subr.bf16.mxu0 0
  %1981 = vmatpush1.bf16.msra.mxu0 0
  %1982 = vmatprep.subr.bf16.mxu0 0
  %1983 = vmatpush1.bf16.msra.mxu0 0
  %1984 = vmatprep.subr.bf16.mxu0 0
  %1985 = vmatpush1.bf16.msra.mxu0 0
  %1986 = vmatprep.subr.bf16.mxu0 0
  %1987 = vmatpush1.bf16.msra.mxu0 0
  %1988 = vmatprep.subr.bf16.mxu0 0
  %1989 = vmatpush1.bf16.msra.mxu0 0
  %1990 = vmatprep.subr.bf16.mxu0 0
  %1991 = vmatpush1.bf16.msra.mxu0 0
  %1992 = vmatprep.subr.bf16.mxu0 0
  %1993 = vmatpush1.bf16.msra.mxu0 0
  %1994 = vmatprep.subr.bf16.mxu0 0
  %1995 = vmatpush1.bf16.msra.mxu0 0
  %1996 = vmatprep.mubr.bf16.mxu0 0
  %1997 = vmatmul.mubr.bf16.gmra.mrb[0].mxu0 %v1920
  %v1998 = vpop.f32.mrb[0].mxu0
  %v1999 = vadd.f32 0.0, %v1998
  %v2000 = vpop.f32.mrb[0].mxu0
  %v2001 = vadd.f32 0.0, %v2000
  %v2002 = vpop.f32.mrb[0].mxu0
  %v2003 = vadd.f32 0.0, %v2002
  %v2004 = vpop.f32.mrb[0].mxu0
  %v2005 = vadd.f32 0.0, %v2004
  %2006 = vdwg.mxu0
  %v2007 = vadd.f32 %v1912, %v1956
  %v2008 = vadd.f32 %v1913, %v1958
  %v2009 = vadd.f32 %v1914, %v1999
  %v2010 = vadd.f32 %v1915, %v2001
  %v2011 = vadd.f32 %v1916, %v1960
  %v2012 = vadd.f32 %v1917, %v1962
  %v2013 = vadd.f32 %v1918, %v2003
  %v2014 = vadd.f32 %v1919, %v2005
  %v2015 = vmul.f32 %v2007, 0.5
  %v2016 = vmul.f32 %v2011, 0.5
  %v2017 = vtanh.pop %v2015
  %v2018 = vtanh.pop %v2016
  %v2019 = vadd.f32 %v2017, 1.0
  %v2020 = vadd.f32 %v2018, 1.0
  %v2021 = vmul.f32 %v2019, 0.5
  %v2022 = vmul.f32 %v2020, 0.5
  %v2023 = vmul.f32 %v2008, 0.5
  %v2024 = vmul.f32 %v2012, 0.5
  %v2025 = vtanh.pop %v2023
  %v2026 = vtanh.pop %v2024
  %v2027 = vadd.f32 %v2025, 1.0
  %v2028 = vadd.f32 %v2026, 1.0
  %v2029 = vmul.f32 %v2027, 0.5
  %v2030 = vmul.f32 %v2028, 0.5
  %v2031 = vtanh.pop %v2009
  %v2032 = vtanh.pop %v2013
  %v2033 = vmul.f32 %v2010, 0.5
  %v2034 = vmul.f32 %v2014, 0.5
  %v2035 = vtanh.pop %v2033
  %v2036 = vtanh.pop %v2034
  %v2037 = vadd.f32 %v2035, 1.0
  %v2038 = vadd.f32 %v2036, 1.0
  %v2039 = vmul.f32 %v2037, 0.5
  %v2040 = vmul.f32 %v2038, 0.5
  %v2041 = vmul.f32 %v2029, %v1892
  %v2042 = vmul.f32 %v2030, %v1893
  %v2043 = vmul.f32 %v2021, %v2031
  %v2044 = vmul.f32 %v2022, %v2032
  %v2045 = vadd.f32 %v2041, %v2043
  %v2046 = vadd.f32 %v2042, %v2044
  %v2047 = vtanh.pop %v2045
  %v2048 = vtanh.pop %v2046
  %v2049 = vmul.f32 %v2039, %v2047
  %v2050 = vmul.f32 %v2040, %v2048
  %vm2051 = vcmp.eq.s32.totalorder %v225, 5
  %vm2052 = vcmp.eq.s32.totalorder %v226, 5
  %v2053 = vsel %vm2051, 1, 0
  %v2054 = vsel %vm2052, 1, 0
  %2055 = vset.pattern.permute.xlu0 0
  %2056 = vperm.xlu0 %2055, %v2053
  %v2057 = vpop.permute.xlu0 %2056
  %2058 = vset.pattern.permute.xlu0 0
  %2059 = vperm.xlu0 %2058, %v2054
  %v2060 = vpop.permute.xlu0 %2059
  %vm2061 = vcmp.eq.s32.totalorder %v2057, 1
  %vm2062 = vcmp.eq.s32.totalorder %v2060, 1
  %v2063 = vsel %vm2061, %v2049, %v1910
  %v2064 = vsel %vm2062, %v2050, %v1911
  %v2065 = vld [vmem:[#allocation2 + $0x180] sm:$0xff]
  %v2066 = vld [vmem:[#allocation2 + $0x188] sm:$0xff]
  %v2067 = vld [vmem:[#allocation2 + $0x190] sm:$0xff]
  %v2068 = vld [vmem:[#allocation2 + $0x198] sm:$0xff]
  %v2069 = vld [vmem:[#allocation2 + $0x1a0] sm:$0xff]
  %v2070 = vld [vmem:[#allocation2 + $0x1a8] sm:$0xff]
  %v2071 = vld [vmem:[#allocation2 + $0x1b0] sm:$0xff]
  %v2072 = vld [vmem:[#allocation2 + $0x1b8] sm:$0xff]
  %v2073 = vpack.c.bf16 %v2050, %v2049
  %2074 = vmatprep.subr.bf16.mxu0 %v1093
  %2075 = vmatpush1.bf16.msra.mxu0 %v1092
  %2076 = vmatprep.subr.bf16.mxu0 %v1097
  %2077 = vmatpush1.bf16.msra.mxu0 %v1096
  %2078 = vmatprep.subr.bf16.mxu0 %v1101
  %2079 = vmatpush1.bf16.msra.mxu0 %v1100
  %2080 = vmatprep.subr.bf16.mxu0 %v1105
  %2081 = vmatpush1.bf16.msra.mxu0 %v1104
  %2082 = vmatprep.subr.bf16.mxu0 %v1109
  %2083 = vmatpush1.bf16.msra.mxu0 %v1108
  %2084 = vmatprep.subr.bf16.mxu0 %v1113
  %2085 = vmatpush1.bf16.msra.mxu0 %v1112
  %2086 = vmatprep.subr.bf16.mxu0 %v1117
  %2087 = vmatpush1.bf16.msra.mxu0 %v1116
  %2088 = vmatprep.subr.bf16.mxu0 %v1121
  %2089 = vmatpush1.bf16.msra.mxu0 %v1120
  %2090 = vmatprep.subr.bf16.mxu0 0
  %2091 = vmatpush1.bf16.msra.mxu0 0
  %2092 = vmatprep.subr.bf16.mxu0 0
  %2093 = vmatpush1.bf16.msra.mxu0 0
  %2094 = vmatprep.subr.bf16.mxu0 0
  %2095 = vmatpush1.bf16.msra.mxu0 0
  %2096 = vmatprep.subr.bf16.mxu0 0
  %2097 = vmatpush1.bf16.msra.mxu0 0
  %2098 = vmatprep.subr.bf16.mxu0 0
  %2099 = vmatpush1.bf16.msra.mxu0 0
  %2100 = vmatprep.subr.bf16.mxu0 0
  %2101 = vmatpush1.bf16.msra.mxu0 0
  %2102 = vmatprep.subr.bf16.mxu0 0
  %2103 = vmatpush1.bf16.msra.mxu0 0
  %2104 = vmatprep.subr.bf16.mxu0 0
  %2105 = vmatpush1.bf16.msra.mxu0 0
  %2106 = vmatprep.mubr.bf16.mxu0 0
  %2107 = vmatmul.mubr.bf16.gmra.mrb[0].mxu0 %v2073
  %v2108 = vpop.f32.mrb[0].mxu0
  %v2109 = vadd.f32 0.0, %v2108
  %v2110 = vpop.f32.mrb[0].mxu0
  %v2111 = vadd.f32 0.0, %v2110
  %v2112 = vpop.f32.mrb[0].mxu0
  %v2113 = vadd.f32 0.0, %v2112
  %v2114 = vpop.f32.mrb[0].mxu0
  %v2115 = vadd.f32 0.0, %v2114
  %2116 = vdwg.mxu0
  %2117 = vmatprep.subr.bf16.mxu0 %v1095
  %2118 = vmatpush1.bf16.msra.mxu0 %v1094
  %2119 = vmatprep.subr.bf16.mxu0 %v1099
  %2120 = vmatpush1.bf16.msra.mxu0 %v1098
  %2121 = vmatprep.subr.bf16.mxu0 %v1103
  %2122 = vmatpush1.bf16.msra.mxu0 %v1102
  %2123 = vmatprep.subr.bf16.mxu0 %v1107
  %2124 = vmatpush1.bf16.msra.mxu0 %v1106
  %2125 = vmatprep.subr.bf16.mxu0 %v1111
  %2126 = vmatpush1.bf16.msra.mxu0 %v1110
  %2127 = vmatprep.subr.bf16.mxu0 %v1115
  %2128 = vmatpush1.bf16.msra.mxu0 %v1114
  %2129 = vmatprep.subr.bf16.mxu0 %v1119
  %2130 = vmatpush1.bf16.msra.mxu0 %v1118
  %2131 = vmatprep.subr.bf16.mxu0 %v1123
  %2132 = vmatpush1.bf16.msra.mxu0 %v1122
  %2133 = vmatprep.subr.bf16.mxu0 0
  %2134 = vmatpush1.bf16.msra.mxu0 0
  %2135 = vmatprep.subr.bf16.mxu0 0
  %2136 = vmatpush1.bf16.msra.mxu0 0
  %2137 = vmatprep.subr.bf16.mxu0 0
  %2138 = vmatpush1.bf16.msra.mxu0 0
  %2139 = vmatprep.subr.bf16.mxu0 0
  %2140 = vmatpush1.bf16.msra.mxu0 0
  %2141 = vmatprep.subr.bf16.mxu0 0
  %2142 = vmatpush1.bf16.msra.mxu0 0
  %2143 = vmatprep.subr.bf16.mxu0 0
  %2144 = vmatpush1.bf16.msra.mxu0 0
  %2145 = vmatprep.subr.bf16.mxu0 0
  %2146 = vmatpush1.bf16.msra.mxu0 0
  %2147 = vmatprep.subr.bf16.mxu0 0
  %2148 = vmatpush1.bf16.msra.mxu0 0
  %2149 = vmatprep.mubr.bf16.mxu0 0
  %2150 = vmatmul.mubr.bf16.gmra.mrb[0].mxu0 %v2073
  %v2151 = vpop.f32.mrb[0].mxu0
  %v2152 = vadd.f32 0.0, %v2151
  %v2153 = vpop.f32.mrb[0].mxu0
  %v2154 = vadd.f32 0.0, %v2153
  %v2155 = vpop.f32.mrb[0].mxu0
  %v2156 = vadd.f32 0.0, %v2155
  %v2157 = vpop.f32.mrb[0].mxu0
  %v2158 = vadd.f32 0.0, %v2157
  %2159 = vdwg.mxu0
  %v2160 = vadd.f32 %v2065, %v2109
  %v2161 = vadd.f32 %v2066, %v2111
  %v2162 = vadd.f32 %v2067, %v2152
  %v2163 = vadd.f32 %v2068, %v2154
  %v2164 = vadd.f32 %v2069, %v2113
  %v2165 = vadd.f32 %v2070, %v2115
  %v2166 = vadd.f32 %v2071, %v2156
  %v2167 = vadd.f32 %v2072, %v2158
  %v2168 = vmul.f32 %v2160, 0.5
  %v2169 = vmul.f32 %v2164, 0.5
  %v2170 = vtanh.pop %v2168
  %v2171 = vtanh.pop %v2169
  %v2172 = vadd.f32 %v2170, 1.0
  %v2173 = vadd.f32 %v2171, 1.0
  %v2174 = vmul.f32 %v2172, 0.5
  %v2175 = vmul.f32 %v2173, 0.5
  %v2176 = vmul.f32 %v2161, 0.5
  %v2177 = vmul.f32 %v2165, 0.5
  %v2178 = vtanh.pop %v2176
  %v2179 = vtanh.pop %v2177
  %v2180 = vadd.f32 %v2178, 1.0
  %v2181 = vadd.f32 %v2179, 1.0
  %v2182 = vmul.f32 %v2180, 0.5
  %v2183 = vmul.f32 %v2181, 0.5
  %v2184 = vtanh.pop %v2162
  %v2185 = vtanh.pop %v2166
  %v2186 = vmul.f32 %v2163, 0.5
  %v2187 = vmul.f32 %v2167, 0.5
  %v2188 = vtanh.pop %v2186
  %v2189 = vtanh.pop %v2187
  %v2190 = vadd.f32 %v2188, 1.0
  %v2191 = vadd.f32 %v2189, 1.0
  %v2192 = vmul.f32 %v2190, 0.5
  %v2193 = vmul.f32 %v2191, 0.5
  %v2194 = vmul.f32 %v2182, %v2045
  %v2195 = vmul.f32 %v2183, %v2046
  %v2196 = vmul.f32 %v2174, %v2184
  %v2197 = vmul.f32 %v2175, %v2185
  %v2198 = vadd.f32 %v2194, %v2196
  %v2199 = vadd.f32 %v2195, %v2197
  %v2200 = vtanh.pop %v2198
  %v2201 = vtanh.pop %v2199
  %v2202 = vmul.f32 %v2192, %v2200
  %v2203 = vmul.f32 %v2193, %v2201
  %vm2204 = vcmp.eq.s32.totalorder %v225, 6
  %vm2205 = vcmp.eq.s32.totalorder %v226, 6
  %v2206 = vsel %vm2204, 1, 0
  %v2207 = vsel %vm2205, 1, 0
  %2208 = vset.pattern.permute.xlu0 0
  %2209 = vperm.xlu0 %2208, %v2206
  %v2210 = vpop.permute.xlu0 %2209
  %2211 = vset.pattern.permute.xlu0 0
  %2212 = vperm.xlu0 %2211, %v2207
  %v2213 = vpop.permute.xlu0 %2212
  %vm2214 = vcmp.eq.s32.totalorder %v2210, 1
  %vm2215 = vcmp.eq.s32.totalorder %v2213, 1
  %v2216 = vsel %vm2214, %v2202, %v2063
  %v2217 = vsel %vm2215, %v2203, %v2064
  %v2218 = vld [vmem:[#allocation2 + $0x1c0] sm:$0xff]
  %v2219 = vld [vmem:[#allocation2 + $0x1c8] sm:$0xff]
  %v2220 = vld [vmem:[#allocation2 + $0x1d0] sm:$0xff]
  %v2221 = vld [vmem:[#allocation2 + $0x1d8] sm:$0xff]
  %v2222 = vld [vmem:[#allocation2 + $0x1e0] sm:$0xff]
  %v2223 = vld [vmem:[#allocation2 + $0x1e8] sm:$0xff]
  %v2224 = vld [vmem:[#allocation2 + $0x1f0] sm:$0xff]
  %v2225 = vld [vmem:[#allocation2 + $0x1f8] sm:$0xff]
  %v2226 = vpack.c.bf16 %v2203, %v2202
  %2227 = vmatprep.subr.bf16.mxu0 %v1093
  %2228 = vmatpush1.bf16.msra.mxu0 %v1092
  %2229 = vmatprep.subr.bf16.mxu0 %v1097
  %2230 = vmatpush1.bf16.msra.mxu0 %v1096
  %2231 = vmatprep.subr.bf16.mxu0 %v1101
  %2232 = vmatpush1.bf16.msra.mxu0 %v1100
  %2233 = vmatprep.subr.bf16.mxu0 %v1105
  %2234 = vmatpush1.bf16.msra.mxu0 %v1104
  %2235 = vmatprep.subr.bf16.mxu0 %v1109
  %2236 = vmatpush1.bf16.msra.mxu0 %v1108
  %2237 = vmatprep.subr.bf16.mxu0 %v1113
  %2238 = vmatpush1.bf16.msra.mxu0 %v1112
  %2239 = vmatprep.subr.bf16.mxu0 %v1117
  %2240 = vmatpush1.bf16.msra.mxu0 %v1116
  %2241 = vmatprep.subr.bf16.mxu0 %v1121
  %2242 = vmatpush1.bf16.msra.mxu0 %v1120
  %2243 = vmatprep.subr.bf16.mxu0 0
  %2244 = vmatpush1.bf16.msra.mxu0 0
  %2245 = vmatprep.subr.bf16.mxu0 0
  %2246 = vmatpush1.bf16.msra.mxu0 0
  %2247 = vmatprep.subr.bf16.mxu0 0
  %2248 = vmatpush1.bf16.msra.mxu0 0
  %2249 = vmatprep.subr.bf16.mxu0 0
  %2250 = vmatpush1.bf16.msra.mxu0 0
  %2251 = vmatprep.subr.bf16.mxu0 0
  %2252 = vmatpush1.bf16.msra.mxu0 0
  %2253 = vmatprep.subr.bf16.mxu0 0
  %2254 = vmatpush1.bf16.msra.mxu0 0
  %2255 = vmatprep.subr.bf16.mxu0 0
  %2256 = vmatpush1.bf16.msra.mxu0 0
  %2257 = vmatprep.subr.bf16.mxu0 0
  %2258 = vmatpush1.bf16.msra.mxu0 0
  %2259 = vmatprep.mubr.bf16.mxu0 0
  %2260 = vmatmul.mubr.bf16.gmra.mrb[0].mxu0 %v2226
  %v2261 = vpop.f32.mrb[0].mxu0
  %v2262 = vadd.f32 0.0, %v2261
  %v2263 = vpop.f32.mrb[0].mxu0
  %v2264 = vadd.f32 0.0, %v2263
  %v2265 = vpop.f32.mrb[0].mxu0
  %v2266 = vadd.f32 0.0, %v2265
  %v2267 = vpop.f32.mrb[0].mxu0
  %v2268 = vadd.f32 0.0, %v2267
  %2269 = vdwg.mxu0
  %2270 = vmatprep.subr.bf16.mxu0 %v1095
  %2271 = vmatpush1.bf16.msra.mxu0 %v1094
  %2272 = vmatprep.subr.bf16.mxu0 %v1099
  %2273 = vmatpush1.bf16.msra.mxu0 %v1098
  %2274 = vmatprep.subr.bf16.mxu0 %v1103
  %2275 = vmatpush1.bf16.msra.mxu0 %v1102
  %2276 = vmatprep.subr.bf16.mxu0 %v1107
  %2277 = vmatpush1.bf16.msra.mxu0 %v1106
  %2278 = vmatprep.subr.bf16.mxu0 %v1111
  %2279 = vmatpush1.bf16.msra.mxu0 %v1110
  %2280 = vmatprep.subr.bf16.mxu0 %v1115
  %2281 = vmatpush1.bf16.msra.mxu0 %v1114
  %2282 = vmatprep.subr.bf16.mxu0 %v1119
  %2283 = vmatpush1.bf16.msra.mxu0 %v1118
  %2284 = vmatprep.subr.bf16.mxu0 %v1123
  %2285 = vmatpush1.bf16.msra.mxu0 %v1122
  %2286 = vmatprep.subr.bf16.mxu0 0
  %2287 = vmatpush1.bf16.msra.mxu0 0
  %2288 = vmatprep.subr.bf16.mxu0 0
  %2289 = vmatpush1.bf16.msra.mxu0 0
  %2290 = vmatprep.subr.bf16.mxu0 0
  %2291 = vmatpush1.bf16.msra.mxu0 0
  %2292 = vmatprep.subr.bf16.mxu0 0
  %2293 = vmatpush1.bf16.msra.mxu0 0
  %2294 = vmatprep.subr.bf16.mxu0 0
  %2295 = vmatpush1.bf16.msra.mxu0 0
  %2296 = vmatprep.subr.bf16.mxu0 0
  %2297 = vmatpush1.bf16.msra.mxu0 0
  %2298 = vmatprep.subr.bf16.mxu0 0
  %2299 = vmatpush1.bf16.msra.mxu0 0
  %2300 = vmatprep.subr.bf16.mxu0 0
  %2301 = vmatpush1.bf16.msra.mxu0 0
  %2302 = vmatprep.mubr.bf16.mxu0 0
  %2303 = vmatmul.mubr.bf16.gmra.mrb[0].mxu0 %v2226
  %v2304 = vpop.f32.mrb[0].mxu0
  %v2305 = vadd.f32 0.0, %v2304
  %v2306 = vpop.f32.mrb[0].mxu0
  %v2307 = vadd.f32 0.0, %v2306
  %v2308 = vpop.f32.mrb[0].mxu0
  %v2309 = vadd.f32 0.0, %v2308
  %v2310 = vpop.f32.mrb[0].mxu0
  %v2311 = vadd.f32 0.0, %v2310
  %2312 = vdwg.mxu0
  %v2313 = vadd.f32 %v2218, %v2262
  %v2314 = vadd.f32 %v2219, %v2264
  %v2315 = vadd.f32 %v2220, %v2305
  %v2316 = vadd.f32 %v2221, %v2307
  %v2317 = vadd.f32 %v2222, %v2266
  %v2318 = vadd.f32 %v2223, %v2268
  %v2319 = vadd.f32 %v2224, %v2309
  %v2320 = vadd.f32 %v2225, %v2311
  %v2321 = vmul.f32 %v2313, 0.5
  %v2322 = vmul.f32 %v2317, 0.5
  %v2323 = vtanh.pop %v2321
  %v2324 = vtanh.pop %v2322
  %v2325 = vadd.f32 %v2323, 1.0
  %v2326 = vadd.f32 %v2324, 1.0
  %v2327 = vmul.f32 %v2325, 0.5
  %v2328 = vmul.f32 %v2326, 0.5
  %v2329 = vmul.f32 %v2314, 0.5
  %v2330 = vmul.f32 %v2318, 0.5
  %v2331 = vtanh.pop %v2329
  %v2332 = vtanh.pop %v2330
  %v2333 = vadd.f32 %v2331, 1.0
  %v2334 = vadd.f32 %v2332, 1.0
  %v2335 = vmul.f32 %v2333, 0.5
  %v2336 = vmul.f32 %v2334, 0.5
  %v2337 = vtanh.pop %v2315
  %v2338 = vtanh.pop %v2319
  %v2339 = vmul.f32 %v2316, 0.5
  %v2340 = vmul.f32 %v2320, 0.5
  %v2341 = vtanh.pop %v2339
  %v2342 = vtanh.pop %v2340
  %v2343 = vadd.f32 %v2341, 1.0
  %v2344 = vadd.f32 %v2342, 1.0
  %v2345 = vmul.f32 %v2343, 0.5
  %v2346 = vmul.f32 %v2344, 0.5
  %v2347 = vmul.f32 %v2335, %v2198
  %v2348 = vmul.f32 %v2336, %v2199
  %v2349 = vmul.f32 %v2327, %v2337
  %v2350 = vmul.f32 %v2328, %v2338
  %v2351 = vadd.f32 %v2347, %v2349
  %v2352 = vadd.f32 %v2348, %v2350
  %v2353 = vtanh.pop %v2351
  %v2354 = vtanh.pop %v2352
  %v2355 = vmul.f32 %v2345, %v2353
  %v2356 = vmul.f32 %v2346, %v2354
  %vm2357 = vcmp.eq.s32.totalorder %v225, 7
  %vm2358 = vcmp.eq.s32.totalorder %v226, 7
  %v2359 = vsel %vm2357, 1, 0
  %v2360 = vsel %vm2358, 1, 0
  %2361 = vset.pattern.permute.xlu0 0
  %2362 = vperm.xlu0 %2361, %v2359
  %v2363 = vpop.permute.xlu0 %2362
  %2364 = vset.pattern.permute.xlu0 0
  %2365 = vperm.xlu0 %2364, %v2360
  %v2366 = vpop.permute.xlu0 %2365
  %vm2367 = vcmp.eq.s32.totalorder %v2363, 1
  %vm2368 = vcmp.eq.s32.totalorder %v2366, 1
  %v2369 = vsel %vm2367, %v2355, %v2216
  %v2370 = vsel %vm2368, %v2356, %v2217
  %s2371 = smul.u32 4, 16
  %s2372 = smul.u32 %s2371, 1
  %s2373 = sshll.u32 %s2372, 4
  %2374 = dma.done [#allocation6], %s2373
  %v2375 = vpack.c.bf16 %v2370, %v2369
  %v2376 = vld [vmem:[#allocation3] sm:$0xff]
  %v2377 = vld [vmem:[#allocation3 + $0x8] sm:$0xff]
  %v2378 = vld [vmem:[#allocation3 + $0x10] sm:$0xff]
  %v2379 = vld [vmem:[#allocation3 + $0x18] sm:$0xff]
  %v2380 = vld [vmem:[#allocation3 + $0x20] sm:$0xff]
  %v2381 = vld [vmem:[#allocation3 + $0x28] sm:$0xff]
  %v2382 = vld [vmem:[#allocation3 + $0x30] sm:$0xff]
  %v2383 = vld [vmem:[#allocation3 + $0x38] sm:$0xff]
  %v2384 = vld [vmem:[%s9] sm:$0x1]
  %v2386 = vlaneseq
  %v2387 = vshrl.u32 %v2386, 7
  %v2388 = vsub.s32 0, %v2387
  %v2389 = vrot.slane %v2384, %v2388
  %2391 = vmatprep.subr.bf16.mxu0 0
  %2392 = vmatpush1.bf16.msra.mxu0 %v2376
  %2393 = vmatprep.subr.bf16.mxu0 0
  %2394 = vmatpush1.bf16.msra.mxu0 %v2377
  %2395 = vmatprep.subr.bf16.mxu0 0
  %2396 = vmatpush1.bf16.msra.mxu0 %v2378
  %2397 = vmatprep.subr.bf16.mxu0 0
  %2398 = vmatpush1.bf16.msra.mxu0 %v2379
  %2399 = vmatprep.subr.bf16.mxu0 0
  %2400 = vmatpush1.bf16.msra.mxu0 %v2380
  %2401 = vmatprep.subr.bf16.mxu0 0
  %2402 = vmatpush1.bf16.msra.mxu0 %v2381
  %2403 = vmatprep.subr.bf16.mxu0 0
  %2404 = vmatpush1.bf16.msra.mxu0 %v2382
  %2405 = vmatprep.subr.bf16.mxu0 0
  %2406 = vmatpush1.bf16.msra.mxu0 %v2383
  %2407 = vmatprep.subr.bf16.mxu0 0
  %2408 = vmatpush1.bf16.msra.mxu0 0
  %2409 = vmatprep.subr.bf16.mxu0 0
  %2410 = vmatpush1.bf16.msra.mxu0 0
  %2411 = vmatprep.subr.bf16.mxu0 0
  %2412 = vmatpush1.bf16.msra.mxu0 0
  %2413 = vmatprep.subr.bf16.mxu0 0
  %2414 = vmatpush1.bf16.msra.mxu0 0
  %2415 = vmatprep.subr.bf16.mxu0 0
  %2416 = vmatpush1.bf16.msra.mxu0 0
  %2417 = vmatprep.subr.bf16.mxu0 0
  %2418 = vmatpush1.bf16.msra.mxu0 0
  %2419 = vmatprep.subr.bf16.mxu0 0
  %2420 = vmatpush1.bf16.msra.mxu0 0
  %2421 = vmatprep.subr.bf16.mxu0 0
  %2422 = vmatpush1.bf16.msra.mxu0 0
  %2423 = vmatprep.mubr.bf16.mxu0 0
  %2424 = vmatmul.mubr.bf16.gmra.mrb[0].mxu0 %v2375
  %v2425 = vpop.f32.mrb[0].mxu0
  %v2426 = vadd.f32 %v2389, %v2425
  %v2427 = vpop.f32.mrb[0].mxu0
  %v2428 = vpop.f32.mrb[0].mxu0
  %v2429 = vadd.f32 %v2389, %v2428
  %v2430 = vpop.f32.mrb[0].mxu0
  %2431 = vdwg.mxu0
  %v2432 = vmax.f32 %v2426, 0.0
  %v2433 = vmax.f32 %v2429, 0.0
  %v2434 = vld [vmem:[%s2] sm:$0xf]
  %v2435 = vld [vmem:[%s2 + $0x4] sm:$0xf]
  %v2436 = vld [vmem:[%s10] sm:$0xf]
  %v2437 = vld [vmem:[%s10 + $0x4] sm:$0xf]
  %v2438 = vld [vmem:[%s10 + $0x8] sm:$0x3]
  %v2439 = vld [vmem:[%s11] sm:$0x1]
  %v2441 = vlaneseq
  %v2442 = vshrl.u32 %v2441, 7
  %v2443 = vsub.s32 0, %v2442
  %v2444 = vrot.slane %v2439, %v2443
  %v2448 = vunpack.c.l.b16 %v2434
  %v2449 = vunpack.c.l.b16 %v2435
  %v2450 = vpack.c.b16 %v2449, %v2448
  %v2454 = vunpack.c.l.b16 %v2436
  %v2455 = vunpack.c.l.b16 %v2437
  %v2456 = vunpack.c.l.b16 %v2438
  %v2457 = vpack.c.b16 %v2455, %v2454
  %v2458 = vpack.c.b16 %v2456, %v2456
  %v2461 = vsel %vm302, %v2450, 0
  %v2464 = vsel %vm327, %v2458, 0
  %2466 = vmatprep.subr.bf16.mxu0 0
  %2467 = vmatpush1.bf16.msra.mxu0 %v2457
  %2468 = vmatprep.subr.bf16.mxu0 0
  %2469 = vmatpush1.bf16.msra.mxu0 %v2464
  %2470 = vmatprep.subr.bf16.mxu0 0
  %2471 = vmatpush1.bf16.msra.mxu0 0
  %2472 = vmatprep.subr.bf16.mxu0 0
  %2473 = vmatpush1.bf16.msra.mxu0 0
  %2474 = vmatprep.subr.bf16.mxu0 0
  %2475 = vmatpush1.bf16.msra.mxu0 0
  %2476 = vmatprep.subr.bf16.mxu0 0
  %2477 = vmatpush1.bf16.msra.mxu0 0
  %2478 = vmatprep.subr.bf16.mxu0 0
  %2479 = vmatpush1.bf16.msra.mxu0 0
  %2480 = vmatprep.subr.bf16.mxu0 0
  %2481 = vmatpush1.bf16.msra.mxu0 0
  %2482 = vmatprep.subr.bf16.mxu0 0
  %2483 = vmatpush1.bf16.msra.mxu0 0
  %2484 = vmatprep.subr.bf16.mxu0 0
  %2485 = vmatpush1.bf16.msra.mxu0 0
  %2486 = vmatprep.subr.bf16.mxu0 0
  %2487 = vmatpush1.bf16.msra.mxu0 0
  %2488 = vmatprep.subr.bf16.mxu0 0
  %2489 = vmatpush1.bf16.msra.mxu0 0
  %2490 = vmatprep.subr.bf16.mxu0 0
  %2491 = vmatpush1.bf16.msra.mxu0 0
  %2492 = vmatprep.subr.bf16.mxu0 0
  %2493 = vmatpush1.bf16.msra.mxu0 0
  %2494 = vmatprep.subr.bf16.mxu0 0
  %2495 = vmatpush1.bf16.msra.mxu0 0
  %2496 = vmatprep.subr.bf16.mxu0 0
  %2497 = vmatpush1.bf16.msra.mxu0 0
  %2498 = vmatprep.mubr.bf16.mxu0 0
  %2499 = vmatmul.mubr.bf16.gmra.mrb[0].mxu0 %v2461
  %v2500 = vpop.f32.mrb[0].mxu0
  %v2501 = vadd.f32 %v2444, %v2500
  %v2502 = vpop.f32.mrb[0].mxu0
  %v2503 = vpop.f32.mrb[0].mxu0
  %v2504 = vadd.f32 %v2444, %v2503
  %v2505 = vpop.f32.mrb[0].mxu0
  %2506 = vdwg.mxu0
  %v2507 = vmax.f32 %v2501, 0.0
  %v2508 = vmax.f32 %v2504, 0.0
  %s2509 = sshll.u32 %s2372, 4
  %2510 = dma.done %s111, %s2509
  %s2511 = sshll.u32 %s2372, 4
  %2512 = dma.done %s168, %s2511
  %v2513 = vpack.c.bf16 %v2433, %v2432
  %v2514 = vld [vmem:[#allocation4] sm:$0xff]
  %v2515 = vld [vmem:[#allocation4 + $0x8] sm:$0xff]
  %v2516 = vld [vmem:[#allocation4 + $0x10] sm:$0xff]
  %v2517 = vld [vmem:[#allocation4 + $0x18] sm:$0xff]
  %v2518 = vld [vmem:[#allocation4 + $0x20] sm:$0xff]
  %v2519 = vld [vmem:[#allocation4 + $0x28] sm:$0xff]
  %v2520 = vld [vmem:[#allocation4 + $0x30] sm:$0xff]
  %v2521 = vld [vmem:[#allocation4 + $0x38] sm:$0xff]
  %v2522 = vpack.c.bf16 %v2508, %v2507
  %v2523 = vld [vmem:[#allocation5] sm:$0xff]
  %v2524 = vld [vmem:[#allocation5 + $0x8] sm:$0xff]
  %v2525 = vld [vmem:[#allocation5 + $0x10] sm:$0xff]
  %v2526 = vld [vmem:[#allocation5 + $0x18] sm:$0xff]
  %v2527 = vld [vmem:[#allocation5 + $0x20] sm:$0xff]
  %v2528 = vld [vmem:[#allocation5 + $0x28] sm:$0xff]
  %v2529 = vld [vmem:[#allocation5 + $0x30] sm:$0xff]
  %v2530 = vld [vmem:[#allocation5 + $0x38] sm:$0xff]
  %2531 = vmatprep.subr.bf16.mxu0 0
  %2532 = vmatpush1.bf16.msra.mxu0 %v2523
  %2533 = vmatprep.subr.bf16.mxu0 0
  %2534 = vmatpush1.bf16.msra.mxu0 %v2524
  %2535 = vmatprep.subr.bf16.mxu0 0
  %2536 = vmatpush1.bf16.msra.mxu0 %v2525
  %2537 = vmatprep.subr.bf16.mxu0 0
  %2538 = vmatpush1.bf16.msra.mxu0 %v2526
  %2539 = vmatprep.subr.bf16.mxu0 0
  %2540 = vmatpush1.bf16.msra.mxu0 %v2527
  %2541 = vmatprep.subr.bf16.mxu0 0
  %2542 = vmatpush1.bf16.msra.mxu0 %v2528
  %2543 = vmatprep.subr.bf16.mxu0 0
  %2544 = vmatpush1.bf16.msra.mxu0 %v2529
  %2545 = vmatprep.subr.bf16.mxu0 0
  %2546 = vmatpush1.bf16.msra.mxu0 %v2530
  %2547 = vmatprep.subr.bf16.mxu0 0
  %2548 = vmatpush1.bf16.msra.mxu0 0
  %2549 = vmatprep.subr.bf16.mxu0 0
  %2550 = vmatpush1.bf16.msra.mxu0 0
  %2551 = vmatprep.subr.bf16.mxu0 0
  %2552 = vmatpush1.bf16.msra.mxu0 0
  %2553 = vmatprep.subr.bf16.mxu0 0
  %2554 = vmatpush1.bf16.msra.mxu0 0
  %2555 = vmatprep.subr.bf16.mxu0 0
  %2556 = vmatpush1.bf16.msra.mxu0 0
  %2557 = vmatprep.subr.bf16.mxu0 0
  %2558 = vmatpush1.bf16.msra.mxu0 0
  %2559 = vmatprep.subr.bf16.mxu0 0
  %2560 = vmatpush1.bf16.msra.mxu0 0
  %2561 = vmatprep.subr.bf16.mxu0 0
  %2562 = vmatpush1.bf16.msra.mxu0 0
  %2563 = vmatprep.mubr.bf16.mxu0 0
  %2564 = vmatmul.mubr.bf16.gmra.mrb[0].mxu0 %v2522
  %v2565 = vpop.f32.mrb[0].mxu0
  %v2566 = vadd.f32 0.0, %v2565
  %v2567 = vpop.f32.mrb[0].mxu0
  %v2568 = vpop.f32.mrb[0].mxu0
  %v2569 = vadd.f32 0.0, %v2568
  %v2570 = vpop.f32.mrb[0].mxu0
  %2571 = vdwg.mxu0
  %2572 = vmatprep.subr.bf16.mxu0 0
  %2573 = vmatpush1.bf16.msra.mxu0 %v2514
  %2574 = vmatprep.subr.bf16.mxu0 0
  %2575 = vmatpush1.bf16.msra.mxu0 %v2515
  %2576 = vmatprep.subr.bf16.mxu0 0
  %2577 = vmatpush1.bf16.msra.mxu0 %v2516
  %2578 = vmatprep.subr.bf16.mxu0 0
  %2579 = vmatpush1.bf16.msra.mxu0 %v2517
  %2580 = vmatprep.subr.bf16.mxu0 0
  %2581 = vmatpush1.bf16.msra.mxu0 %v2518
  %2582 = vmatprep.subr.bf16.mxu0 0
  %2583 = vmatpush1.bf16.msra.mxu0 %v2519
  %2584 = vmatprep.subr.bf16.mxu0 0
  %2585 = vmatpush1.bf16.msra.mxu0 %v2520
  %2586 = vmatprep.subr.bf16.mxu0 0
  %2587 = vmatpush1.bf16.msra.mxu0 %v2521
  %2588 = vmatprep.subr.bf16.mxu0 0
  %2589 = vmatpush1.bf16.msra.mxu0 0
  %2590 = vmatprep.subr.bf16.mxu0 0
  %2591 = vmatpush1.bf16.msra.mxu0 0
  %2592 = vmatprep.subr.bf16.mxu0 0
  %2593 = vmatpush1.bf16.msra.mxu0 0
  %2594 = vmatprep.subr.bf16.mxu0 0
  %2595 = vmatpush1.bf16.msra.mxu0 0
  %2596 = vmatprep.subr.bf16.mxu0 0
  %2597 = vmatpush1.bf16.msra.mxu0 0
  %2598 = vmatprep.subr.bf16.mxu0 0
  %2599 = vmatpush1.bf16.msra.mxu0 0
  %2600 = vmatprep.subr.bf16.mxu0 0
  %2601 = vmatpush1.bf16.msra.mxu0 0
  %2602 = vmatprep.subr.bf16.mxu0 0
  %2603 = vmatpush1.bf16.msra.mxu0 0
  %2604 = vmatprep.mubr.bf16.mxu0 0
  %2605 = vmatmul.mubr.bf16.gmra.mrb[0].mxu0 %v2513
  %v2606 = vpop.f32.mrb[0].mxu0
  %v2607 = vadd.f32 %v2566, %v2606
  %v2608 = vpop.f32.mrb[0].mxu0
  %v2609 = vpop.f32.mrb[0].mxu0
  %v2610 = vadd.f32 %v2569, %v2609
  %v2611 = vpop.f32.mrb[0].mxu0
  %2612 = vdwg.mxu0
  %v2613 = vld [vmem:[%s14] sm:$0x1]
  %v2615 = vlaneseq
  %v2616 = vshrl.u32 %v2615, 7
  %v2617 = vsub.s32 0, %v2616
  %v2618 = vrot.slane %v2613, %v2617
  %v2620 = vadd.f32 %v2607, %v2618
  %v2621 = vadd.f32 %v2610, %v2618
  %v2622 = vmax.f32 %v2620, 0.0
  %v2623 = vmax.f32 %v2621, 0.0
  %v2624 = vld [vmem:[%s15] sm:$0x1]
  %v2626 = vlaneseq
  %v2627 = vshrl.u32 %v2626, 7
  %v2628 = vsub.s32 0, %v2627
  %v2629 = vrot.slane %v2624, %v2628
  %v2631 = vmul.f32 %v2622, %v2629
  %v2632 = vmul.f32 %v2623, %v2629
  %2633 = vadd.xlane.f32.xlu0 %v2631
  %v2634 = vpop.xlane.xlu0 %2633
  %2635 = vadd.xlane.f32.xlu0 %v2632
  %v2636 = vpop.xlane.xlu0 %2635
  %v2637 = vld [vmem:[#allocation7] sm:$0x1]
  %v2639 = vlaneseq
  %v2640 = vshrl.u32 %v2639, 7
  %v2641 = vsub.s32 0, %v2640
  %v2642 = vrot.slane %v2637, %v2641
  %v2644 = vadd.f32 %v2634, %v2642
  %v2645 = vadd.f32 %v2636, %v2642
  %vm2646 = vcmask 7168
  %2647 = vst.msk [vmem:[%s17] sm:$0xff] %vm2646, %v2644
  %2648 = vst.msk [vmem:[%s17 + $0x8] sm:$0xff] %vm2646, %v2645
  %2649 = vst [vmem:[%s18] sm:$0xff] %v2432
  %2650 = vst [vmem:[%s18 + $0x8] sm:$0xff] %v2433
  // Predicated region
  $region160: #{critic_lstm_td3_forward.1} parent=0 // pred_check
    _
  $region161: #{critic_lstm_td3_forward.1} parent=0 // pred_check_branch
    %2652 = sbr.rel (0) target = $region163
  $region162: #{critic_lstm_td3_forward.1} parent=0 // pred_region
    _
  $region163: #{critic_lstm_td3_forward.1} parent=0 // pred_fallthru
    _
  // Predicated region
  $region164: #{critic_lstm_td3_forward.1} parent=0 // pred_check
    _
  $region165: #{critic_lstm_td3_forward.1} parent=0 // pred_check_branch
    %2654 = sbr.rel (0) target = $region167
  $region166: #{critic_lstm_td3_forward.1} parent=0 // pred_region
    _
  $region167: #{critic_lstm_td3_forward.1} parent=0 // pred_fallthru
    _
  // Predicated region
  $region168: #{critic_lstm_td3_forward.1} parent=0 // pred_check
    _
  $region169: #{critic_lstm_td3_forward.1} parent=0 // pred_check_branch
    %2656 = sbr.rel (0) target = $region171
  $region170: #{critic_lstm_td3_forward.1} parent=0 // pred_region
    _
  $region171: #{critic_lstm_td3_forward.1} parent=0 // pred_fallthru
    _
  // Predicated region
  $region172: #{critic_lstm_td3_forward.1} parent=0 // pred_check
    _
  $region173: #{critic_lstm_td3_forward.1} parent=0 // pred_check_branch
    %2658 = sbr.rel (0) target = $region175
  $region174: #{critic_lstm_td3_forward.1} parent=0 // pred_region
    _
  $region175: #{critic_lstm_td3_forward.1} parent=0 // pred_fallthru
    _
  %2659 = vsyncmov [#allocation6]
  %s2660 = vpop.sfrf %2659
  %p2661 = scmp.eq.s32.totalorder %s2660, 0
  %p2662 = pneg %p2661
  %2664 = shalt.err (%p2662)
  %s2665 = scalar_lea.sflag [#allocation6], 1
  %2666 = vsyncmov %s2665
  %s2667 = vpop.sfrf %2666
  %p2668 = scmp.eq.s32.totalorder %s2667, 0
  %p2669 = pneg %p2668
  %2671 = shalt.err (%p2669)
  %s2672 = scalar_lea.sflag [#allocation6], 2
  %2673 = vsyncmov %s2672
  %s2674 = vpop.sfrf %2673
  %p2675 = scmp.eq.s32.totalorder %s2674, 0
  %p2676 = pneg %p2675
  %2678 = shalt.err (%p2676)

</llo_original>
